<compile_context>
chip_gen: v6e
topology: v6e:2x2x1
jax: 0.10.0
libtpu: 0.0.40
codegen_flags: <defaults>
</compile_context>

<pallas_src>
import functools

import jax
import jax.numpy as jnp
from jax.experimental import pallas as pl
from jax.experimental.pallas import tpu as pltpu


def _round_up(x, m):
    return (x + m - 1) // m * m


# Above the 32 MiB scoped default (v5e/v6e have 128 MiB physical VMEM) but
# comfortably inside v7x's 64 MiB per-TensorCore VMEM.
_VMEM_LIMIT_BYTES = 48 * 1024 * 1024


# ----------------------------------------------------------------------------
# Pallas kernel 1: fused ConvBlock  (conv3x3 + bias + relu + conv3x3 + BN + relu)
#
# Layout: the padded image (Hp=H+2, Wp=W+2) is flattened row-major into a
# (P, C) matrix with zero rows/cols at the border, extended by `ext` zero rows
# on each side.  A 3x3 conv is then ONE matmul of a concatenated-K slab built
# from nine row-shifted views of this matrix (shift offsets are static Python
# ints) against a (9*Cin, Cout) weight.  Padding/border output rows are
# re-zeroed with a precomputed interior mask after conv1 so the intermediate
# is again a valid flat-padded image for conv2; conv2's border rows are simply
# sliced off by the wrapper.
# ----------------------------------------------------------------------------
def _convblock_kernel(*refs, offsets, ext, n_in):
    xe_refs = refs[:n_in]
    w1_ref, s1_ref, w2_ref, s2_ref, mask_ref, o_ref, mid_ref = refs[n_in:]
    p_pad, c1 = o_ref.shape
    rows_ext = mid_ref.shape[0]
    mask = mask_ref[...]                                   # (p_pad, 1) f32

    # ---- conv1: single MXU dot over a concatenated-K slab (in-VMEM im2col) --
    xs_vals = [xr[...] for xr in xe_refs]                  # bf16, no f32 promote
    pieces = []
    for off in offsets:                                    # tap-major K order
        for xv in xs_vals:                                 # skip first, then up
            pieces.append(xv[off:off + p_pad, :])
    slab1 = jnp.concatenate(pieces, axis=1)                # (p_pad, 9*Cin_total)
    h = jnp.dot(slab1, w1_ref[...], preferred_element_type=jnp.float32)
    h = jnp.maximum(h + s1_ref[...], 0.0) * mask           # dropout = identity

    # ---- stage bf16 intermediate in VMEM (flat-padded layout for conv2) ----
    # Zero only the halo rows (tiny) every step; "once via pl.when(id==0)"
    # would be unsafe with a "parallel" (core-sharded) batch grid.
    zeros_halo = jnp.zeros((ext, c1), mid_ref.dtype)
    mid_ref[0:ext, :] = zeros_halo
    mid_ref[rows_ext - ext:rows_ext, :] = zeros_halo
    mid_ref[ext:ext + p_pad, :] = h.astype(jnp.bfloat16)

    # ---- conv2 (+ folded eval-mode BatchNorm) + relu, again one dot --------
    m = mid_ref[...]
    slab2 = jnp.concatenate([m[off:off + p_pad, :] for off in offsets], axis=1)
    acc2 = jnp.dot(slab2, w2_ref[...], preferred_element_type=jnp.float32)
    o_ref[...] = jnp.maximum(acc2 + s2_ref[...], 0.0).astype(o_ref.dtype)


def conv_block_pallas(inputs, p):
    """Fused ConvBlock.  inputs: list of (N, H, W, Ci) bf16 -> (N, H, W, C1) bf16.

    Multiple inputs implement the concat-free up path (channels are contracted
    in the order given, matching torch.cat([skips, x], 1))."""
    n, h, w = inputs[0].shape[:3]
    cins = tuple(int(a.shape[-1]) for a in inputs)
    c1 = int(p["s1"].shape[-1])
    hp, wp = h + 2, w + 2
    pflat = hp * wp
    p_pad = _round_up(pflat, 16)                  # bf16 sublane-friendly
    ext = _round_up(wp + 1, 16)                   # zero-row halo (>= max shift)
    rows_ext = p_pad + 2 * ext

    # flat-padded, zero-extended inputs (plain-JAX glue, cheap at these sizes)
    # TODO(synk): keep activations in this flat-padded layout between blocks to
    # skip the per-layer pad/slice/reshape HBM shuffles.
    xes = []
    for a in inputs:
        ap = jnp.pad(a.astype(jnp.bfloat16), ((0, 0), (1, 1), (1, 1), (0, 0)))
        af = ap.reshape(n, pflat, a.shape[-1])
        xes.append(jnp.pad(af, ((0, 0), (ext, ext + p_pad - pflat), (0, 0))))

    # interior mask: 1 at real output pixels, 0 at border / rounding-pad rows
    ys = jnp.arange(hp)[:, None]
    xs = jnp.arange(wp)[None, :]
    interior = (ys >= 1) & (ys <= h) & (xs >= 1) & (xs <= w)
    mask = jnp.pad(interior.reshape(pflat).astype(jnp.float32),
                   (0, p_pad - pflat)).reshape(p_pad, 1)

    offsets = tuple(ext + (ky - 1) * wp + (kx - 1)
                    for ky in range(3) for kx in range(3))
    kernel = functools.partial(_convblock_kernel, offsets=offsets, ext=ext,
                               n_in=len(inputs))

    in_specs = [pl.BlockSpec((None, rows_ext, c), lambda i: (i, 0, 0))
                for c in cins]
    in_specs += [
        pl.BlockSpec(tuple(p["w1"].shape), lambda i: (0, 0)),
        pl.BlockSpec((1, c1), lambda i: (0, 0)),
        pl.BlockSpec(tuple(p["w2"].shape), lambda i: (0, 0)),
        pl.BlockSpec((1, c1), lambda i: (0, 0)),
        pl.BlockSpec((p_pad, 1), lambda i: (0, 0)),
    ]

    # TODO(synk): for large images, tile the flat row dimension with a manual
    # halo DMA (pl.ANY + make_async_copy) so one block fits v7x's 64 MiB VMEM.
    # TODO(synk): lane-density restructure (fold a W tile into the lane dim)
    # for C1 < 128 outputs; skipped here since it would inflate HBM activation
    # traffic at these small channel widths.
    out_flat = pl.pallas_call(
        kernel,
        out_shape=jax.ShapeDtypeStruct((n, p_pad, c1), jnp.bfloat16),
        grid=(n,),
        in_specs=in_specs,
        out_specs=pl.BlockSpec((None, p_pad, c1), lambda i: (i, 0, 0)),
        scratch_shapes=[pltpu.VMEM((rows_ext, c1), jnp.bfloat16)],
        compiler_params=pltpu.CompilerParams(
            dimension_semantics=("parallel",),
            vmem_limit_bytes=_VMEM_LIMIT_BYTES),
    )(*xes, p["w1"], p["s1"], p["w2"], p["s2"], mask)

    out = out_flat[:, :pflat, :].reshape(n, hp, wp, c1)[:, 1:h + 1, 1:w + 1, :]
    return out


# ----------------------------------------------------------------------------
# Pallas kernel 2: M-tiled fused matmul  act(X @ W + shift)
# (ConvTranspose2d(k=2,s=2) and the 1x1 seg conv + channel softmax)
# ----------------------------------------------------------------------------
def _matmul_kernel(x_ref, w_ref, s_ref, o_ref, *, act):
    acc = jnp.dot(x_ref[...], w_ref[...], preferred_element_type=jnp.float32)
    acc = acc + s_ref[...]
    if act == "relu":
        acc = jnp.maximum(acc, 0.0)
    elif act == "softmax":                     # softmax over output channels
        mx = jnp.max(acc, axis=-1, keepdims=True)
        e = jnp.exp(acc - mx)
        acc = e / jnp.sum(e, axis=-1, keepdims=True)   # exact: network output
    o_ref[...] = acc.astype(o_ref.dtype)


def fused_matmul(x2d, w, shift, act, out_dtype=jnp.bfloat16, tm=512):
    m, k = x2d.shape
    k2, nc = w.shape
    assert k == k2
    # Cap the M tile so the grid has >= 2 steps: both v7x TensorCores get work
    # under dimension_semantics=("parallel",); no cost on v5e/v6e.
    tm_eff = min(tm, max(8, _round_up((m + 1) // 2, 8)))
    m_pad = _round_up(m, tm_eff)
    xpad = jnp.pad(x2d.astype(jnp.bfloat16), ((0, m_pad - m), (0, 0)))
    kernel = functools.partial(_matmul_kernel, act=act)
    out = pl.pallas_call(
        kernel,
        out_shape=jax.ShapeDtypeStruct((m_pad, nc), out_dtype),
        grid=(m_pad // tm_eff,),
        in_specs=[
            pl.BlockSpec((tm_eff, k), lambda i: (i, 0)),
            pl.BlockSpec((k, nc), lambda i: (0, 0)),
            pl.BlockSpec((1, nc), lambda i: (0, 0)),
        ],
        out_specs=pl.BlockSpec((tm_eff, nc), lambda i: (i, 0)),
        compiler_params=pltpu.CompilerParams(
            dimension_semantics=("parallel",),
            vmem_limit_bytes=_VMEM_LIMIT_BYTES),
    )(xpad, w.astype(jnp.bfloat16), shift.reshape(1, nc).astype(jnp.float32))
    return out[:m]


# ----------------------------------------------------------------------------
# Pure-JAX references (independent math path, mirrors the bf16 casts)
# ----------------------------------------------------------------------------
def conv_block_ref(inputs, p):
    x = (inputs[0].astype(jnp.bfloat16) if len(inputs) == 1 else
         jnp.concatenate([a.astype(jnp.bfloat16) for a in inputs], axis=-1))
    c1 = int(p["s1"].shape[-1])

    def conv(a, wflat, s):
        wk = wflat.reshape(3, 3, -1, c1)            # HWIO (tap-major K layout)
        y = jax.lax.conv_general_dilated(
            a.astype(jnp.bfloat16), wk.astype(jnp.bfloat16), (1, 1), "SAME",
            dimension_numbers=("NHWC", "HWIO", "NHWC"),
            preferred_element_type=jnp.float32)
        return y + s.reshape(1, 1, 1, c1).astype(jnp.float32)

    h = jnp.maximum(conv(x, p["w1"], p["s1"]), 0.0).astype(jnp.bfloat16)
    y = jnp.maximum(conv(h, p["w2"], p["s2"]), 0.0).astype(jnp.bfloat16)
    return y


def ref_matmul(x2d, w, shift, act, out_dtype=jnp.bfloat16):
    acc = jnp.dot(x2d.astype(jnp.bfloat16), w.astype(jnp.bfloat16),
                  preferred_element_type=jnp.float32)
    acc = acc + shift.reshape(1, -1).astype(jnp.float32)
    if act == "relu":
        acc = jnp.maximum(acc, 0.0)
    elif act == "softmax":
        acc = jax.nn.softmax(acc, axis=-1)
    return acc.astype(out_dtype)


# ----------------------------------------------------------------------------
# Network glue (NHWC activations between kernels)
# ----------------------------------------------------------------------------
def maxpool2x2(x):
    # TODO(synk): fold this 2x2 max into the ConvBlock epilogue store path for
    # the down blocks (saves one full-activation HBM round trip per level).
    n, h, w, c = x.shape
    return jnp.max(x.reshape(n, h // 2, 2, w // 2, 2, c), axis=(2, 4))


def upconv2x2(x, wt_flat, bt, cout, matmul_fn):
    """ConvTranspose2d(k=2, stride=2): one input pixel -> 2x2 output block."""
    n, h, w, cin = x.shape
    out4 = matmul_fn(x.reshape(n * h * w, cin), wt_flat, jnp.tile(bt, 4), "none")
    # TODO(synk): fold the 2x2 pixel shuffle into the matmul kernel's store
    # path (out_spec index_map over (n,2h,2w,cout) blocks) to save this extra
    # HBM round trip.
    out = out4.reshape(n, h, w, 2, 2, cout)
    out = out.transpose(0, 1, 3, 2, 4, 5).reshape(n, 2 * h, 2 * w, cout)
    return out


def unet_forward(x_nhwc, params, outchannels, *, use_pallas=True):
    convblock = conv_block_pallas if use_pallas else conv_block_ref
    matmul = fused_matmul if use_pallas else ref_matmul

    x = x_nhwc.astype(jnp.bfloat16)
    skips = []
    for p in params["down"]:
        x = convblock([x], p)
        skips.append(x)
        x = maxpool2x2(x)
    x = convblock([x], params["middle"])
    for p in params["up"]:
        up = upconv2x2(x, p["wt"], p["bt"], p["cout"], matmul)
        # concat-free up path: skip (first) and upsampled tensors feed the
        # fused ConvBlock as two inputs == torch.cat([skips, x], 1).
        x = convblock([skips.pop(), up], p["conv"])
    # seg_layer (1x1 conv, output channels padded to 128 lanes) + softmax
    n, h, w, c = x.shape
    probs = matmul(x.reshape(n * h * w, c), params["seg_w"], params["seg_b"],
                   "softmax", out_dtype=jnp.float32)
    return probs.reshape(n, h, w, -1)[..., :outchannels]


def unet_apply(x_nchw, params, outchannels, *, use_pallas=True):
    x_nhwc = jnp.transpose(x_nchw, (0, 2, 3, 1))
    y = unet_forward(x_nhwc, params, outchannels, use_pallas=use_pallas)
    return jnp.transpose(y, (0, 3, 1, 2))          # back to NCHW like PyTorch


# ----------------------------------------------------------------------------
# Deterministic parameter init (mirrors the PyTorch module; bias/BN folded)
# ----------------------------------------------------------------------------
class KeyGen:
    def __init__(self, key):
        self.key = key

    def __call__(self):
        self.key, sub = jax.random.split(self.key)
        return sub


def make_convblock(kg, cin, cout):
    w1 = jax.random.normal(kg(), (cout, cin, 3, 3), jnp.float32) / jnp.sqrt(9.0 * cin)
    b1 = 0.05 * jax.random.normal(kg(), (cout,), jnp.float32)
    w2 = jax.random.normal(kg(), (cout, cout, 3, 3), jnp.float32) / jnp.sqrt(9.0 * cout)
    b2 = 0.05 * jax.random.normal(kg(), (cout,), jnp.float32)
    gamma = 1.0 + 0.1 * jax.random.normal(kg(), (cout,), jnp.float32)
    beta = 0.1 * jax.random.normal(kg(), (cout,), jnp.float32)
    mean = 0.1 * jax.random.normal(kg(), (cout,), jnp.float32)
    var = 1.0 + 0.1 * jnp.abs(jax.random.normal(kg(), (cout,), jnp.float32))
    scale = gamma / jnp.sqrt(var + 1e-5)
    shift = beta - mean * scale
    # OIHW -> (ky,kx,Cin,Cout) -> (9*Cin, Cout): K index = tap*Cin + cin
    w1t = jnp.transpose(w1, (2, 3, 1, 0)).reshape(9 * cin, cout)
    w2t = jnp.transpose(w2, (2, 3, 1, 0)).reshape(9 * cout, cout)
    return {
        "w1": w1t.astype(jnp.bfloat16),
        "s1": b1.reshape(1, cout),                           # conv1 bias
        "w2": (w2t * scale[None, :]).astype(jnp.bfloat16),   # BN scale folded
        "s2": (b2 * scale + shift).reshape(1, cout),          # BN shift folded
    }


def make_upblock(kg, cin, cout):
    wt = jax.random.normal(kg(), (cin, cout, 2, 2), jnp.float32) / jnp.sqrt(4.0 * cin)
    bt = 0.05 * jax.random.normal(kg(), (cout,), jnp.float32)
    return {
        # (Cin,Cout,2,2) -> (Cin,dy,dx,Cout) -> (Cin, 4*Cout); lane-dense output
        "wt": jnp.transpose(wt, (0, 2, 3, 1)).reshape(cin, 4 * cout).astype(jnp.bfloat16),
        "bt": bt,
        "cout": cout,
        "conv": make_convblock(kg, cin, cout),
    }


def init_params(kg, inchannels, outchannels, net_depth, channel_layer):
    params = {"down": [], "up": []}
    cin, cout = inchannels, channel_layer
    for _ in range(net_depth):
        params["down"].append(make_convblock(kg, cin, cout))
        cin, cout = cout, 2 * cout
    params["middle"] = make_convblock(kg, cin, cout)
    cin, cout = cout, cout // 2
    for _ in range(net_depth):
        params["up"].append(make_upblock(kg, cin, cout))
        cin, cout = cout, cout // 2
    seg_cin = 2 * cout
    # 1x1 seg conv, output channels padded to 128 lanes (dense stores / sane
    # cross-lane softmax reductions).  Pad logits are driven to -1e9 so the
    # softmax denominator is unaffected; wrapper slices back to `outchannels`.
    nc_pad = 128
    seg_w = jax.random.normal(kg(), (outchannels, seg_cin), jnp.float32) / jnp.sqrt(float(seg_cin))
    seg_b = 0.05 * jax.random.normal(kg(), (outchannels,), jnp.float32)
    w_pad = jnp.zeros((seg_cin, nc_pad), jnp.float32).at[:, :outchannels].set(seg_w.T)
    b_pad = jnp.full((nc_pad,), -1e9, jnp.float32).at[:outchannels].set(seg_b)
    params["seg_w"] = w_pad.astype(jnp.bfloat16)
    params["seg_b"] = b_pad
    return params


# ----------------------------------------------------------------------------
if __name__ == "__main__":
    # Unet(inchannels=4, outchannels=3, net_depth=2, dropout=0.2,
    #      spatial=False, channel_layer=8)   -- eval-mode forward pass
    inC, outC, depth, clayer = 4, 3, 2, 8
    N, H, W = 2, 16, 16

    kg = KeyGen(jax.random.PRNGKey(0))
    params = init_params(kg, inC, outC, depth, clayer)

    x_nchw = jax.random.uniform(kg(), (N, inC, H, W), jnp.float32)   # NCHW input

    out = unet_apply(x_nchw, params, outC, use_pallas=True)
    out = jax.block_until_ready(out)
    assert out.shape == (N, outC, H, W), out.shape

    # sanity: independent pure-JAX (lax.conv) reference with the same bf16/f32
    # rounding points; loose tolerance covers bf16 accumulation-order effects.
    ref = unet_apply(x_nchw, params, outC, use_pallas=False)
    err = float(jnp.max(jnp.abs(out - ref)))
    assert err < 1e-2, f"Pallas/ref mismatch, max abs err {err}"
    assert jnp.allclose(jnp.sum(out, axis=1), 1.0, atol=1e-3), "softmax not normalized"

    print("KERNEL_OK")
</pallas_src>

<mosaic_0001>
module attributes {stable_mosaic.version = 11 : i64} {
  func.func @_convblock_kernel(%arg0: i32, %arg1: memref<1x400x4xbf16, #tpu.memory_space<vmem>>, %arg2: memref<36x8xbf16, #tpu.memory_space<vmem>>, %arg3: memref<1x8xf32, #tpu.memory_space<vmem>>, %arg4: memref<72x8xbf16, #tpu.memory_space<vmem>>, %arg5: memref<1x8xf32, #tpu.memory_space<vmem>>, %arg6: memref<336x1xf32, #tpu.memory_space<vmem>>, %arg7: memref<1x336x8xbf16, #tpu.memory_space<vmem>>, %arg8: memref<400x8xbf16, #tpu.memory_space<vmem>>) attributes {dimension_semantics = [#tpu.dimension_semantics<parallel>], iteration_bounds = array<i64: 2>, scalar_prefetch = 0 : i64, scratch_operands = 1 : i64, tpu.core_type = #tpu.core_type<tc>, window_params = [{transform_indices = @transform_0, window_bounds = array<i64: 1, 400, 4>}, {pipeline_mode = #tpu.pipeline_mode<synchronous>, transform_indices = @transform_1, window_bounds = array<i64: 36, 8>}, {pipeline_mode = #tpu.pipeline_mode<synchronous>, transform_indices = @transform_2, window_bounds = array<i64: 1, 8>}, {pipeline_mode = #tpu.pipeline_mode<synchronous>, transform_indices = @transform_3, window_bounds = array<i64: 72, 8>}, {pipeline_mode = #tpu.pipeline_mode<synchronous>, transform_indices = @transform_4, window_bounds = array<i64: 1, 8>}, {pipeline_mode = #tpu.pipeline_mode<synchronous>, transform_indices = @transform_5, window_bounds = array<i64: 336, 1>}, {transform_indices = @transform_6, window_bounds = array<i64: 1, 336, 8>}]} {
    %c0 = arith.constant 0 : index
    %c0_0 = arith.constant 0 : index
    %0 = vector.load %arg6[%c0, %c0_0] : memref<336x1xf32, #tpu.memory_space<vmem>>, vector<336x1xf32>
    %c0_1 = arith.constant 0 : index
    %c0_2 = arith.constant 0 : index
    %c0_3 = arith.constant 0 : index
    %1 = vector.load %arg1[%c0_1, %c0_2, %c0_3] : memref<1x400x4xbf16, #tpu.memory_space<vmem>>, vector<1x400x4xbf16>
    %2 = vector.shape_cast %1 : vector<1x400x4xbf16> to vector<400x4xbf16>
    %3 = vector.extract_strided_slice %2 {offsets = [13, 0], sizes = [336, 4], strides = [1, 1]} : vector<400x4xbf16> to vector<336x4xbf16>
    %4 = vector.extract_strided_slice %2 {offsets = [14, 0], sizes = [336, 4], strides = [1, 1]} : vector<400x4xbf16> to vector<336x4xbf16>
    %5 = vector.extract_strided_slice %2 {offsets = [15, 0], sizes = [336, 4], strides = [1, 1]} : vector<400x4xbf16> to vector<336x4xbf16>
    %6 = vector.extract_strided_slice %2 {offsets = [31, 0], sizes = [336, 4], strides = [1, 1]} : vector<400x4xbf16> to vector<336x4xbf16>
    %7 = vector.extract_strided_slice %2 {offsets = [32, 0], sizes = [336, 4], strides = [1, 1]} : vector<400x4xbf16> to vector<336x4xbf16>
    %8 = vector.extract_strided_slice %2 {offsets = [33, 0], sizes = [336, 4], strides = [1, 1]} : vector<400x4xbf16> to vector<336x4xbf16>
    %9 = vector.extract_strided_slice %2 {offsets = [49, 0], sizes = [336, 4], strides = [1, 1]} : vector<400x4xbf16> to vector<336x4xbf16>
    %10 = vector.extract_strided_slice %2 {offsets = [50, 0], sizes = [336, 4], strides = [1, 1]} : vector<400x4xbf16> to vector<336x4xbf16>
    %11 = vector.extract_strided_slice %2 {offsets = [51, 0], sizes = [336, 4], strides = [1, 1]} : vector<400x4xbf16> to vector<336x4xbf16>
    %12 = tpu.concatenate %3, %4, %5, %6, %7, %8, %9, %10, %11 in 1 : vector<336x4xbf16>, vector<336x4xbf16>, vector<336x4xbf16>, vector<336x4xbf16>, vector<336x4xbf16>, vector<336x4xbf16>, vector<336x4xbf16>, vector<336x4xbf16>, vector<336x4xbf16> -> vector<336x36xbf16>
    %c0_4 = arith.constant 0 : index
    %c0_5 = arith.constant 0 : index
    %13 = vector.load %arg2[%c0_4, %c0_5] : memref<36x8xbf16, #tpu.memory_space<vmem>>, vector<36x8xbf16>
    %cst = arith.constant dense<0.000000e+00> : vector<336x8xf32>
    %14 = tpu.matmul %12, %13, %cst {dimension_numbers = #tpu.dot_dimension_numbers<[1], [0], [0], [1], [0, 0, 1, 1], [], []>} : vector<336x36xbf16>, vector<36x8xbf16>, vector<336x8xf32> -> vector<336x8xf32>
    %c0_6 = arith.constant 0 : index
    %c0_7 = arith.constant 0 : index
    %15 = vector.load %arg3[%c0_6, %c0_7] : memref<1x8xf32, #tpu.memory_space<vmem>>, vector<1x8xf32>
    %16 = vector.broadcast %15 : vector<1x8xf32> to vector<336x8xf32>
    %17 = arith.addf %14, %16 : vector<336x8xf32>
    %cst_8 = arith.constant 0.000000e+00 : f32
    %18 = vector.broadcast %cst_8 : f32 to vector<336x8xf32>
    %19 = arith.maximumf %17, %18 : vector<336x8xf32>
    %20 = vector.broadcast %0 : vector<336x1xf32> to vector<336x8xf32>
    %21 = arith.mulf %19, %20 : vector<336x8xf32>
    %cst_9 = arith.constant 0.000000e+00 : bf16
    %22 = vector.broadcast %cst_9 : bf16 to vector<32x8xbf16>
    %c0_10 = arith.constant 0 : index
    %c0_11 = arith.constant 0 : index
    %23 = vector.load %arg8[%c0_10, %c0_11] : memref<400x8xbf16, #tpu.memory_space<vmem>>, vector<32x8xbf16>
    tpu.vector_store %arg8[%c0_10, %c0_11], %22 {strides = array<i32>} : memref<400x8xbf16, #tpu.memory_space<vmem>>, vector<32x8xbf16>,
    %c368 = arith.constant 368 : index
    %c0_12 = arith.constant 0 : index
    %24 = vector.load %arg8[%c368, %c0_12] : memref<400x8xbf16, #tpu.memory_space<vmem>>, vector<32x8xbf16>
    tpu.vector_store %arg8[%c368, %c0_12], %22 {strides = array<i32>} : memref<400x8xbf16, #tpu.memory_space<vmem>>, vector<32x8xbf16>,
    %25 = arith.truncf %21 : vector<336x8xf32> to vector<336x8xbf16>
    %c32 = arith.constant 32 : index
    %c0_13 = arith.constant 0 : index
    %26 = vector.load %arg8[%c32, %c0_13] : memref<400x8xbf16, #tpu.memory_space<vmem>>, vector<336x8xbf16>
    tpu.vector_store %arg8[%c32, %c0_13], %25 {strides = array<i32>} : memref<400x8xbf16, #tpu.memory_space<vmem>>, vector<336x8xbf16>,
    %c0_14 = arith.constant 0 : index
    %c0_15 = arith.constant 0 : index
    %27 = vector.load %arg8[%c0_14, %c0_15] : memref<400x8xbf16, #tpu.memory_space<vmem>>, vector<400x8xbf16>
    %28 = vector.extract_strided_slice %27 {offsets = [13, 0], sizes = [336, 8], strides = [1, 1]} : vector<400x8xbf16> to vector<336x8xbf16>
    %29 = vector.extract_strided_slice %27 {offsets = [14, 0], sizes = [336, 8], strides = [1, 1]} : vector<400x8xbf16> to vector<336x8xbf16>
    %30 = vector.extract_strided_slice %27 {offsets = [15, 0], sizes = [336, 8], strides = [1, 1]} : vector<400x8xbf16> to vector<336x8xbf16>
    %31 = vector.extract_strided_slice %27 {offsets = [31, 0], sizes = [336, 8], strides = [1, 1]} : vector<400x8xbf16> to vector<336x8xbf16>
    %32 = vector.extract_strided_slice %27 {offsets = [32, 0], sizes = [336, 8], strides = [1, 1]} : vector<400x8xbf16> to vector<336x8xbf16>
    %33 = vector.extract_strided_slice %27 {offsets = [33, 0], sizes = [336, 8], strides = [1, 1]} : vector<400x8xbf16> to vector<336x8xbf16>
    %34 = vector.extract_strided_slice %27 {offsets = [49, 0], sizes = [336, 8], strides = [1, 1]} : vector<400x8xbf16> to vector<336x8xbf16>
    %35 = vector.extract_strided_slice %27 {offsets = [50, 0], sizes = [336, 8], strides = [1, 1]} : vector<400x8xbf16> to vector<336x8xbf16>
    %36 = vector.extract_strided_slice %27 {offsets = [51, 0], sizes = [336, 8], strides = [1, 1]} : vector<400x8xbf16> to vector<336x8xbf16>
    %37 = tpu.concatenate %28, %29, %30, %31, %32, %33, %34, %35, %36 in 1 : vector<336x8xbf16>, vector<336x8xbf16>, vector<336x8xbf16>, vector<336x8xbf16>, vector<336x8xbf16>, vector<336x8xbf16>, vector<336x8xbf16>, vector<336x8xbf16>, vector<336x8xbf16> -> vector<336x72xbf16>
    %c0_16 = arith.constant 0 : index
    %c0_17 = arith.constant 0 : index
    %38 = vector.load %arg4[%c0_16, %c0_17] : memref<72x8xbf16, #tpu.memory_space<vmem>>, vector<72x8xbf16>
    %cst_18 = arith.constant dense<0.000000e+00> : vector<336x8xf32>
    %39 = tpu.matmul %37, %38, %cst_18 {dimension_numbers = #tpu.dot_dimension_numbers<[1], [0], [0], [1], [0, 0, 1, 1], [], []>} : vector<336x72xbf16>, vector<72x8xbf16>, vector<336x8xf32> -> vector<336x8xf32>
    %c0_19 = arith.constant 0 : index
    %c0_20 = arith.constant 0 : index
    %40 = vector.load %arg5[%c0_19, %c0_20] : memref<1x8xf32, #tpu.memory_space<vmem>>, vector<1x8xf32>
    %41 = vector.broadcast %40 : vector<1x8xf32> to vector<336x8xf32>
    %42 = arith.addf %39, %41 : vector<336x8xf32>
    %cst_21 = arith.constant 0.000000e+00 : f32
    %43 = vector.broadcast %cst_21 : f32 to vector<336x8xf32>
    %44 = arith.maximumf %42, %43 : vector<336x8xf32>
    %45 = arith.truncf %44 : vector<336x8xf32> to vector<336x8xbf16>
    %c0_22 = arith.constant 0 : index
    %c0_23 = arith.constant 0 : index
    %c0_24 = arith.constant 0 : index
    %46 = vector.load %arg7[%c0_22, %c0_23, %c0_24] : memref<1x336x8xbf16, #tpu.memory_space<vmem>>, vector<1x336x8xbf16>
    %47 = vector.shape_cast %46 : vector<1x336x8xbf16> to vector<336x8xbf16>
    %48 = vector.shape_cast %45 : vector<336x8xbf16> to vector<1x336x8xbf16>
    tpu.vector_store %arg7[%c0_22, %c0_23, %c0_24], %48 {strides = array<i32>} : memref<1x336x8xbf16, #tpu.memory_space<vmem>>, vector<1x336x8xbf16>,
    return
  }
  func.func @transform_0(%arg0: i32) -> (i32, i32, i32) {
    %c0_i32 = arith.constant 0 : i32
    %c0_i32_0 = arith.constant 0 : i32
    %c0_i32_1 = arith.constant 0 : i32
    return %arg0, %c0_i32, %c0_i32_0 : i32, i32, i32
  }
  func.func @transform_1(%arg0: i32) -> (i32, i32) {
    %c0_i32 = arith.constant 0 : i32
    %c0_i32_0 = arith.constant 0 : i32
    %c0_i32_1 = arith.constant 0 : i32
    return %c0_i32, %c0_i32_0 : i32, i32
  }
  func.func @transform_2(%arg0: i32) -> (i32, i32) {
    %c0_i32 = arith.constant 0 : i32
    %c0_i32_0 = arith.constant 0 : i32
    %c0_i32_1 = arith.constant 0 : i32
    return %c0_i32, %c0_i32_0 : i32, i32
  }
  func.func @transform_3(%arg0: i32) -> (i32, i32) {
    %c0_i32 = arith.constant 0 : i32
    %c0_i32_0 = arith.constant 0 : i32
    %c0_i32_1 = arith.constant 0 : i32
    return %c0_i32, %c0_i32_0 : i32, i32
  }
  func.func @transform_4(%arg0: i32) -> (i32, i32) {
    %c0_i32 = arith.constant 0 : i32
    %c0_i32_0 = arith.constant 0 : i32
    %c0_i32_1 = arith.constant 0 : i32
    return %c0_i32, %c0_i32_0 : i32, i32
  }
  func.func @transform_5(%arg0: i32) -> (i32, i32) {
    %c0_i32 = arith.constant 0 : i32
    %c0_i32_0 = arith.constant 0 : i32
    %c0_i32_1 = arith.constant 0 : i32
    return %c0_i32, %c0_i32_0 : i32, i32
  }
  func.func @transform_6(%arg0: i32) -> (i32, i32, i32) {
    %c0_i32 = arith.constant 0 : i32
    %c0_i32_0 = arith.constant 0 : i32
    %c0_i32_1 = arith.constant 0 : i32
    return %arg0, %c0_i32, %c0_i32_0 : i32, i32, i32
  }
}

</mosaic_0001>

<llo_original>
// kernel: tpu_custom_call.1
$region0: #{tpu_custom_call.1}
  #allocation0 [shape = 'u32[]', space=smem, size = 0x4, offset = 0x4, fixed_abs, tag = 'smem constant byte address 0x4 - core index']
  #allocation1 [shape = 'u32[144,128]{1,0:T(1,128)}', space=vmem, size = 0x12000, scoped, tag = 'internal scratch']
  #allocation2 [shape = 'bf16[400,8]{1,0:T(8,128)(2,1)}', space=vmem, size = 0x19000, scoped, tag = 'scratch operand']
  %s0 = inlined_call_operand.vmem [shape: bf16[2,400,4], index: 0, kind: input, shape index: {}]
  %s1 = inlined_call_operand.vmem [shape: bf16[36,8], index: 1, kind: input, shape index: {}]
  %s2 = inlined_call_operand.vmem [shape: f32[1,8], index: 2, kind: input, shape index: {}]
  %s3 = inlined_call_operand.vmem [shape: bf16[72,8], index: 3, kind: input, shape index: {}]
  %s4 = inlined_call_operand.vmem [shape: f32[1,8], index: 4, kind: input, shape index: {}]
  %s5 = inlined_call_operand.vmem [shape: f32[336,1], index: 5, kind: input, shape index: {}]
  %s6 = inlined_call_operand.vmem [shape: bf16[2,336,8], index: 6, kind: output, shape index: {}]
  %s7 = sld [smem:[#allocation0]]
  $region57: #{tpu_custom_call.1} parent=0
    _
  %s9 = ssub.s32 1, %s7
  %s10 = scalar_select 0, %s9, %s7
  loop: start=0, step=1, limit=4
  $region2: #{tpu_custom_call.1} parent=0 // loop_pre_header
    _
  $region3: #{tpu_custom_call.1} parent=0 // loop_header
    %s12 = sphi 0, %s16
    %p13 = scmp.ge.s32.totalorder %s12, 4
    %s22 = sphi 0, %s24
    %s25 = sphi 0, %s22
    %s26 = sphi 0, %s25
    %s42 = sphi 0, %s26
    %s46 = sphi 0, %s46
    %s48 = sphi 0, %s46
    %s49 = sphi 0, %s48
    %s63 = sphi 0, %s49
    %s67 = sphi 0, %s67
    %s69 = sphi 0, %s67
    %s70 = sphi 0, %s69
    %s84 = sphi 0, %s70
    %s88 = sphi 0, %s88
    %s90 = sphi 0, %s88
    %s91 = sphi 0, %s90
    %s105 = sphi 0, %s91
    %s109 = sphi 0, %s109
    %s111 = sphi 0, %s109
    %s112 = sphi 0, %s111
    %s126 = sphi 0, %s112
    %s130 = sphi 0, %s130
    %s132 = sphi 0, %s130
    %s133 = sphi 0, %s132
    %s147 = sphi 0, %s133
    %s153 = sphi 0, %s155
    %s156 = sphi 0, %s153
    %s157 = sphi 0, %s156
    %s173 = sphi 0, %s157
  $region4: #{tpu_custom_call.1} parent=0 // loop_header_branch
    %15 = sbr.rel (%p13) target = $region8
  $region5: #{tpu_custom_call.1} parent=0 // loop_body
    %s17 = ssub.s32 %s12, 1
    %s18 = ssub.s32 %s12, 2
    %s19 = sadd.s32 %s12, 1
    %s20 = ssub.s32 %s12, %s19
    %p21 = scmp.eq.s32.totalorder %s20, 0
    %s23 = sadd.s32 %s22, 1
    %s24 = scalar_select %p21, %s22, %s23
    %p27 = pneg %p21
    %p28 = scmp.eq.s32.totalorder %s12, 1
    %p29 = por %p27, %p28
    %p30 = scmp.ne.s32.totalorder %s22, %s25
    %p31 = scmp.eq.s32.totalorder %s12, 0
    %p32 = por %p30, %p31
    %p33 = scmp.ne.s32.totalorder %s22, %s25
    %p34 = scmp.eq.s32.totalorder %s17, 1
    %p35 = por %p33, %p34
    %p36 = scmp.ne.s32.totalorder %s25, %s26
    %p37 = scmp.eq.s32.totalorder %s17, 0
    %p38 = por %p36, %p37
    %p39 = scmp.ne.s32.totalorder %s25, %s26
    %p40 = scmp.eq.s32.totalorder %s18, 1
    %p41 = por %p39, %p40
    %p43 = scmp.ne.s32.totalorder %s26, %s42
    %p44 = scmp.eq.s32.totalorder %s18, 0
    %p45 = por %p43, %p44
    %s47 = sadd.s32 %s46, 1
    %p50 = scmp.eq.s32.totalorder %s12, 1
    %p51 = scmp.ne.s32.totalorder %s46, %s48
    %p52 = scmp.eq.s32.totalorder %s12, 0
    %p53 = por %p51, %p52
    %p54 = scmp.ne.s32.totalorder %s46, %s48
    %p55 = scmp.eq.s32.totalorder %s17, 1
    %p56 = por %p54, %p55
    %p57 = scmp.ne.s32.totalorder %s48, %s49
    %p58 = scmp.eq.s32.totalorder %s17, 0
    %p59 = por %p57, %p58
    %p60 = scmp.ne.s32.totalorder %s48, %s49
    %p61 = scmp.eq.s32.totalorder %s18, 1
    %p62 = por %p60, %p61
    %p64 = scmp.ne.s32.totalorder %s49, %s63
    %p65 = scmp.eq.s32.totalorder %s18, 0
    %p66 = por %p64, %p65
    %s68 = sadd.s32 %s67, 1
    %p71 = scmp.eq.s32.totalorder %s12, 1
    %p72 = scmp.ne.s32.totalorder %s67, %s69
    %p73 = scmp.eq.s32.totalorder %s12, 0
    %p74 = por %p72, %p73
    %p75 = scmp.ne.s32.totalorder %s67, %s69
    %p76 = scmp.eq.s32.totalorder %s17, 1
    %p77 = por %p75, %p76
    %p78 = scmp.ne.s32.totalorder %s69, %s70
    %p79 = scmp.eq.s32.totalorder %s17, 0
    %p80 = por %p78, %p79
    %p81 = scmp.ne.s32.totalorder %s69, %s70
    %p82 = scmp.eq.s32.totalorder %s18, 1
    %p83 = por %p81, %p82
    %p85 = scmp.ne.s32.totalorder %s70, %s84
    %p86 = scmp.eq.s32.totalorder %s18, 0
    %p87 = por %p85, %p86
    %s89 = sadd.s32 %s88, 1
    %p92 = scmp.eq.s32.totalorder %s12, 1
    %p93 = scmp.ne.s32.totalorder %s88, %s90
    %p94 = scmp.eq.s32.totalorder %s12, 0
    %p95 = por %p93, %p94
    %p96 = scmp.ne.s32.totalorder %s88, %s90
    %p97 = scmp.eq.s32.totalorder %s17, 1
    %p98 = por %p96, %p97
    %p99 = scmp.ne.s32.totalorder %s90, %s91
    %p100 = scmp.eq.s32.totalorder %s17, 0
    %p101 = por %p99, %p100
    %p102 = scmp.ne.s32.totalorder %s90, %s91
    %p103 = scmp.eq.s32.totalorder %s18, 1
    %p104 = por %p102, %p103
    %p106 = scmp.ne.s32.totalorder %s91, %s105
    %p107 = scmp.eq.s32.totalorder %s18, 0
    %p108 = por %p106, %p107
    %s110 = sadd.s32 %s109, 1
    %p113 = scmp.eq.s32.totalorder %s12, 1
    %p114 = scmp.ne.s32.totalorder %s109, %s111
    %p115 = scmp.eq.s32.totalorder %s12, 0
    %p116 = por %p114, %p115
    %p117 = scmp.ne.s32.totalorder %s109, %s111
    %p118 = scmp.eq.s32.totalorder %s17, 1
    %p119 = por %p117, %p118
    %p120 = scmp.ne.s32.totalorder %s111, %s112
    %p121 = scmp.eq.s32.totalorder %s17, 0
    %p122 = por %p120, %p121
    %p123 = scmp.ne.s32.totalorder %s111, %s112
    %p124 = scmp.eq.s32.totalorder %s18, 1
    %p125 = por %p123, %p124
    %p127 = scmp.ne.s32.totalorder %s112, %s126
    %p128 = scmp.eq.s32.totalorder %s18, 0
    %p129 = por %p127, %p128
    %s131 = sadd.s32 %s130, 1
    %p134 = scmp.eq.s32.totalorder %s12, 1
    %p135 = scmp.ne.s32.totalorder %s130, %s132
    %p136 = scmp.eq.s32.totalorder %s12, 0
    %p137 = por %p135, %p136
    %p138 = scmp.ne.s32.totalorder %s130, %s132
    %p139 = scmp.eq.s32.totalorder %s17, 1
    %p140 = por %p138, %p139
    %p141 = scmp.ne.s32.totalorder %s132, %s133
    %p142 = scmp.eq.s32.totalorder %s17, 0
    %p143 = por %p141, %p142
    %p144 = scmp.ne.s32.totalorder %s132, %s133
    %p145 = scmp.eq.s32.totalorder %s18, 1
    %p146 = por %p144, %p145
    %p148 = scmp.ne.s32.totalorder %s133, %s147
    %p149 = scmp.eq.s32.totalorder %s18, 0
    %p150 = por %p148, %p149
    %s151 = ssub.s32 %s12, %s19
    %p152 = scmp.eq.s32.totalorder %s151, 0
    %s154 = sadd.s32 %s153, 1
    %s155 = scalar_select %p152, %s153, %s154
    %p158 = pneg %p152
    %p159 = scmp.eq.s32.totalorder %s12, 1
    %p160 = por %p158, %p159
    %p161 = scmp.ne.s32.totalorder %s153, %s156
    %p162 = scmp.eq.s32.totalorder %s12, 0
    %p163 = por %p161, %p162
    %p164 = scmp.ne.s32.totalorder %s153, %s156
    %p165 = scmp.eq.s32.totalorder %s17, 1
    %p166 = por %p164, %p165
    %p167 = scmp.ne.s32.totalorder %s156, %s157
    %p168 = scmp.eq.s32.totalorder %s17, 0
    %p169 = por %p167, %p168
    %p170 = scmp.ne.s32.totalorder %s156, %s157
    %p171 = scmp.eq.s32.totalorder %s18, 1
    %p172 = por %p170, %p171
    %p174 = scmp.ne.s32.totalorder %s157, %s173
    %p175 = scmp.eq.s32.totalorder %s18, 0
    %p176 = por %p174, %p175
    %p177 = scmp.le.s32.totalorder 1, %s12
    %p178 = scmp.lt.s32.totalorder %s12, 3
    %p179 = pnand %p177, %p178
    %p180 = pneg %p179
    // Predicated region
    $region9: #{tpu_custom_call.1} parent=5 // pred_check
      _
    $region10: #{tpu_custom_call.1} parent=5 // pred_check_branch
      %182 = sbr.rel (%p179) target = $region12
    $region11: #{tpu_custom_call.1} parent=5 // pred_region
      %s183 = ssub.s32 %s12, 1
      // Predicated region
      $region13: #{tpu_custom_call.1} parent=11 // pred_check
        %p184 = pneg %p59
      $region14: #{tpu_custom_call.1} parent=11 // pred_check_branch
        %186 = sbr.rel (%p184) target = $region16
      $region15: #{tpu_custom_call.1} parent=11 // pred_region
        _
      $region16: #{tpu_custom_call.1} parent=11 // pred_fallthru
        _
      // Predicated region
      $region17: #{tpu_custom_call.1} parent=11 // pred_check
        %p187 = pneg %p80
      $region18: #{tpu_custom_call.1} parent=11 // pred_check_branch
        %189 = sbr.rel (%p187) target = $region20
      $region19: #{tpu_custom_call.1} parent=11 // pred_region
        _
      $region20: #{tpu_custom_call.1} parent=11 // pred_fallthru
        _
      // Predicated region
      $region21: #{tpu_custom_call.1} parent=11 // pred_check
        %p190 = pneg %p101
      $region22: #{tpu_custom_call.1} parent=11 // pred_check_branch
        %192 = sbr.rel (%p190) target = $region24
      $region23: #{tpu_custom_call.1} parent=11 // pred_region
        _
      $region24: #{tpu_custom_call.1} parent=11 // pred_fallthru
        _
      // Predicated region
      $region25: #{tpu_custom_call.1} parent=11 // pred_check
        %p193 = pneg %p122
      $region26: #{tpu_custom_call.1} parent=11 // pred_check_branch
        %195 = sbr.rel (%p193) target = $region28
      $region27: #{tpu_custom_call.1} parent=11 // pred_region
        _
      $region28: #{tpu_custom_call.1} parent=11 // pred_fallthru
        _
      // Predicated region
      $region29: #{tpu_custom_call.1} parent=11 // pred_check
        %p196 = pneg %p143
      $region30: #{tpu_custom_call.1} parent=11 // pred_check_branch
        %198 = sbr.rel (%p196) target = $region32
      $region31: #{tpu_custom_call.1} parent=11 // pred_region
        _
      $region32: #{tpu_custom_call.1} parent=11 // pred_fallthru
        _
    $region12: #{tpu_custom_call.1} parent=5 // pred_fallthru
      _
    %p199 = scmp.lt.s32.totalorder %s12, 2
    // Predicated region
    $region33: #{tpu_custom_call.1} parent=5 // pred_check
      %p200 = pneg %p199
    $region34: #{tpu_custom_call.1} parent=5 // pred_check_branch
      %202 = sbr.rel (%p200) target = $region36
    $region35: #{tpu_custom_call.1} parent=5 // pred_region
      // Predicated region
      $region37: #{tpu_custom_call.1} parent=35 // pred_check
        %p203 = pneg %p32
      $region38: #{tpu_custom_call.1} parent=35 // pred_check_branch
        %205 = sbr.rel (%p203) target = $region40
      $region39: #{tpu_custom_call.1} parent=35 // pred_region
        %p206 = scmp.lt.s32.totalorder %s12, 1
        %s207 = scalar_select %p206, %s12, 1
        %s208 = smul.addr %s207, 50
        %s209 = smul.addr %s208, 4
        %s210 = scalar_lea.vmem %s0, %s209
      $region40: #{tpu_custom_call.1} parent=35 // pred_fallthru
        _
    $region36: #{tpu_custom_call.1} parent=5 // pred_fallthru
      _
    %p211 = scmp.le.s32.totalorder 1, %s12
    %p212 = scmp.lt.s32.totalorder %s12, 3
    %p213 = pnand %p211, %p212
    %p214 = pneg %p213
    // Predicated region
    $region41: #{tpu_custom_call.1} parent=5 // pred_check
      _
    $region42: #{tpu_custom_call.1} parent=5 // pred_check_branch
      %216 = sbr.rel (%p213) target = $region44
    $region43: #{tpu_custom_call.1} parent=5 // pred_region
      %s217 = ssub.s32 %s12, 1
      %p218 = scmp.lt.s32.totalorder %s17, 1
      %s219 = scalar_select %p218, %s17, 1
      %s220 = smul.addr %s219, 50
      %s221 = smul.addr %s220, 4
      %s222 = scalar_lea.vmem %s0, %s221
      %p223 = pneg %p38
      %p224 = pneg %p35
      %p225 = pneg %p59
      %p226 = pneg %p56
      %p227 = pneg %p80
      %p228 = pneg %p77
      %p229 = pneg %p101
      %p230 = pneg %p98
      %p231 = pneg %p122
      %p232 = pneg %p119
      %p233 = pneg %p143
      %p234 = pneg %p140
      %p235 = pneg %p169
      %p236 = pneg %p166
      %p237 = scmp.lt.s32.totalorder %s17, 1
      %s238 = scalar_select %p237, %s17, 1
      %s239 = smul.addr %s238, 42
      %s240 = smul.addr %s239, 4
      %s241 = scalar_lea.vmem %s6, %s240
      %p242 = scmp.lt.s32.totalorder %s17, 1
      %s243 = scalar_select %p242, %s17, 1
      %s244 = smul.addr %s243, 50
      %s245 = smul.addr %s244, 4
      %s246 = scalar_lea.vmem %s0, %s245
      %p247 = scmp.lt.s32.totalorder %s17, 1
      %s248 = scalar_select %p247, %s17, 1
      %s249 = smul.addr %s248, 42
      %s250 = smul.addr %s249, 4
      %s251 = scalar_lea.vmem %s6, %s250
      %v253 = vld [vmem:[%s5] sm:$0xff]
      %v254 = vld [vmem:[%s5 + $0x8] sm:$0xff]
      %v255 = vld [vmem:[%s5 + $0x10] sm:$0xff]
      %v256 = vld [vmem:[%s5 + $0x18] sm:$0xff]
      %v257 = vld [vmem:[%s5 + $0x20] sm:$0xff]
      %v258 = vld [vmem:[%s5 + $0x28] sm:$0xff]
      %v259 = vld [vmem:[%s5 + $0x30] sm:$0xff]
      %v260 = vld [vmem:[%s5 + $0x38] sm:$0xff]
      %v261 = vld [vmem:[%s5 + $0x40] sm:$0xff]
      %v262 = vld [vmem:[%s5 + $0x48] sm:$0xff]
      %v263 = vld [vmem:[%s5 + $0x50] sm:$0xff]
      %v264 = vld [vmem:[%s5 + $0x58] sm:$0xff]
      %v265 = vld [vmem:[%s5 + $0x60] sm:$0xff]
      %v266 = vld [vmem:[%s5 + $0x68] sm:$0xff]
      %v267 = vld [vmem:[%s5 + $0x70] sm:$0xff]
      %v268 = vld [vmem:[%s5 + $0x78] sm:$0xff]
      %v269 = vld [vmem:[%s5 + $0x80] sm:$0xff]
      %v270 = vld [vmem:[%s5 + $0x88] sm:$0xff]
      %v271 = vld [vmem:[%s5 + $0x90] sm:$0xff]
      %v272 = vld [vmem:[%s5 + $0x98] sm:$0xff]
      %v273 = vld [vmem:[%s5 + $0xa0] sm:$0xff]
      %v274 = vld [vmem:[%s5 + $0xa8] sm:$0xff]
      %v275 = vld [vmem:[%s5 + $0xb0] sm:$0xff]
      %v276 = vld [vmem:[%s5 + $0xb8] sm:$0xff]
      %v277 = vld [vmem:[%s5 + $0xc0] sm:$0xff]
      %v278 = vld [vmem:[%s5 + $0xc8] sm:$0xff]
      %v279 = vld [vmem:[%s5 + $0xd0] sm:$0xff]
      %v280 = vld [vmem:[%s5 + $0xd8] sm:$0xff]
      %v281 = vld [vmem:[%s5 + $0xe0] sm:$0xff]
      %v282 = vld [vmem:[%s5 + $0xe8] sm:$0xff]
      %v283 = vld [vmem:[%s5 + $0xf0] sm:$0xff]
      %v284 = vld [vmem:[%s5 + $0xf8] sm:$0xff]
      %v285 = vld [vmem:[%s5 + $0x100] sm:$0xff]
      %v286 = vld [vmem:[%s5 + $0x108] sm:$0xff]
      %v287 = vld [vmem:[%s5 + $0x110] sm:$0xff]
      %v288 = vld [vmem:[%s5 + $0x118] sm:$0xff]
      %v289 = vld [vmem:[%s5 + $0x120] sm:$0xff]
      %v290 = vld [vmem:[%s5 + $0x128] sm:$0xff]
      %v291 = vld [vmem:[%s5 + $0x130] sm:$0xff]
      %v292 = vld [vmem:[%s5 + $0x138] sm:$0xff]
      %v293 = vld [vmem:[%s5 + $0x140] sm:$0xff]
      %v294 = vld [vmem:[%s5 + $0x148] sm:$0xff]
      %v295 = vld [vmem:[%s246 + $0x4] sm:$0xf]
      %v296 = vld [vmem:[%s246 + $0x8] sm:$0xf]
      %v297 = vld [vmem:[%s246 + $0xc] sm:$0xf]
      %v298 = vld [vmem:[%s246 + $0x10] sm:$0xf]
      %v299 = vld [vmem:[%s246 + $0x14] sm:$0xf]
      %v300 = vld [vmem:[%s246 + $0x18] sm:$0xf]
      %v301 = vld [vmem:[%s246 + $0x1c] sm:$0xf]
      %v302 = vld [vmem:[%s246 + $0x20] sm:$0xf]
      %v303 = vld [vmem:[%s246 + $0x24] sm:$0xf]
      %v304 = vld [vmem:[%s246 + $0x28] sm:$0xf]
      %v305 = vld [vmem:[%s246 + $0x2c] sm:$0xf]
      %v306 = vld [vmem:[%s246 + $0x30] sm:$0xf]
      %v307 = vld [vmem:[%s246 + $0x34] sm:$0xf]
      %v308 = vld [vmem:[%s246 + $0x38] sm:$0xf]
      %v309 = vld [vmem:[%s246 + $0x3c] sm:$0xf]
      %v310 = vld [vmem:[%s246 + $0x40] sm:$0xf]
      %v311 = vld [vmem:[%s246 + $0x44] sm:$0xf]
      %v312 = vld [vmem:[%s246 + $0x48] sm:$0xf]
      %v313 = vld [vmem:[%s246 + $0x4c] sm:$0xf]
      %v314 = vld [vmem:[%s246 + $0x50] sm:$0xf]
      %v315 = vld [vmem:[%s246 + $0x54] sm:$0xf]
      %v316 = vld [vmem:[%s246 + $0x58] sm:$0xf]
      %v317 = vld [vmem:[%s246 + $0x5c] sm:$0xf]
      %v318 = vld [vmem:[%s246 + $0x60] sm:$0xf]
      %v319 = vld [vmem:[%s246 + $0x64] sm:$0xf]
      %v320 = vld [vmem:[%s246 + $0x68] sm:$0xf]
      %v321 = vld [vmem:[%s246 + $0x6c] sm:$0xf]
      %v322 = vld [vmem:[%s246 + $0x70] sm:$0xf]
      %v323 = vld [vmem:[%s246 + $0x74] sm:$0xf]
      %v324 = vld [vmem:[%s246 + $0x78] sm:$0xf]
      %v325 = vld [vmem:[%s246 + $0x7c] sm:$0xf]
      %v326 = vld [vmem:[%s246 + $0x80] sm:$0xf]
      %v327 = vld [vmem:[%s246 + $0x84] sm:$0xf]
      %v328 = vld [vmem:[%s246 + $0x88] sm:$0xf]
      %v329 = vld [vmem:[%s246 + $0x8c] sm:$0xf]
      %v330 = vld [vmem:[%s246 + $0x90] sm:$0xf]
      %v331 = vld [vmem:[%s246 + $0x94] sm:$0xf]
      %v332 = vld [vmem:[%s246 + $0x98] sm:$0xf]
      %v333 = vld [vmem:[%s246 + $0x9c] sm:$0xf]
      %v334 = vld [vmem:[%s246 + $0xa0] sm:$0xf]
      %v335 = vld [vmem:[%s246 + $0xa4] sm:$0xf]
      %v336 = vld [vmem:[%s246 + $0xa8] sm:$0xf]
      %v337 = vld [vmem:[%s246 + $0xac] sm:$0xf]
      %v338 = vld [vmem:[%s246 + $0xb0] sm:$0xf]
      %v339 = vld [vmem:[%s246 + $0xb4] sm:$0xf]
      %v340 = vld [vmem:[%s246 + $0xb8] sm:$0xf]
      %v341 = vld [vmem:[%s246 + $0xbc] sm:$0xf]
      %v342 = vld [vmem:[%s246 + $0xc0] sm:$0xf]
      %v386 = vunpack.c.l.b16 %v295
      %v387 = vunpack.c.l.b16 %v296
      %v388 = vunpack.c.l.b16 %v297
      %v389 = vunpack.c.l.b16 %v298
      %v390 = vunpack.c.l.b16 %v299
      %v391 = vunpack.c.l.b16 %v300
      %v392 = vunpack.c.l.b16 %v301
      %v393 = vunpack.c.l.b16 %v302
      %v394 = vunpack.c.l.b16 %v303
      %v395 = vunpack.c.l.b16 %v304
      %v396 = vunpack.c.l.b16 %v305
      %v397 = vunpack.c.l.b16 %v306
      %v398 = vunpack.c.l.b16 %v307
      %v399 = vunpack.c.l.b16 %v308
      %v400 = vunpack.c.l.b16 %v309
      %v401 = vunpack.c.l.b16 %v310
      %v402 = vunpack.c.l.b16 %v311
      %v403 = vunpack.c.l.b16 %v312
      %v404 = vunpack.c.l.b16 %v313
      %v405 = vunpack.c.l.b16 %v314
      %v406 = vunpack.c.l.b16 %v315
      %v407 = vunpack.c.l.b16 %v316
      %v408 = vunpack.c.l.b16 %v317
      %v409 = vunpack.c.l.b16 %v318
      %v410 = vunpack.c.l.b16 %v319
      %v411 = vunpack.c.l.b16 %v320
      %v412 = vunpack.c.l.b16 %v321
      %v413 = vunpack.c.l.b16 %v322
      %v414 = vunpack.c.l.b16 %v323
      %v415 = vunpack.c.l.b16 %v324
      %v416 = vunpack.c.l.b16 %v325
      %v417 = vunpack.c.l.b16 %v326
      %v418 = vunpack.c.l.b16 %v327
      %v419 = vunpack.c.l.b16 %v328
      %v420 = vunpack.c.l.b16 %v329
      %v421 = vunpack.c.l.b16 %v330
      %v422 = vunpack.c.l.b16 %v331
      %v423 = vunpack.c.l.b16 %v332
      %v424 = vunpack.c.l.b16 %v333
      %v425 = vunpack.c.l.b16 %v334
      %v426 = vunpack.c.l.b16 %v335
      %v427 = vunpack.c.l.b16 %v336
      %v428 = vunpack.c.l.b16 %v337
      %v429 = vpack.c.b16 %v387, %v386
      %v430 = vpack.c.b16 %v389, %v388
      %v431 = vpack.c.b16 %v391, %v390
      %v432 = vpack.c.b16 %v393, %v392
      %v433 = vpack.c.b16 %v395, %v394
      %v434 = vpack.c.b16 %v397, %v396
      %v435 = vpack.c.b16 %v399, %v398
      %v436 = vpack.c.b16 %v401, %v400
      %v437 = vpack.c.b16 %v403, %v402
      %v438 = vpack.c.b16 %v405, %v404
      %v439 = vpack.c.b16 %v407, %v406
      %v440 = vpack.c.b16 %v409, %v408
      %v441 = vpack.c.b16 %v411, %v410
      %v442 = vpack.c.b16 %v413, %v412
      %v443 = vpack.c.b16 %v415, %v414
      %v444 = vpack.c.b16 %v417, %v416
      %v445 = vpack.c.b16 %v419, %v418
      %v446 = vpack.c.b16 %v421, %v420
      %v447 = vpack.c.b16 %v423, %v422
      %v448 = vpack.c.b16 %v425, %v424
      %v449 = vpack.c.b16 %v427, %v426
      %v450 = vpack.c.b16 %v428, %v428
      %vm451 = vsmask.f32 7424
      %v453 = vshrl.u32 %v429, 16
      %v455 = vshll.u32 %v429, 16
      %v457 = vrot.slane %v455, 1
      %v458 = vor.u32 %v453, %v457
      %v460 = vshll.u32 %v430, 16
      %v462 = vrot.slane %v460, 1
      %v463 = vsel %vm451, %v458, %v462
      %v464 = vshrl.u32 %v430, 16
      %v466 = vor.u32 %v464, %v462
      %v468 = vshll.u32 %v431, 16
      %v470 = vrot.slane %v468, 1
      %v471 = vsel %vm451, %v466, %v470
      %v472 = vshrl.u32 %v431, 16
      %v474 = vor.u32 %v472, %v470
      %v476 = vshll.u32 %v432, 16
      %v478 = vrot.slane %v476, 1
      %v479 = vsel %vm451, %v474, %v478
      %v480 = vshrl.u32 %v432, 16
      %v482 = vor.u32 %v480, %v478
      %v484 = vshll.u32 %v433, 16
      %v486 = vrot.slane %v484, 1
      %v487 = vsel %vm451, %v482, %v486
      %v488 = vshrl.u32 %v433, 16
      %v490 = vor.u32 %v488, %v486
      %v492 = vshll.u32 %v434, 16
      %v494 = vrot.slane %v492, 1
      %v495 = vsel %vm451, %v490, %v494
      %v496 = vshrl.u32 %v434, 16
      %v498 = vor.u32 %v496, %v494
      %v500 = vshll.u32 %v435, 16
      %v502 = vrot.slane %v500, 1
      %v503 = vsel %vm451, %v498, %v502
      %v504 = vshrl.u32 %v435, 16
      %v506 = vor.u32 %v504, %v502
      %v508 = vshll.u32 %v436, 16
      %v510 = vrot.slane %v508, 1
      %v511 = vsel %vm451, %v506, %v510
      %v512 = vshrl.u32 %v436, 16
      %v514 = vor.u32 %v512, %v510
      %v516 = vshll.u32 %v437, 16
      %v518 = vrot.slane %v516, 1
      %v519 = vsel %vm451, %v514, %v518
      %v520 = vshrl.u32 %v437, 16
      %v522 = vor.u32 %v520, %v518
      %v524 = vshll.u32 %v438, 16
      %v526 = vrot.slane %v524, 1
      %v527 = vsel %vm451, %v522, %v526
      %v528 = vshrl.u32 %v438, 16
      %v530 = vor.u32 %v528, %v526
      %v532 = vshll.u32 %v439, 16
      %v534 = vrot.slane %v532, 1
      %v535 = vsel %vm451, %v530, %v534
      %v536 = vshrl.u32 %v439, 16
      %v538 = vor.u32 %v536, %v534
      %v540 = vshll.u32 %v440, 16
      %v542 = vrot.slane %v540, 1
      %v543 = vsel %vm451, %v538, %v542
      %v544 = vshrl.u32 %v440, 16
      %v546 = vor.u32 %v544, %v542
      %v548 = vshll.u32 %v441, 16
      %v550 = vrot.slane %v548, 1
      %v551 = vsel %vm451, %v546, %v550
      %v552 = vshrl.u32 %v441, 16
      %v554 = vor.u32 %v552, %v550
      %v556 = vshll.u32 %v442, 16
      %v558 = vrot.slane %v556, 1
      %v559 = vsel %vm451, %v554, %v558
      %v560 = vshrl.u32 %v442, 16
      %v562 = vor.u32 %v560, %v558
      %v564 = vshll.u32 %v443, 16
      %v566 = vrot.slane %v564, 1
      %v567 = vsel %vm451, %v562, %v566
      %v568 = vshrl.u32 %v443, 16
      %v570 = vor.u32 %v568, %v566
      %v572 = vshll.u32 %v444, 16
      %v574 = vrot.slane %v572, 1
      %v575 = vsel %vm451, %v570, %v574
      %v576 = vshrl.u32 %v444, 16
      %v578 = vor.u32 %v576, %v574
      %v580 = vshll.u32 %v445, 16
      %v582 = vrot.slane %v580, 1
      %v583 = vsel %vm451, %v578, %v582
      %v584 = vshrl.u32 %v445, 16
      %v586 = vor.u32 %v584, %v582
      %v588 = vshll.u32 %v446, 16
      %v590 = vrot.slane %v588, 1
      %v591 = vsel %vm451, %v586, %v590
      %v592 = vshrl.u32 %v446, 16
      %v594 = vor.u32 %v592, %v590
      %v596 = vshll.u32 %v447, 16
      %v598 = vrot.slane %v596, 1
      %v599 = vsel %vm451, %v594, %v598
      %v600 = vshrl.u32 %v447, 16
      %v602 = vor.u32 %v600, %v598
      %v604 = vshll.u32 %v448, 16
      %v606 = vrot.slane %v604, 1
      %v607 = vsel %vm451, %v602, %v606
      %v608 = vshrl.u32 %v448, 16
      %v610 = vor.u32 %v608, %v606
      %v612 = vshll.u32 %v449, 16
      %v614 = vrot.slane %v612, 1
      %v615 = vsel %vm451, %v610, %v614
      %v616 = vshrl.u32 %v449, 16
      %v618 = vor.u32 %v616, %v614
      %v620 = vshll.u32 %v450, 16
      %v622 = vrot.slane %v620, 1
      %v623 = vsel %vm451, %v618, %v622
      %v624 = vshrl.u32 %v450, 16
      %v626 = vor.u32 %v624, %v622
      %627 = vrot.lane.b32.xlu0 %v463, 4
      %v628 = vpop.permute.xlu0 %627
      %629 = vrot.lane.b32.xlu0 %v471, 4
      %v630 = vpop.permute.xlu0 %629
      %631 = vrot.lane.b32.xlu0 %v479, 4
      %v632 = vpop.permute.xlu0 %631
      %633 = vrot.lane.b32.xlu0 %v487, 4
      %v634 = vpop.permute.xlu0 %633
      %635 = vrot.lane.b32.xlu0 %v495, 4
      %v636 = vpop.permute.xlu0 %635
      %637 = vrot.lane.b32.xlu0 %v503, 4
      %v638 = vpop.permute.xlu0 %637
      %639 = vrot.lane.b32.xlu0 %v511, 4
      %v640 = vpop.permute.xlu0 %639
      %641 = vrot.lane.b32.xlu0 %v519, 4
      %v642 = vpop.permute.xlu0 %641
      %643 = vrot.lane.b32.xlu0 %v527, 4
      %v644 = vpop.permute.xlu0 %643
      %645 = vrot.lane.b32.xlu0 %v535, 4
      %v646 = vpop.permute.xlu0 %645
      %647 = vrot.lane.b32.xlu0 %v543, 4
      %v648 = vpop.permute.xlu0 %647
      %649 = vrot.lane.b32.xlu0 %v551, 4
      %v650 = vpop.permute.xlu0 %649
      %651 = vrot.lane.b32.xlu0 %v559, 4
      %v652 = vpop.permute.xlu0 %651
      %653 = vrot.lane.b32.xlu0 %v567, 4
      %v654 = vpop.permute.xlu0 %653
      %655 = vrot.lane.b32.xlu0 %v575, 4
      %v656 = vpop.permute.xlu0 %655
      %657 = vrot.lane.b32.xlu0 %v583, 4
      %v658 = vpop.permute.xlu0 %657
      %659 = vrot.lane.b32.xlu0 %v591, 4
      %v660 = vpop.permute.xlu0 %659
      %661 = vrot.lane.b32.xlu0 %v599, 4
      %v662 = vpop.permute.xlu0 %661
      %663 = vrot.lane.b32.xlu0 %v607, 4
      %v664 = vpop.permute.xlu0 %663
      %665 = vrot.lane.b32.xlu0 %v615, 4
      %v666 = vpop.permute.xlu0 %665
      %667 = vrot.lane.b32.xlu0 %v623, 4
      %v668 = vpop.permute.xlu0 %667
      %669 = vrot.lane.b32.xlu0 %v626, 4
      %v670 = vpop.permute.xlu0 %669
      %vm671 = vcmask 1046528
      %v672 = vrot.slane %v429, 1
      %v673 = vrot.slane %v430, 1
      %v674 = vsel %vm671, %v672, %v673
      %v675 = vrot.slane %v431, 1
      %v676 = vsel %vm671, %v673, %v675
      %v677 = vrot.slane %v432, 1
      %v678 = vsel %vm671, %v675, %v677
      %v679 = vrot.slane %v433, 1
      %v680 = vsel %vm671, %v677, %v679
      %v681 = vrot.slane %v434, 1
      %v682 = vsel %vm671, %v679, %v681
      %v683 = vrot.slane %v435, 1
      %v684 = vsel %vm671, %v681, %v683
      %v685 = vrot.slane %v436, 1
      %v686 = vsel %vm671, %v683, %v685
      %v687 = vrot.slane %v437, 1
      %v688 = vsel %vm671, %v685, %v687
      %v689 = vrot.slane %v438, 1
      %v690 = vsel %vm671, %v687, %v689
      %v691 = vrot.slane %v439, 1
      %v692 = vsel %vm671, %v689, %v691
      %v693 = vrot.slane %v440, 1
      %v694 = vsel %vm671, %v691, %v693
      %v695 = vrot.slane %v441, 1
      %v696 = vsel %vm671, %v693, %v695
      %v697 = vrot.slane %v442, 1
      %v698 = vsel %vm671, %v695, %v697
      %v699 = vrot.slane %v443, 1
      %v700 = vsel %vm671, %v697, %v699
      %v701 = vrot.slane %v444, 1
      %v702 = vsel %vm671, %v699, %v701
      %v703 = vrot.slane %v445, 1
      %v704 = vsel %vm671, %v701, %v703
      %v705 = vrot.slane %v446, 1
      %v706 = vsel %vm671, %v703, %v705
      %v707 = vrot.slane %v447, 1
      %v708 = vsel %vm671, %v705, %v707
      %v709 = vrot.slane %v448, 1
      %v710 = vsel %vm671, %v707, %v709
      %v711 = vrot.slane %v449, 1
      %v712 = vsel %vm671, %v709, %v711
      %v713 = vrot.slane %v450, 1
      %v714 = vsel %vm671, %v711, %v713
      %715 = vrot.lane.b32.xlu0 %v674, 8
      %v716 = vpop.permute.xlu0 %715
      %717 = vrot.lane.b32.xlu0 %v676, 8
      %v718 = vpop.permute.xlu0 %717
      %719 = vrot.lane.b32.xlu0 %v678, 8
      %v720 = vpop.permute.xlu0 %719
      %721 = vrot.lane.b32.xlu0 %v680, 8
      %v722 = vpop.permute.xlu0 %721
      %723 = vrot.lane.b32.xlu0 %v682, 8
      %v724 = vpop.permute.xlu0 %723
      %725 = vrot.lane.b32.xlu0 %v684, 8
      %v726 = vpop.permute.xlu0 %725
      %727 = vrot.lane.b32.xlu0 %v686, 8
      %v728 = vpop.permute.xlu0 %727
      %729 = vrot.lane.b32.xlu0 %v688, 8
      %v730 = vpop.permute.xlu0 %729
      %731 = vrot.lane.b32.xlu0 %v690, 8
      %v732 = vpop.permute.xlu0 %731
      %733 = vrot.lane.b32.xlu0 %v692, 8
      %v734 = vpop.permute.xlu0 %733
      %735 = vrot.lane.b32.xlu0 %v694, 8
      %v736 = vpop.permute.xlu0 %735
      %737 = vrot.lane.b32.xlu0 %v696, 8
      %v738 = vpop.permute.xlu0 %737
      %739 = vrot.lane.b32.xlu0 %v698, 8
      %v740 = vpop.permute.xlu0 %739
      %741 = vrot.lane.b32.xlu0 %v700, 8
      %v742 = vpop.permute.xlu0 %741
      %743 = vrot.lane.b32.xlu0 %v702, 8
      %v744 = vpop.permute.xlu0 %743
      %745 = vrot.lane.b32.xlu0 %v704, 8
      %v746 = vpop.permute.xlu0 %745
      %747 = vrot.lane.b32.xlu0 %v706, 8
      %v748 = vpop.permute.xlu0 %747
      %749 = vrot.lane.b32.xlu0 %v708, 8
      %v750 = vpop.permute.xlu0 %749
      %751 = vrot.lane.b32.xlu0 %v710, 8
      %v752 = vpop.permute.xlu0 %751
      %753 = vrot.lane.b32.xlu0 %v712, 8
      %v754 = vpop.permute.xlu0 %753
      %755 = vrot.lane.b32.xlu0 %v714, 8
      %v756 = vpop.permute.xlu0 %755
      %757 = vrot.lane.b32.xlu0 %v713, 8
      %v758 = vpop.permute.xlu0 %757
      %v761 = vunpack.c.l.b16 %v338
      %v762 = vunpack.c.l.b16 %v339
      %v763 = vpack.c.b16 %v761, %v428
      %v764 = vpack.c.b16 %v762, %v762
      %v765 = vrot.slane %v763, 1
      %v766 = vsel %vm671, %v711, %v765
      %v767 = vrot.slane %v764, 1
      %v768 = vsel %vm671, %v765, %v767
      %769 = vrot.lane.b32.xlu0 %v676, 12
      %v770 = vpop.permute.xlu0 %769
      %771 = vrot.lane.b32.xlu0 %v678, 12
      %v772 = vpop.permute.xlu0 %771
      %773 = vrot.lane.b32.xlu0 %v680, 12
      %v774 = vpop.permute.xlu0 %773
      %775 = vrot.lane.b32.xlu0 %v682, 12
      %v776 = vpop.permute.xlu0 %775
      %777 = vrot.lane.b32.xlu0 %v684, 12
      %v778 = vpop.permute.xlu0 %777
      %779 = vrot.lane.b32.xlu0 %v686, 12
      %v780 = vpop.permute.xlu0 %779
      %781 = vrot.lane.b32.xlu0 %v688, 12
      %v782 = vpop.permute.xlu0 %781
      %783 = vrot.lane.b32.xlu0 %v690, 12
      %v784 = vpop.permute.xlu0 %783
      %785 = vrot.lane.b32.xlu0 %v692, 12
      %v786 = vpop.permute.xlu0 %785
      %787 = vrot.lane.b32.xlu0 %v694, 12
      %v788 = vpop.permute.xlu0 %787
      %789 = vrot.lane.b32.xlu0 %v696, 12
      %v790 = vpop.permute.xlu0 %789
      %791 = vrot.lane.b32.xlu0 %v698, 12
      %v792 = vpop.permute.xlu0 %791
      %793 = vrot.lane.b32.xlu0 %v700, 12
      %v794 = vpop.permute.xlu0 %793
      %795 = vrot.lane.b32.xlu0 %v702, 12
      %v796 = vpop.permute.xlu0 %795
      %797 = vrot.lane.b32.xlu0 %v704, 12
      %v798 = vpop.permute.xlu0 %797
      %799 = vrot.lane.b32.xlu0 %v706, 12
      %v800 = vpop.permute.xlu0 %799
      %801 = vrot.lane.b32.xlu0 %v708, 12
      %v802 = vpop.permute.xlu0 %801
      %803 = vrot.lane.b32.xlu0 %v710, 12
      %v804 = vpop.permute.xlu0 %803
      %805 = vrot.lane.b32.xlu0 %v712, 12
      %v806 = vpop.permute.xlu0 %805
      %807 = vrot.lane.b32.xlu0 %v766, 12
      %v808 = vpop.permute.xlu0 %807
      %809 = vrot.lane.b32.xlu0 %v768, 12
      %v810 = vpop.permute.xlu0 %809
      %811 = vrot.lane.b32.xlu0 %v767, 12
      %v812 = vpop.permute.xlu0 %811
      %v813 = vpack.c.b16 %v390, %v389
      %v814 = vpack.c.b16 %v392, %v391
      %v815 = vpack.c.b16 %v394, %v393
      %v816 = vpack.c.b16 %v396, %v395
      %v817 = vpack.c.b16 %v398, %v397
      %v818 = vpack.c.b16 %v400, %v399
      %v819 = vpack.c.b16 %v402, %v401
      %v820 = vpack.c.b16 %v404, %v403
      %v821 = vpack.c.b16 %v406, %v405
      %v822 = vpack.c.b16 %v408, %v407
      %v823 = vpack.c.b16 %v410, %v409
      %v824 = vpack.c.b16 %v412, %v411
      %v825 = vpack.c.b16 %v414, %v413
      %v826 = vpack.c.b16 %v416, %v415
      %v827 = vpack.c.b16 %v418, %v417
      %v828 = vpack.c.b16 %v420, %v419
      %v829 = vpack.c.b16 %v422, %v421
      %v830 = vpack.c.b16 %v424, %v423
      %v831 = vpack.c.b16 %v426, %v425
      %v832 = vpack.c.b16 %v428, %v427
      %v833 = vpack.c.b16 %v762, %v761
      %vm834 = vsmask.f32 2304
      %v836 = vshrl.u32 %v813, 16
      %v838 = vrot.slane %v836, 5
      %v839 = vshll.u32 %v813, 16
      %v841 = vrot.slane %v839, 6
      %v842 = vor.u32 %v838, %v841
      %v844 = vshrl.u32 %v814, 16
      %v846 = vrot.slane %v844, 5
      %v847 = vshll.u32 %v814, 16
      %v849 = vrot.slane %v847, 6
      %v850 = vor.u32 %v846, %v849
      %v851 = vsel %vm834, %v842, %v850
      %v853 = vshrl.u32 %v815, 16
      %v855 = vrot.slane %v853, 5
      %v856 = vshll.u32 %v815, 16
      %v858 = vrot.slane %v856, 6
      %v859 = vor.u32 %v855, %v858
      %v860 = vsel %vm834, %v850, %v859
      %v862 = vshrl.u32 %v816, 16
      %v864 = vrot.slane %v862, 5
      %v865 = vshll.u32 %v816, 16
      %v867 = vrot.slane %v865, 6
      %v868 = vor.u32 %v864, %v867
      %v869 = vsel %vm834, %v859, %v868
      %v871 = vshrl.u32 %v817, 16
      %v873 = vrot.slane %v871, 5
      %v874 = vshll.u32 %v817, 16
      %v876 = vrot.slane %v874, 6
      %v877 = vor.u32 %v873, %v876
      %v878 = vsel %vm834, %v868, %v877
      %v880 = vshrl.u32 %v818, 16
      %v882 = vrot.slane %v880, 5
      %v883 = vshll.u32 %v818, 16
      %v885 = vrot.slane %v883, 6
      %v886 = vor.u32 %v882, %v885
      %v887 = vsel %vm834, %v877, %v886
      %v889 = vshrl.u32 %v819, 16
      %v891 = vrot.slane %v889, 5
      %v892 = vshll.u32 %v819, 16
      %v894 = vrot.slane %v892, 6
      %v895 = vor.u32 %v891, %v894
      %v896 = vsel %vm834, %v886, %v895
      %v898 = vshrl.u32 %v820, 16
      %v900 = vrot.slane %v898, 5
      %v901 = vshll.u32 %v820, 16
      %v903 = vrot.slane %v901, 6
      %v904 = vor.u32 %v900, %v903
      %v905 = vsel %vm834, %v895, %v904
      %v907 = vshrl.u32 %v821, 16
      %v909 = vrot.slane %v907, 5
      %v910 = vshll.u32 %v821, 16
      %v912 = vrot.slane %v910, 6
      %v913 = vor.u32 %v909, %v912
      %v914 = vsel %vm834, %v904, %v913
      %v916 = vshrl.u32 %v822, 16
      %v918 = vrot.slane %v916, 5
      %v919 = vshll.u32 %v822, 16
      %v921 = vrot.slane %v919, 6
      %v922 = vor.u32 %v918, %v921
      %v923 = vsel %vm834, %v913, %v922
      %v925 = vshrl.u32 %v823, 16
      %v927 = vrot.slane %v925, 5
      %v928 = vshll.u32 %v823, 16
      %v930 = vrot.slane %v928, 6
      %v931 = vor.u32 %v927, %v930
      %v932 = vsel %vm834, %v922, %v931
      %v934 = vshrl.u32 %v824, 16
      %v936 = vrot.slane %v934, 5
      %v937 = vshll.u32 %v824, 16
      %v939 = vrot.slane %v937, 6
      %v940 = vor.u32 %v936, %v939
      %v941 = vsel %vm834, %v931, %v940
      %v943 = vshrl.u32 %v825, 16
      %v945 = vrot.slane %v943, 5
      %v946 = vshll.u32 %v825, 16
      %v948 = vrot.slane %v946, 6
      %v949 = vor.u32 %v945, %v948
      %v950 = vsel %vm834, %v940, %v949
      %v952 = vshrl.u32 %v826, 16
      %v954 = vrot.slane %v952, 5
      %v955 = vshll.u32 %v826, 16
      %v957 = vrot.slane %v955, 6
      %v958 = vor.u32 %v954, %v957
      %v959 = vsel %vm834, %v949, %v958
      %v961 = vshrl.u32 %v827, 16
      %v963 = vrot.slane %v961, 5
      %v964 = vshll.u32 %v827, 16
      %v966 = vrot.slane %v964, 6
      %v967 = vor.u32 %v963, %v966
      %v968 = vsel %vm834, %v958, %v967
      %v970 = vshrl.u32 %v828, 16
      %v972 = vrot.slane %v970, 5
      %v973 = vshll.u32 %v828, 16
      %v975 = vrot.slane %v973, 6
      %v976 = vor.u32 %v972, %v975
      %v977 = vsel %vm834, %v967, %v976
      %v979 = vshrl.u32 %v829, 16
      %v981 = vrot.slane %v979, 5
      %v982 = vshll.u32 %v829, 16
      %v984 = vrot.slane %v982, 6
      %v985 = vor.u32 %v981, %v984
      %v986 = vsel %vm834, %v976, %v985
      %v988 = vshrl.u32 %v830, 16
      %v990 = vrot.slane %v988, 5
      %v991 = vshll.u32 %v830, 16
      %v993 = vrot.slane %v991, 6
      %v994 = vor.u32 %v990, %v993
      %v995 = vsel %vm834, %v985, %v994
      %v997 = vshrl.u32 %v831, 16
      %v999 = vrot.slane %v997, 5
      %v1000 = vshll.u32 %v831, 16
      %v1002 = vrot.slane %v1000, 6
      %v1003 = vor.u32 %v999, %v1002
      %v1004 = vsel %vm834, %v994, %v1003
      %v1006 = vshrl.u32 %v832, 16
      %v1008 = vrot.slane %v1006, 5
      %v1009 = vshll.u32 %v832, 16
      %v1011 = vrot.slane %v1009, 6
      %v1012 = vor.u32 %v1008, %v1011
      %v1013 = vsel %vm834, %v1003, %v1012
      %v1015 = vshrl.u32 %v833, 16
      %v1017 = vrot.slane %v1015, 5
      %v1018 = vshll.u32 %v833, 16
      %v1020 = vrot.slane %v1018, 6
      %v1021 = vor.u32 %v1017, %v1020
      %v1022 = vsel %vm834, %v1012, %v1021
      %1023 = vrot.lane.b32.xlu0 %v842, 16
      %v1024 = vpop.permute.xlu0 %1023
      %1025 = vrot.lane.b32.xlu0 %v851, 16
      %v1026 = vpop.permute.xlu0 %1025
      %1027 = vrot.lane.b32.xlu0 %v860, 16
      %v1028 = vpop.permute.xlu0 %1027
      %1029 = vrot.lane.b32.xlu0 %v869, 16
      %v1030 = vpop.permute.xlu0 %1029
      %1031 = vrot.lane.b32.xlu0 %v878, 16
      %v1032 = vpop.permute.xlu0 %1031
      %1033 = vrot.lane.b32.xlu0 %v887, 16
      %v1034 = vpop.permute.xlu0 %1033
      %1035 = vrot.lane.b32.xlu0 %v896, 16
      %v1036 = vpop.permute.xlu0 %1035
      %1037 = vrot.lane.b32.xlu0 %v905, 16
      %v1038 = vpop.permute.xlu0 %1037
      %1039 = vrot.lane.b32.xlu0 %v914, 16
      %v1040 = vpop.permute.xlu0 %1039
      %1041 = vrot.lane.b32.xlu0 %v923, 16
      %v1042 = vpop.permute.xlu0 %1041
      %1043 = vrot.lane.b32.xlu0 %v932, 16
      %v1044 = vpop.permute.xlu0 %1043
      %1045 = vrot.lane.b32.xlu0 %v941, 16
      %v1046 = vpop.permute.xlu0 %1045
      %1047 = vrot.lane.b32.xlu0 %v950, 16
      %v1048 = vpop.permute.xlu0 %1047
      %1049 = vrot.lane.b32.xlu0 %v959, 16
      %v1050 = vpop.permute.xlu0 %1049
      %1051 = vrot.lane.b32.xlu0 %v968, 16
      %v1052 = vpop.permute.xlu0 %1051
      %1053 = vrot.lane.b32.xlu0 %v977, 16
      %v1054 = vpop.permute.xlu0 %1053
      %1055 = vrot.lane.b32.xlu0 %v986, 16
      %v1056 = vpop.permute.xlu0 %1055
      %1057 = vrot.lane.b32.xlu0 %v995, 16
      %v1058 = vpop.permute.xlu0 %1057
      %1059 = vrot.lane.b32.xlu0 %v1004, 16
      %v1060 = vpop.permute.xlu0 %1059
      %1061 = vrot.lane.b32.xlu0 %v1013, 16
      %v1062 = vpop.permute.xlu0 %1061
      %1063 = vrot.lane.b32.xlu0 %v1022, 16
      %v1064 = vpop.permute.xlu0 %1063
      %1065 = vrot.lane.b32.xlu0 %v1021, 16
      %v1066 = vpop.permute.xlu0 %1065
      %v1068 = vunpack.c.l.b16 %v340
      %v1069 = vpack.c.b16 %v1068, %v1068
      %vm1070 = vcmask 1041408
      %v1071 = vrot.slane %v813, 6
      %v1072 = vrot.slane %v814, 6
      %v1073 = vsel %vm1070, %v1071, %v1072
      %v1074 = vrot.slane %v815, 6
      %v1075 = vsel %vm1070, %v1072, %v1074
      %v1076 = vrot.slane %v816, 6
      %v1077 = vsel %vm1070, %v1074, %v1076
      %v1078 = vrot.slane %v817, 6
      %v1079 = vsel %vm1070, %v1076, %v1078
      %v1080 = vrot.slane %v818, 6
      %v1081 = vsel %vm1070, %v1078, %v1080
      %v1082 = vrot.slane %v819, 6
      %v1083 = vsel %vm1070, %v1080, %v1082
      %v1084 = vrot.slane %v820, 6
      %v1085 = vsel %vm1070, %v1082, %v1084
      %v1086 = vrot.slane %v821, 6
      %v1087 = vsel %vm1070, %v1084, %v1086
      %v1088 = vrot.slane %v822, 6
      %v1089 = vsel %vm1070, %v1086, %v1088
      %v1090 = vrot.slane %v823, 6
      %v1091 = vsel %vm1070, %v1088, %v1090
      %v1092 = vrot.slane %v824, 6
      %v1093 = vsel %vm1070, %v1090, %v1092
      %v1094 = vrot.slane %v825, 6
      %v1095 = vsel %vm1070, %v1092, %v1094
      %v1096 = vrot.slane %v826, 6
      %v1097 = vsel %vm1070, %v1094, %v1096
      %v1098 = vrot.slane %v827, 6
      %v1099 = vsel %vm1070, %v1096, %v1098
      %v1100 = vrot.slane %v828, 6
      %v1101 = vsel %vm1070, %v1098, %v1100
      %v1102 = vrot.slane %v829, 6
      %v1103 = vsel %vm1070, %v1100, %v1102
      %v1104 = vrot.slane %v830, 6
      %v1105 = vsel %vm1070, %v1102, %v1104
      %v1106 = vrot.slane %v831, 6
      %v1107 = vsel %vm1070, %v1104, %v1106
      %v1108 = vrot.slane %v832, 6
      %v1109 = vsel %vm1070, %v1106, %v1108
      %v1110 = vrot.slane %v833, 6
      %v1111 = vsel %vm1070, %v1108, %v1110
      %v1112 = vrot.slane %v1069, 6
      %v1113 = vsel %vm1070, %v1110, %v1112
      %1114 = vrot.lane.b32.xlu0 %v1071, 20
      %v1115 = vpop.permute.xlu0 %1114
      %1116 = vrot.lane.b32.xlu0 %v1073, 20
      %v1117 = vpop.permute.xlu0 %1116
      %1118 = vrot.lane.b32.xlu0 %v1075, 20
      %v1119 = vpop.permute.xlu0 %1118
      %1120 = vrot.lane.b32.xlu0 %v1077, 20
      %v1121 = vpop.permute.xlu0 %1120
      %1122 = vrot.lane.b32.xlu0 %v1079, 20
      %v1123 = vpop.permute.xlu0 %1122
      %1124 = vrot.lane.b32.xlu0 %v1081, 20
      %v1125 = vpop.permute.xlu0 %1124
      %1126 = vrot.lane.b32.xlu0 %v1083, 20
      %v1127 = vpop.permute.xlu0 %1126
      %1128 = vrot.lane.b32.xlu0 %v1085, 20
      %v1129 = vpop.permute.xlu0 %1128
      %1130 = vrot.lane.b32.xlu0 %v1087, 20
      %v1131 = vpop.permute.xlu0 %1130
      %1132 = vrot.lane.b32.xlu0 %v1089, 20
      %v1133 = vpop.permute.xlu0 %1132
      %1134 = vrot.lane.b32.xlu0 %v1091, 20
      %v1135 = vpop.permute.xlu0 %1134
      %1136 = vrot.lane.b32.xlu0 %v1093, 20
      %v1137 = vpop.permute.xlu0 %1136
      %1138 = vrot.lane.b32.xlu0 %v1095, 20
      %v1139 = vpop.permute.xlu0 %1138
      %1140 = vrot.lane.b32.xlu0 %v1097, 20
      %v1141 = vpop.permute.xlu0 %1140
      %1142 = vrot.lane.b32.xlu0 %v1099, 20
      %v1143 = vpop.permute.xlu0 %1142
      %1144 = vrot.lane.b32.xlu0 %v1101, 20
      %v1145 = vpop.permute.xlu0 %1144
      %1146 = vrot.lane.b32.xlu0 %v1103, 20
      %v1147 = vpop.permute.xlu0 %1146
      %1148 = vrot.lane.b32.xlu0 %v1105, 20
      %v1149 = vpop.permute.xlu0 %1148
      %1150 = vrot.lane.b32.xlu0 %v1107, 20
      %v1151 = vpop.permute.xlu0 %1150
      %1152 = vrot.lane.b32.xlu0 %v1109, 20
      %v1153 = vpop.permute.xlu0 %1152
      %1154 = vrot.lane.b32.xlu0 %v1111, 20
      %v1155 = vpop.permute.xlu0 %1154
      %1156 = vrot.lane.b32.xlu0 %v1113, 20
      %v1157 = vpop.permute.xlu0 %1156
      %v1160 = vunpack.c.l.b16 %v341
      %v1161 = vunpack.c.l.b16 %v342
      %v1162 = vpack.c.b16 %v1160, %v1068
      %v1163 = vpack.c.b16 %v1161, %v1161
      %v1164 = vrot.slane %v1162, 6
      %v1165 = vsel %vm1070, %v1110, %v1164
      %v1166 = vrot.slane %v1163, 6
      %v1167 = vsel %vm1070, %v1164, %v1166
      %1168 = vrot.lane.b32.xlu0 %v1072, 24
      %v1169 = vpop.permute.xlu0 %1168
      %1170 = vrot.lane.b32.xlu0 %v1075, 24
      %v1171 = vpop.permute.xlu0 %1170
      %1172 = vrot.lane.b32.xlu0 %v1077, 24
      %v1173 = vpop.permute.xlu0 %1172
      %1174 = vrot.lane.b32.xlu0 %v1079, 24
      %v1175 = vpop.permute.xlu0 %1174
      %1176 = vrot.lane.b32.xlu0 %v1081, 24
      %v1177 = vpop.permute.xlu0 %1176
      %1178 = vrot.lane.b32.xlu0 %v1083, 24
      %v1179 = vpop.permute.xlu0 %1178
      %1180 = vrot.lane.b32.xlu0 %v1085, 24
      %v1181 = vpop.permute.xlu0 %1180
      %1182 = vrot.lane.b32.xlu0 %v1087, 24
      %v1183 = vpop.permute.xlu0 %1182
      %1184 = vrot.lane.b32.xlu0 %v1089, 24
      %v1185 = vpop.permute.xlu0 %1184
      %1186 = vrot.lane.b32.xlu0 %v1091, 24
      %v1187 = vpop.permute.xlu0 %1186
      %1188 = vrot.lane.b32.xlu0 %v1093, 24
      %v1189 = vpop.permute.xlu0 %1188
      %1190 = vrot.lane.b32.xlu0 %v1095, 24
      %v1191 = vpop.permute.xlu0 %1190
      %1192 = vrot.lane.b32.xlu0 %v1097, 24
      %v1193 = vpop.permute.xlu0 %1192
      %1194 = vrot.lane.b32.xlu0 %v1099, 24
      %v1195 = vpop.permute.xlu0 %1194
      %1196 = vrot.lane.b32.xlu0 %v1101, 24
      %v1197 = vpop.permute.xlu0 %1196
      %1198 = vrot.lane.b32.xlu0 %v1103, 24
      %v1199 = vpop.permute.xlu0 %1198
      %1200 = vrot.lane.b32.xlu0 %v1105, 24
      %v1201 = vpop.permute.xlu0 %1200
      %1202 = vrot.lane.b32.xlu0 %v1107, 24
      %v1203 = vpop.permute.xlu0 %1202
      %1204 = vrot.lane.b32.xlu0 %v1109, 24
      %v1205 = vpop.permute.xlu0 %1204
      %1206 = vrot.lane.b32.xlu0 %v1111, 24
      %v1207 = vpop.permute.xlu0 %1206
      %1208 = vrot.lane.b32.xlu0 %v1165, 24
      %v1209 = vpop.permute.xlu0 %1208
      %1210 = vrot.lane.b32.xlu0 %v1167, 24
      %v1211 = vpop.permute.xlu0 %1210
      %vm1212 = vsmask.f32 1280
      %v1213 = vrot.slane %v844, 6
      %v1214 = vrot.slane %v847, 7
      %v1215 = vor.u32 %v1213, %v1214
      %v1216 = vrot.slane %v853, 6
      %v1217 = vrot.slane %v856, 7
      %v1218 = vor.u32 %v1216, %v1217
      %v1219 = vsel %vm1212, %v1215, %v1218
      %v1220 = vrot.slane %v862, 6
      %v1221 = vrot.slane %v865, 7
      %v1222 = vor.u32 %v1220, %v1221
      %v1223 = vsel %vm1212, %v1218, %v1222
      %v1224 = vrot.slane %v871, 6
      %v1225 = vrot.slane %v874, 7
      %v1226 = vor.u32 %v1224, %v1225
      %v1227 = vsel %vm1212, %v1222, %v1226
      %v1228 = vrot.slane %v880, 6
      %v1229 = vrot.slane %v883, 7
      %v1230 = vor.u32 %v1228, %v1229
      %v1231 = vsel %vm1212, %v1226, %v1230
      %v1232 = vrot.slane %v889, 6
      %v1233 = vrot.slane %v892, 7
      %v1234 = vor.u32 %v1232, %v1233
      %v1235 = vsel %vm1212, %v1230, %v1234
      %v1236 = vrot.slane %v898, 6
      %v1237 = vrot.slane %v901, 7
      %v1238 = vor.u32 %v1236, %v1237
      %v1239 = vsel %vm1212, %v1234, %v1238
      %v1240 = vrot.slane %v907, 6
      %v1241 = vrot.slane %v910, 7
      %v1242 = vor.u32 %v1240, %v1241
      %v1243 = vsel %vm1212, %v1238, %v1242
      %v1244 = vrot.slane %v916, 6
      %v1245 = vrot.slane %v919, 7
      %v1246 = vor.u32 %v1244, %v1245
      %v1247 = vsel %vm1212, %v1242, %v1246
      %v1248 = vrot.slane %v925, 6
      %v1249 = vrot.slane %v928, 7
      %v1250 = vor.u32 %v1248, %v1249
      %v1251 = vsel %vm1212, %v1246, %v1250
      %v1252 = vrot.slane %v934, 6
      %v1253 = vrot.slane %v937, 7
      %v1254 = vor.u32 %v1252, %v1253
      %v1255 = vsel %vm1212, %v1250, %v1254
      %v1256 = vrot.slane %v943, 6
      %v1257 = vrot.slane %v946, 7
      %v1258 = vor.u32 %v1256, %v1257
      %v1259 = vsel %vm1212, %v1254, %v1258
      %v1260 = vrot.slane %v952, 6
      %v1261 = vrot.slane %v955, 7
      %v1262 = vor.u32 %v1260, %v1261
      %v1263 = vsel %vm1212, %v1258, %v1262
      %v1264 = vrot.slane %v961, 6
      %v1265 = vrot.slane %v964, 7
      %v1266 = vor.u32 %v1264, %v1265
      %v1267 = vsel %vm1212, %v1262, %v1266
      %v1268 = vrot.slane %v970, 6
      %v1269 = vrot.slane %v973, 7
      %v1270 = vor.u32 %v1268, %v1269
      %v1271 = vsel %vm1212, %v1266, %v1270
      %v1272 = vrot.slane %v979, 6
      %v1273 = vrot.slane %v982, 7
      %v1274 = vor.u32 %v1272, %v1273
      %v1275 = vsel %vm1212, %v1270, %v1274
      %v1276 = vrot.slane %v988, 6
      %v1277 = vrot.slane %v991, 7
      %v1278 = vor.u32 %v1276, %v1277
      %v1279 = vsel %vm1212, %v1274, %v1278
      %v1280 = vrot.slane %v997, 6
      %v1281 = vrot.slane %v1000, 7
      %v1282 = vor.u32 %v1280, %v1281
      %v1283 = vsel %vm1212, %v1278, %v1282
      %v1284 = vrot.slane %v1006, 6
      %v1285 = vrot.slane %v1009, 7
      %v1286 = vor.u32 %v1284, %v1285
      %v1287 = vsel %vm1212, %v1282, %v1286
      %v1288 = vrot.slane %v1015, 6
      %v1289 = vrot.slane %v1018, 7
      %v1290 = vor.u32 %v1288, %v1289
      %v1291 = vsel %vm1212, %v1286, %v1290
      %v1293 = vshrl.u32 %v1162, 16
      %v1295 = vrot.slane %v1293, 6
      %v1296 = vshll.u32 %v1162, 16
      %v1298 = vrot.slane %v1296, 7
      %v1299 = vor.u32 %v1295, %v1298
      %v1300 = vsel %vm1212, %v1290, %v1299
      %v1302 = vshrl.u32 %v1163, 16
      %v1304 = vrot.slane %v1302, 6
      %v1305 = vshll.u32 %v1163, 16
      %v1307 = vrot.slane %v1305, 7
      %v1308 = vor.u32 %v1304, %v1307
      %v1309 = vsel %vm1212, %v1299, %v1308
      %1310 = vrot.lane.b32.xlu0 %v1215, 28
      %v1311 = vpop.permute.xlu0 %1310
      %1312 = vrot.lane.b32.xlu0 %v1219, 28
      %v1313 = vpop.permute.xlu0 %1312
      %1314 = vrot.lane.b32.xlu0 %v1223, 28
      %v1315 = vpop.permute.xlu0 %1314
      %1316 = vrot.lane.b32.xlu0 %v1227, 28
      %v1317 = vpop.permute.xlu0 %1316
      %1318 = vrot.lane.b32.xlu0 %v1231, 28
      %v1319 = vpop.permute.xlu0 %1318
      %1320 = vrot.lane.b32.xlu0 %v1235, 28
      %v1321 = vpop.permute.xlu0 %1320
      %1322 = vrot.lane.b32.xlu0 %v1239, 28
      %v1323 = vpop.permute.xlu0 %1322
      %1324 = vrot.lane.b32.xlu0 %v1243, 28
      %v1325 = vpop.permute.xlu0 %1324
      %1326 = vrot.lane.b32.xlu0 %v1247, 28
      %v1327 = vpop.permute.xlu0 %1326
      %1328 = vrot.lane.b32.xlu0 %v1251, 28
      %v1329 = vpop.permute.xlu0 %1328
      %1330 = vrot.lane.b32.xlu0 %v1255, 28
      %v1331 = vpop.permute.xlu0 %1330
      %1332 = vrot.lane.b32.xlu0 %v1259, 28
      %v1333 = vpop.permute.xlu0 %1332
      %1334 = vrot.lane.b32.xlu0 %v1263, 28
      %v1335 = vpop.permute.xlu0 %1334
      %1336 = vrot.lane.b32.xlu0 %v1267, 28
      %v1337 = vpop.permute.xlu0 %1336
      %1338 = vrot.lane.b32.xlu0 %v1271, 28
      %v1339 = vpop.permute.xlu0 %1338
      %1340 = vrot.lane.b32.xlu0 %v1275, 28
      %v1341 = vpop.permute.xlu0 %1340
      %1342 = vrot.lane.b32.xlu0 %v1279, 28
      %v1343 = vpop.permute.xlu0 %1342
      %1344 = vrot.lane.b32.xlu0 %v1283, 28
      %v1345 = vpop.permute.xlu0 %1344
      %1346 = vrot.lane.b32.xlu0 %v1287, 28
      %v1347 = vpop.permute.xlu0 %1346
      %1348 = vrot.lane.b32.xlu0 %v1291, 28
      %v1349 = vpop.permute.xlu0 %1348
      %1350 = vrot.lane.b32.xlu0 %v1300, 28
      %v1351 = vpop.permute.xlu0 %1350
      %1352 = vrot.lane.b32.xlu0 %v1309, 28
      %v1353 = vpop.permute.xlu0 %1352
      %vm1354 = vcmask 1040384
      %v1355 = vrot.slane %v814, 7
      %v1356 = vrot.slane %v815, 7
      %v1357 = vsel %vm1354, %v1355, %v1356
      %v1358 = vrot.slane %v816, 7
      %v1359 = vsel %vm1354, %v1356, %v1358
      %v1360 = vrot.slane %v817, 7
      %v1361 = vsel %vm1354, %v1358, %v1360
      %v1362 = vrot.slane %v818, 7
      %v1363 = vsel %vm1354, %v1360, %v1362
      %v1364 = vrot.slane %v819, 7
      %v1365 = vsel %vm1354, %v1362, %v1364
      %v1366 = vrot.slane %v820, 7
      %v1367 = vsel %vm1354, %v1364, %v1366
      %v1368 = vrot.slane %v821, 7
      %v1369 = vsel %vm1354, %v1366, %v1368
      %v1370 = vrot.slane %v822, 7
      %v1371 = vsel %vm1354, %v1368, %v1370
      %v1372 = vrot.slane %v823, 7
      %v1373 = vsel %vm1354, %v1370, %v1372
      %v1374 = vrot.slane %v824, 7
      %v1375 = vsel %vm1354, %v1372, %v1374
      %v1376 = vrot.slane %v825, 7
      %v1377 = vsel %vm1354, %v1374, %v1376
      %v1378 = vrot.slane %v826, 7
      %v1379 = vsel %vm1354, %v1376, %v1378
      %v1380 = vrot.slane %v827, 7
      %v1381 = vsel %vm1354, %v1378, %v1380
      %v1382 = vrot.slane %v828, 7
      %v1383 = vsel %vm1354, %v1380, %v1382
      %v1384 = vrot.slane %v829, 7
      %v1385 = vsel %vm1354, %v1382, %v1384
      %v1386 = vrot.slane %v830, 7
      %v1387 = vsel %vm1354, %v1384, %v1386
      %v1388 = vrot.slane %v831, 7
      %v1389 = vsel %vm1354, %v1386, %v1388
      %v1390 = vrot.slane %v832, 7
      %v1391 = vsel %vm1354, %v1388, %v1390
      %v1392 = vrot.slane %v833, 7
      %v1393 = vsel %vm1354, %v1390, %v1392
      %v1394 = vrot.slane %v1162, 7
      %v1395 = vsel %vm1354, %v1392, %v1394
      %v1396 = vrot.slane %v1163, 7
      %v1397 = vsel %vm1354, %v1394, %v1396
      %1398 = vrot.lane.b32.xlu0 %v1355, 32
      %v1399 = vpop.permute.xlu0 %1398
      %1400 = vrot.lane.b32.xlu0 %v1357, 32
      %v1401 = vpop.permute.xlu0 %1400
      %1402 = vrot.lane.b32.xlu0 %v1359, 32
      %v1403 = vpop.permute.xlu0 %1402
      %1404 = vrot.lane.b32.xlu0 %v1361, 32
      %v1405 = vpop.permute.xlu0 %1404
      %1406 = vrot.lane.b32.xlu0 %v1363, 32
      %v1407 = vpop.permute.xlu0 %1406
      %1408 = vrot.lane.b32.xlu0 %v1365, 32
      %v1409 = vpop.permute.xlu0 %1408
      %1410 = vrot.lane.b32.xlu0 %v1367, 32
      %v1411 = vpop.permute.xlu0 %1410
      %1412 = vrot.lane.b32.xlu0 %v1369, 32
      %v1413 = vpop.permute.xlu0 %1412
      %1414 = vrot.lane.b32.xlu0 %v1371, 32
      %v1415 = vpop.permute.xlu0 %1414
      %1416 = vrot.lane.b32.xlu0 %v1373, 32
      %v1417 = vpop.permute.xlu0 %1416
      %1418 = vrot.lane.b32.xlu0 %v1375, 32
      %v1419 = vpop.permute.xlu0 %1418
      %1420 = vrot.lane.b32.xlu0 %v1377, 32
      %v1421 = vpop.permute.xlu0 %1420
      %1422 = vrot.lane.b32.xlu0 %v1379, 32
      %v1423 = vpop.permute.xlu0 %1422
      %1424 = vrot.lane.b32.xlu0 %v1381, 32
      %v1425 = vpop.permute.xlu0 %1424
      %1426 = vrot.lane.b32.xlu0 %v1383, 32
      %v1427 = vpop.permute.xlu0 %1426
      %1428 = vrot.lane.b32.xlu0 %v1385, 32
      %v1429 = vpop.permute.xlu0 %1428
      %1430 = vrot.lane.b32.xlu0 %v1387, 32
      %v1431 = vpop.permute.xlu0 %1430
      %1432 = vrot.lane.b32.xlu0 %v1389, 32
      %v1433 = vpop.permute.xlu0 %1432
      %1434 = vrot.lane.b32.xlu0 %v1391, 32
      %v1435 = vpop.permute.xlu0 %1434
      %1436 = vrot.lane.b32.xlu0 %v1393, 32
      %v1437 = vpop.permute.xlu0 %1436
      %1438 = vrot.lane.b32.xlu0 %v1395, 32
      %v1439 = vpop.permute.xlu0 %1438
      %1440 = vrot.lane.b32.xlu0 %v1397, 32
      %v1441 = vpop.permute.xlu0 %1440
      %vm1442 = vcmask 31744
      %v1444 = vsel %vm1442, %v429, %v628
      %v1446 = vsel %vm1442, %v430, %v630
      %v1448 = vsel %vm1442, %v431, %v632
      %v1450 = vsel %vm1442, %v432, %v634
      %v1452 = vsel %vm1442, %v433, %v636
      %v1454 = vsel %vm1442, %v434, %v638
      %v1456 = vsel %vm1442, %v435, %v640
      %v1458 = vsel %vm1442, %v436, %v642
      %v1460 = vsel %vm1442, %v437, %v644
      %v1462 = vsel %vm1442, %v438, %v646
      %v1464 = vsel %vm1442, %v439, %v648
      %v1466 = vsel %vm1442, %v440, %v650
      %v1468 = vsel %vm1442, %v441, %v652
      %v1470 = vsel %vm1442, %v442, %v654
      %v1472 = vsel %vm1442, %v443, %v656
      %v1474 = vsel %vm1442, %v444, %v658
      %v1476 = vsel %vm1442, %v445, %v660
      %v1478 = vsel %vm1442, %v446, %v662
      %v1480 = vsel %vm1442, %v447, %v664
      %v1482 = vsel %vm1442, %v448, %v666
      %v1484 = vsel %vm1442, %v449, %v668
      %v1486 = vsel %vm1442, %v450, %v670
      %vm1487 = vcmask 64512
      %v1489 = vsel %vm1487, %v1444, %v716
      %v1491 = vsel %vm1487, %v1446, %v718
      %v1493 = vsel %vm1487, %v1448, %v720
      %v1495 = vsel %vm1487, %v1450, %v722
      %v1497 = vsel %vm1487, %v1452, %v724
      %v1499 = vsel %vm1487, %v1454, %v726
      %v1501 = vsel %vm1487, %v1456, %v728
      %v1503 = vsel %vm1487, %v1458, %v730
      %v1505 = vsel %vm1487, %v1460, %v732
      %v1507 = vsel %vm1487, %v1462, %v734
      %v1509 = vsel %vm1487, %v1464, %v736
      %v1511 = vsel %vm1487, %v1466, %v738
      %v1513 = vsel %vm1487, %v1468, %v740
      %v1515 = vsel %vm1487, %v1470, %v742
      %v1517 = vsel %vm1487, %v1472, %v744
      %v1519 = vsel %vm1487, %v1474, %v746
      %v1521 = vsel %vm1487, %v1476, %v748
      %v1523 = vsel %vm1487, %v1478, %v750
      %v1525 = vsel %vm1487, %v1480, %v752
      %v1527 = vsel %vm1487, %v1482, %v754
      %v1529 = vsel %vm1487, %v1484, %v756
      %v1531 = vsel %vm1487, %v1486, %v758
      %vm1532 = vcmask 97280
      %v1534 = vsel %vm1532, %v1489, %v770
      %v1536 = vsel %vm1532, %v1491, %v772
      %v1538 = vsel %vm1532, %v1493, %v774
      %v1540 = vsel %vm1532, %v1495, %v776
      %v1542 = vsel %vm1532, %v1497, %v778
      %v1544 = vsel %vm1532, %v1499, %v780
      %v1546 = vsel %vm1532, %v1501, %v782
      %v1548 = vsel %vm1532, %v1503, %v784
      %v1550 = vsel %vm1532, %v1505, %v786
      %v1552 = vsel %vm1532, %v1507, %v788
      %v1554 = vsel %vm1532, %v1509, %v790
      %v1556 = vsel %vm1532, %v1511, %v792
      %v1558 = vsel %vm1532, %v1513, %v794
      %v1560 = vsel %vm1532, %v1515, %v796
      %v1562 = vsel %vm1532, %v1517, %v798
      %v1564 = vsel %vm1532, %v1519, %v800
      %v1566 = vsel %vm1532, %v1521, %v802
      %v1568 = vsel %vm1532, %v1523, %v804
      %v1570 = vsel %vm1532, %v1525, %v806
      %v1572 = vsel %vm1532, %v1527, %v808
      %v1574 = vsel %vm1532, %v1529, %v810
      %v1576 = vsel %vm1532, %v1531, %v812
      %vm1577 = vcmask 130048
      %v1579 = vsel %vm1577, %v1534, %v1024
      %v1581 = vsel %vm1577, %v1536, %v1026
      %v1583 = vsel %vm1577, %v1538, %v1028
      %v1585 = vsel %vm1577, %v1540, %v1030
      %v1587 = vsel %vm1577, %v1542, %v1032
      %v1589 = vsel %vm1577, %v1544, %v1034
      %v1591 = vsel %vm1577, %v1546, %v1036
      %v1593 = vsel %vm1577, %v1548, %v1038
      %v1595 = vsel %vm1577, %v1550, %v1040
      %v1597 = vsel %vm1577, %v1552, %v1042
      %v1599 = vsel %vm1577, %v1554, %v1044
      %v1601 = vsel %vm1577, %v1556, %v1046
      %v1603 = vsel %vm1577, %v1558, %v1048
      %v1605 = vsel %vm1577, %v1560, %v1050
      %v1607 = vsel %vm1577, %v1562, %v1052
      %v1609 = vsel %vm1577, %v1564, %v1054
      %v1611 = vsel %vm1577, %v1566, %v1056
      %v1613 = vsel %vm1577, %v1568, %v1058
      %v1615 = vsel %vm1577, %v1570, %v1060
      %v1617 = vsel %vm1577, %v1572, %v1062
      %v1619 = vsel %vm1577, %v1574, %v1064
      %v1621 = vsel %vm1577, %v1576, %v1066
      %vm1622 = vcmask 162816
      %v1624 = vsel %vm1622, %v1579, %v1115
      %v1626 = vsel %vm1622, %v1581, %v1117
      %v1628 = vsel %vm1622, %v1583, %v1119
      %v1630 = vsel %vm1622, %v1585, %v1121
      %v1632 = vsel %vm1622, %v1587, %v1123
      %v1634 = vsel %vm1622, %v1589, %v1125
      %v1636 = vsel %vm1622, %v1591, %v1127
      %v1638 = vsel %vm1622, %v1593, %v1129
      %v1640 = vsel %vm1622, %v1595, %v1131
      %v1642 = vsel %vm1622, %v1597, %v1133
      %v1644 = vsel %vm1622, %v1599, %v1135
      %v1646 = vsel %vm1622, %v1601, %v1137
      %v1648 = vsel %vm1622, %v1603, %v1139
      %v1650 = vsel %vm1622, %v1605, %v1141
      %v1652 = vsel %vm1622, %v1607, %v1143
      %v1654 = vsel %vm1622, %v1609, %v1145
      %v1656 = vsel %vm1622, %v1611, %v1147
      %v1658 = vsel %vm1622, %v1613, %v1149
      %v1660 = vsel %vm1622, %v1615, %v1151
      %v1662 = vsel %vm1622, %v1617, %v1153
      %v1664 = vsel %vm1622, %v1619, %v1155
      %v1666 = vsel %vm1622, %v1621, %v1157
      %vm1667 = vcmask 195584
      %v1669 = vsel %vm1667, %v1624, %v1169
      %v1671 = vsel %vm1667, %v1626, %v1171
      %v1673 = vsel %vm1667, %v1628, %v1173
      %v1675 = vsel %vm1667, %v1630, %v1175
      %v1677 = vsel %vm1667, %v1632, %v1177
      %v1679 = vsel %vm1667, %v1634, %v1179
      %v1681 = vsel %vm1667, %v1636, %v1181
      %v1683 = vsel %vm1667, %v1638, %v1183
      %v1685 = vsel %vm1667, %v1640, %v1185
      %v1687 = vsel %vm1667, %v1642, %v1187
      %v1689 = vsel %vm1667, %v1644, %v1189
      %v1691 = vsel %vm1667, %v1646, %v1191
      %v1693 = vsel %vm1667, %v1648, %v1193
      %v1695 = vsel %vm1667, %v1650, %v1195
      %v1697 = vsel %vm1667, %v1652, %v1197
      %v1699 = vsel %vm1667, %v1654, %v1199
      %v1701 = vsel %vm1667, %v1656, %v1201
      %v1703 = vsel %vm1667, %v1658, %v1203
      %v1705 = vsel %vm1667, %v1660, %v1205
      %v1707 = vsel %vm1667, %v1662, %v1207
      %v1709 = vsel %vm1667, %v1664, %v1209
      %v1711 = vsel %vm1667, %v1666, %v1211
      %vm1712 = vcmask 228352
      %v1714 = vsel %vm1712, %v1669, %v1311
      %v1716 = vsel %vm1712, %v1671, %v1313
      %v1718 = vsel %vm1712, %v1673, %v1315
      %v1720 = vsel %vm1712, %v1675, %v1317
      %v1722 = vsel %vm1712, %v1677, %v1319
      %v1724 = vsel %vm1712, %v1679, %v1321
      %v1726 = vsel %vm1712, %v1681, %v1323
      %v1728 = vsel %vm1712, %v1683, %v1325
      %v1730 = vsel %vm1712, %v1685, %v1327
      %v1732 = vsel %vm1712, %v1687, %v1329
      %v1734 = vsel %vm1712, %v1689, %v1331
      %v1736 = vsel %vm1712, %v1691, %v1333
      %v1738 = vsel %vm1712, %v1693, %v1335
      %v1740 = vsel %vm1712, %v1695, %v1337
      %v1742 = vsel %vm1712, %v1697, %v1339
      %v1744 = vsel %vm1712, %v1699, %v1341
      %v1746 = vsel %vm1712, %v1701, %v1343
      %v1748 = vsel %vm1712, %v1703, %v1345
      %v1750 = vsel %vm1712, %v1705, %v1347
      %v1752 = vsel %vm1712, %v1707, %v1349
      %v1754 = vsel %vm1712, %v1709, %v1351
      %v1756 = vsel %vm1712, %v1711, %v1353
      %vm1757 = vcmask 261120
      %v1759 = vsel %vm1757, %v1714, %v1399
      %v1761 = vsel %vm1757, %v1716, %v1401
      %v1763 = vsel %vm1757, %v1718, %v1403
      %v1765 = vsel %vm1757, %v1720, %v1405
      %v1767 = vsel %vm1757, %v1722, %v1407
      %v1769 = vsel %vm1757, %v1724, %v1409
      %v1771 = vsel %vm1757, %v1726, %v1411
      %v1773 = vsel %vm1757, %v1728, %v1413
      %v1775 = vsel %vm1757, %v1730, %v1415
      %v1777 = vsel %vm1757, %v1732, %v1417
      %v1779 = vsel %vm1757, %v1734, %v1419
      %v1781 = vsel %vm1757, %v1736, %v1421
      %v1783 = vsel %vm1757, %v1738, %v1423
      %v1785 = vsel %vm1757, %v1740, %v1425
      %v1787 = vsel %vm1757, %v1742, %v1427
      %v1789 = vsel %vm1757, %v1744, %v1429
      %v1791 = vsel %vm1757, %v1746, %v1431
      %v1793 = vsel %vm1757, %v1748, %v1433
      %v1795 = vsel %vm1757, %v1750, %v1435
      %v1797 = vsel %vm1757, %v1752, %v1437
      %v1799 = vsel %vm1757, %v1754, %v1439
      %v1801 = vsel %vm1757, %v1756, %v1441
      %v1802 = vld [vmem:[%s1] sm:$0xf]
      %v1803 = vld [vmem:[%s1 + $0x4] sm:$0xf]
      %v1804 = vld [vmem:[%s1 + $0x8] sm:$0xf]
      %v1805 = vld [vmem:[%s1 + $0xc] sm:$0xf]
      %v1806 = vld [vmem:[%s1 + $0x10] sm:$0x3]
      %v1807 = vld [vmem:[%s2] sm:$0x1]
      %v1809 = vlaneseq
      %v1810 = vshrl.u32 %v1809, 7
      %v1811 = vsub.s32 0, %v1810
      %v1812 = vrot.slane %v1807, %v1811
      %vm1814 = vsmask.f32 5376
      %v1815 = vshrl.u32 %v1759, 16
      %v1817 = vrot.slane %v1815, 2
      %v1818 = vshll.u32 %v1759, 16
      %v1820 = vrot.slane %v1818, 3
      %v1821 = vor.u32 %v1817, %v1820
      %v1822 = vshrl.u32 %v1761, 16
      %v1824 = vrot.slane %v1822, 2
      %v1825 = vshll.u32 %v1761, 16
      %v1827 = vrot.slane %v1825, 3
      %v1828 = vor.u32 %v1824, %v1827
      %v1829 = vsel %vm1814, %v1821, %v1828
      %v1830 = vshrl.u32 %v1763, 16
      %v1832 = vrot.slane %v1830, 2
      %v1833 = vshll.u32 %v1763, 16
      %v1835 = vrot.slane %v1833, 3
      %v1836 = vor.u32 %v1832, %v1835
      %v1837 = vsel %vm1814, %v1828, %v1836
      %v1838 = vshrl.u32 %v1765, 16
      %v1840 = vrot.slane %v1838, 2
      %v1841 = vshll.u32 %v1765, 16
      %v1843 = vrot.slane %v1841, 3
      %v1844 = vor.u32 %v1840, %v1843
      %v1845 = vsel %vm1814, %v1836, %v1844
      %v1846 = vshrl.u32 %v1767, 16
      %v1848 = vrot.slane %v1846, 2
      %v1849 = vshll.u32 %v1767, 16
      %v1851 = vrot.slane %v1849, 3
      %v1852 = vor.u32 %v1848, %v1851
      %v1853 = vsel %vm1814, %v1844, %v1852
      %v1854 = vshrl.u32 %v1769, 16
      %v1856 = vrot.slane %v1854, 2
      %v1857 = vshll.u32 %v1769, 16
      %v1859 = vrot.slane %v1857, 3
      %v1860 = vor.u32 %v1856, %v1859
      %v1861 = vsel %vm1814, %v1852, %v1860
      %v1862 = vshrl.u32 %v1771, 16
      %v1864 = vrot.slane %v1862, 2
      %v1865 = vshll.u32 %v1771, 16
      %v1867 = vrot.slane %v1865, 3
      %v1868 = vor.u32 %v1864, %v1867
      %v1869 = vsel %vm1814, %v1860, %v1868
      %v1870 = vshrl.u32 %v1773, 16
      %v1872 = vrot.slane %v1870, 2
      %v1873 = vshll.u32 %v1773, 16
      %v1875 = vrot.slane %v1873, 3
      %v1876 = vor.u32 %v1872, %v1875
      %v1877 = vsel %vm1814, %v1868, %v1876
      %v1878 = vshrl.u32 %v1775, 16
      %v1880 = vrot.slane %v1878, 2
      %v1881 = vshll.u32 %v1775, 16
      %v1883 = vrot.slane %v1881, 3
      %v1884 = vor.u32 %v1880, %v1883
      %v1885 = vsel %vm1814, %v1876, %v1884
      %v1886 = vshrl.u32 %v1777, 16
      %v1888 = vrot.slane %v1886, 2
      %v1889 = vshll.u32 %v1777, 16
      %v1891 = vrot.slane %v1889, 3
      %v1892 = vor.u32 %v1888, %v1891
      %v1893 = vsel %vm1814, %v1884, %v1892
      %v1894 = vshrl.u32 %v1779, 16
      %v1896 = vrot.slane %v1894, 2
      %v1897 = vshll.u32 %v1779, 16
      %v1899 = vrot.slane %v1897, 3
      %v1900 = vor.u32 %v1896, %v1899
      %v1901 = vsel %vm1814, %v1892, %v1900
      %v1902 = vshrl.u32 %v1781, 16
      %v1904 = vrot.slane %v1902, 2
      %v1905 = vshll.u32 %v1781, 16
      %v1907 = vrot.slane %v1905, 3
      %v1908 = vor.u32 %v1904, %v1907
      %v1909 = vsel %vm1814, %v1900, %v1908
      %v1910 = vshrl.u32 %v1783, 16
      %v1912 = vrot.slane %v1910, 2
      %v1913 = vshll.u32 %v1783, 16
      %v1915 = vrot.slane %v1913, 3
      %v1916 = vor.u32 %v1912, %v1915
      %v1917 = vsel %vm1814, %v1908, %v1916
      %v1918 = vshrl.u32 %v1785, 16
      %v1920 = vrot.slane %v1918, 2
      %v1921 = vshll.u32 %v1785, 16
      %v1923 = vrot.slane %v1921, 3
      %v1924 = vor.u32 %v1920, %v1923
      %v1925 = vsel %vm1814, %v1916, %v1924
      %v1926 = vshrl.u32 %v1787, 16
      %v1928 = vrot.slane %v1926, 2
      %v1929 = vshll.u32 %v1787, 16
      %v1931 = vrot.slane %v1929, 3
      %v1932 = vor.u32 %v1928, %v1931
      %v1933 = vsel %vm1814, %v1924, %v1932
      %v1934 = vshrl.u32 %v1789, 16
      %v1936 = vrot.slane %v1934, 2
      %v1937 = vshll.u32 %v1789, 16
      %v1939 = vrot.slane %v1937, 3
      %v1940 = vor.u32 %v1936, %v1939
      %v1941 = vsel %vm1814, %v1932, %v1940
      %v1942 = vshrl.u32 %v1791, 16
      %v1944 = vrot.slane %v1942, 2
      %v1945 = vshll.u32 %v1791, 16
      %v1947 = vrot.slane %v1945, 3
      %v1948 = vor.u32 %v1944, %v1947
      %v1949 = vsel %vm1814, %v1940, %v1948
      %v1950 = vshrl.u32 %v1793, 16
      %v1952 = vrot.slane %v1950, 2
      %v1953 = vshll.u32 %v1793, 16
      %v1955 = vrot.slane %v1953, 3
      %v1956 = vor.u32 %v1952, %v1955
      %v1957 = vsel %vm1814, %v1948, %v1956
      %v1958 = vshrl.u32 %v1795, 16
      %v1960 = vrot.slane %v1958, 2
      %v1961 = vshll.u32 %v1795, 16
      %v1963 = vrot.slane %v1961, 3
      %v1964 = vor.u32 %v1960, %v1963
      %v1965 = vsel %vm1814, %v1956, %v1964
      %v1966 = vshrl.u32 %v1797, 16
      %v1968 = vrot.slane %v1966, 2
      %v1969 = vshll.u32 %v1797, 16
      %v1971 = vrot.slane %v1969, 3
      %v1972 = vor.u32 %v1968, %v1971
      %v1973 = vsel %vm1814, %v1964, %v1972
      %v1974 = vshrl.u32 %v1799, 16
      %v1976 = vrot.slane %v1974, 2
      %v1977 = vshll.u32 %v1799, 16
      %v1979 = vrot.slane %v1977, 3
      %v1980 = vor.u32 %v1976, %v1979
      %v1981 = vsel %vm1814, %v1972, %v1980
      %v1982 = vshrl.u32 %v1801, 16
      %v1984 = vrot.slane %v1982, 2
      %v1985 = vshll.u32 %v1801, 16
      %v1987 = vrot.slane %v1985, 3
      %v1988 = vor.u32 %v1984, %v1987
      %v1989 = vsel %vm1814, %v1980, %v1988
      %v1995 = vunpack.c.l.b16 %v1802
      %v1996 = vunpack.c.l.b16 %v1803
      %v1997 = vunpack.c.l.b16 %v1804
      %v1998 = vunpack.c.l.b16 %v1805
      %v1999 = vunpack.c.l.b16 %v1806
      %v2000 = vpack.c.b16 %v1996, %v1995
      %v2001 = vpack.c.b16 %v1998, %v1997
      %v2002 = vpack.c.b16 %v1999, %v1999
      %vm2005 = vcmask 293888
      %v2007 = vsel %vm2005, %v1829, 0
      %v2010 = vsel %vm2005, %v1837, 0
      %v2013 = vsel %vm2005, %v1845, 0
      %v2016 = vsel %vm2005, %v1853, 0
      %v2019 = vsel %vm2005, %v1861, 0
      %v2022 = vsel %vm2005, %v1869, 0
      %v2025 = vsel %vm2005, %v1877, 0
      %v2028 = vsel %vm2005, %v1885, 0
      %v2031 = vsel %vm2005, %v1893, 0
      %v2034 = vsel %vm2005, %v1901, 0
      %v2037 = vsel %vm2005, %v1909, 0
      %v2040 = vsel %vm2005, %v1917, 0
      %v2043 = vsel %vm2005, %v1925, 0
      %v2046 = vsel %vm2005, %v1933, 0
      %v2049 = vsel %vm2005, %v1941, 0
      %v2052 = vsel %vm2005, %v1949, 0
      %v2055 = vsel %vm2005, %v1957, 0
      %v2058 = vsel %vm2005, %v1965, 0
      %v2061 = vsel %vm2005, %v1973, 0
      %v2064 = vsel %vm2005, %v1981, 0
      %v2067 = vsel %vm2005, %v1989, 0
      %vm2069 = vcmask 1041408
      %v2071 = vsel %vm2069, %v2002, 0
      %2073 = vmatprep.subr.bf16.mxu0 0
      %2074 = vmatpush1.bf16.msra.mxu0 0
      %2075 = vmatprep.subr.bf16.mxu0 0
      %2076 = vmatpush1.bf16.msra.mxu0 0
      %2077 = vmatprep.subr.bf16.mxu0 0
      %2078 = vmatpush1.bf16.msra.mxu0 0
      %2079 = vmatprep.subr.bf16.mxu0 0
      %2080 = vmatpush1.bf16.msra.mxu0 0
      %2081 = vmatprep.subr.bf16.mxu0 0
      %2082 = vmatpush1.bf16.msra.mxu0 0
      %2083 = vmatprep.subr.bf16.mxu0 0
      %2084 = vmatpush1.bf16.msra.mxu0 %v2071
      %2085 = vmatprep.subr.bf16.mxu0 0
      %2086 = vmatpush1.bf16.msra.mxu0 %v2001
      %2087 = vmatprep.subr.bf16.mxu0 0
      %2088 = vmatpush1.bf16.msra.mxu0 %v2000
      %2089 = vmatprep.subr.bf16.mxu0 0
      %2090 = vmatpush2.bf16.msra.mxu0 0
      %2091 = vmatprep.subr.bf16.mxu0 0
      %2092 = vmatpush2.bf16.msra.mxu0 0
      %2093 = vmatprep.subr.bf16.mxu0 0
      %2094 = vmatpush2.bf16.msra.mxu0 0
      %2095 = vmatprep.subr.bf16.mxu0 0
      %2096 = vmatpush2.bf16.msra.mxu0 0
      %2097 = vmatprep.subr.bf16.mxu0 0
      %2098 = vmatpush2.bf16.msra.mxu0 0
      %2099 = vmatprep.subr.bf16.mxu0 0
      %2100 = vmatpush2.bf16.msra.mxu0 0
      %2101 = vmatprep.subr.bf16.mxu0 0
      %2102 = vmatpush2.bf16.msra.mxu0 0
      %2103 = vmatprep.subr.bf16.mxu0 0
      %2104 = vmatpush2.bf16.msra.mxu0 0
      %2105 = vmatprep.mubr.bf16.mxu0 0
      %2106 = vmatmul.mubr.bf16.gmra.mxu0 %v2007
      %v2107 = vpop.f32.mrf.mxu0
      %v2108 = vadd.f32 %v1812, %v2107
      %v2109 = vpop.f32.mrf.mxu0
      %v2110 = vpop.f32.mrf.mxu0
      %v2111 = vadd.f32 %v1812, %v2110
      %v2112 = vpop.f32.mrf.mxu0
      %2113 = vmatprep.mubr.bf16.mxu0 0
      %2114 = vmatmul.mubr.bf16.gmra.mxu0 %v2010
      %v2115 = vpop.f32.mrf.mxu0
      %v2116 = vadd.f32 %v1812, %v2115
      %v2117 = vpop.f32.mrf.mxu0
      %v2118 = vpop.f32.mrf.mxu0
      %v2119 = vadd.f32 %v1812, %v2118
      %v2120 = vpop.f32.mrf.mxu0
      %2121 = vmatprep.mubr.bf16.mxu0 0
      %2122 = vmatmul.mubr.bf16.gmra.mxu0 %v2013
      %v2123 = vpop.f32.mrf.mxu0
      %v2124 = vadd.f32 %v1812, %v2123
      %v2125 = vpop.f32.mrf.mxu0
      %v2126 = vpop.f32.mrf.mxu0
      %v2127 = vadd.f32 %v1812, %v2126
      %v2128 = vpop.f32.mrf.mxu0
      %2129 = vmatprep.mubr.bf16.mxu0 0
      %2130 = vmatmul.mubr.bf16.gmra.mxu0 %v2016
      %v2131 = vpop.f32.mrf.mxu0
      %v2132 = vadd.f32 %v1812, %v2131
      %v2133 = vpop.f32.mrf.mxu0
      %v2134 = vpop.f32.mrf.mxu0
      %v2135 = vadd.f32 %v1812, %v2134
      %v2136 = vpop.f32.mrf.mxu0
      %2137 = vmatprep.mubr.bf16.mxu0 0
      %2138 = vmatmul.mubr.bf16.gmra.mxu0 %v2019
      %v2139 = vpop.f32.mrf.mxu0
      %v2140 = vadd.f32 %v1812, %v2139
      %v2141 = vpop.f32.mrf.mxu0
      %v2142 = vpop.f32.mrf.mxu0
      %v2143 = vadd.f32 %v1812, %v2142
      %v2144 = vpop.f32.mrf.mxu0
      %2145 = vmatprep.mubr.bf16.mxu0 0
      %2146 = vmatmul.mubr.bf16.gmra.mxu0 %v2022
      %v2147 = vpop.f32.mrf.mxu0
      %v2148 = vadd.f32 %v1812, %v2147
      %v2149 = vpop.f32.mrf.mxu0
      %v2150 = vpop.f32.mrf.mxu0
      %v2151 = vadd.f32 %v1812, %v2150
      %v2152 = vpop.f32.mrf.mxu0
      %2153 = vmatprep.mubr.bf16.mxu0 0
      %2154 = vmatmul.mubr.bf16.gmra.mxu0 %v2025
      %v2155 = vpop.f32.mrf.mxu0
      %v2156 = vadd.f32 %v1812, %v2155
      %v2157 = vpop.f32.mrf.mxu0
      %v2158 = vpop.f32.mrf.mxu0
      %v2159 = vadd.f32 %v1812, %v2158
      %v2160 = vpop.f32.mrf.mxu0
      %2161 = vmatprep.mubr.bf16.mxu0 0
      %2162 = vmatmul.mubr.bf16.gmra.mxu0 %v2028
      %v2163 = vpop.f32.mrf.mxu0
      %v2164 = vadd.f32 %v1812, %v2163
      %v2165 = vpop.f32.mrf.mxu0
      %v2166 = vpop.f32.mrf.mxu0
      %v2167 = vadd.f32 %v1812, %v2166
      %v2168 = vpop.f32.mrf.mxu0
      %2169 = vmatprep.mubr.bf16.mxu0 0
      %2170 = vmatmul.mubr.bf16.gmra.mxu0 %v2031
      %v2171 = vpop.f32.mrf.mxu0
      %v2172 = vadd.f32 %v1812, %v2171
      %v2173 = vpop.f32.mrf.mxu0
      %v2174 = vpop.f32.mrf.mxu0
      %v2175 = vadd.f32 %v1812, %v2174
      %v2176 = vpop.f32.mrf.mxu0
      %2177 = vmatprep.mubr.bf16.mxu0 0
      %2178 = vmatmul.mubr.bf16.gmra.mxu0 %v2034
      %v2179 = vpop.f32.mrf.mxu0
      %v2180 = vadd.f32 %v1812, %v2179
      %v2181 = vpop.f32.mrf.mxu0
      %v2182 = vpop.f32.mrf.mxu0
      %v2183 = vadd.f32 %v1812, %v2182
      %v2184 = vpop.f32.mrf.mxu0
      %2185 = vmatprep.mubr.bf16.mxu0 0
      %2186 = vmatmul.mubr.bf16.gmra.mxu0 %v2037
      %v2187 = vpop.f32.mrf.mxu0
      %v2188 = vadd.f32 %v1812, %v2187
      %v2189 = vpop.f32.mrf.mxu0
      %v2190 = vpop.f32.mrf.mxu0
      %v2191 = vadd.f32 %v1812, %v2190
      %v2192 = vpop.f32.mrf.mxu0
      %2193 = vmatprep.mubr.bf16.mxu0 0
      %2194 = vmatmul.mubr.bf16.gmra.mxu0 %v2040
      %v2195 = vpop.f32.mrf.mxu0
      %v2196 = vadd.f32 %v1812, %v2195
      %v2197 = vpop.f32.mrf.mxu0
      %v2198 = vpop.f32.mrf.mxu0
      %v2199 = vadd.f32 %v1812, %v2198
      %v2200 = vpop.f32.mrf.mxu0
      %2201 = vmatprep.mubr.bf16.mxu0 0
      %2202 = vmatmul.mubr.bf16.gmra.mxu0 %v2043
      %v2203 = vpop.f32.mrf.mxu0
      %v2204 = vadd.f32 %v1812, %v2203
      %v2205 = vpop.f32.mrf.mxu0
      %v2206 = vpop.f32.mrf.mxu0
      %v2207 = vadd.f32 %v1812, %v2206
      %v2208 = vpop.f32.mrf.mxu0
      %2209 = vmatprep.mubr.bf16.mxu0 0
      %2210 = vmatmul.mubr.bf16.gmra.mxu0 %v2046
      %v2211 = vpop.f32.mrf.mxu0
      %v2212 = vadd.f32 %v1812, %v2211
      %v2213 = vpop.f32.mrf.mxu0
      %v2214 = vpop.f32.mrf.mxu0
      %v2215 = vadd.f32 %v1812, %v2214
      %v2216 = vpop.f32.mrf.mxu0
      %2217 = vmatprep.mubr.bf16.mxu0 0
      %2218 = vmatmul.mubr.bf16.gmra.mxu0 %v2049
      %v2219 = vpop.f32.mrf.mxu0
      %v2220 = vadd.f32 %v1812, %v2219
      %v2221 = vpop.f32.mrf.mxu0
      %v2222 = vpop.f32.mrf.mxu0
      %v2223 = vadd.f32 %v1812, %v2222
      %v2224 = vpop.f32.mrf.mxu0
      %2225 = vmatprep.mubr.bf16.mxu0 0
      %2226 = vmatmul.mubr.bf16.gmra.mxu0 %v2052
      %v2227 = vpop.f32.mrf.mxu0
      %v2228 = vadd.f32 %v1812, %v2227
      %v2229 = vpop.f32.mrf.mxu0
      %v2230 = vpop.f32.mrf.mxu0
      %v2231 = vadd.f32 %v1812, %v2230
      %v2232 = vpop.f32.mrf.mxu0
      %2233 = vmatprep.mubr.bf16.mxu0 0
      %2234 = vmatmul.mubr.bf16.gmra.mxu0 %v2055
      %v2235 = vpop.f32.mrf.mxu0
      %v2236 = vadd.f32 %v1812, %v2235
      %v2237 = vpop.f32.mrf.mxu0
      %v2238 = vpop.f32.mrf.mxu0
      %v2239 = vadd.f32 %v1812, %v2238
      %v2240 = vpop.f32.mrf.mxu0
      %2241 = vmatprep.mubr.bf16.mxu0 0
      %2242 = vmatmul.mubr.bf16.gmra.mxu0 %v2058
      %v2243 = vpop.f32.mrf.mxu0
      %v2244 = vadd.f32 %v1812, %v2243
      %v2245 = vpop.f32.mrf.mxu0
      %v2246 = vpop.f32.mrf.mxu0
      %v2247 = vadd.f32 %v1812, %v2246
      %v2248 = vpop.f32.mrf.mxu0
      %2249 = vmatprep.mubr.bf16.mxu0 0
      %2250 = vmatmul.mubr.bf16.gmra.mxu0 %v2061
      %v2251 = vpop.f32.mrf.mxu0
      %v2252 = vadd.f32 %v1812, %v2251
      %v2253 = vpop.f32.mrf.mxu0
      %v2254 = vpop.f32.mrf.mxu0
      %v2255 = vadd.f32 %v1812, %v2254
      %v2256 = vpop.f32.mrf.mxu0
      %2257 = vmatprep.mubr.bf16.mxu0 0
      %2258 = vmatmul.mubr.bf16.gmra.mxu0 %v2064
      %v2259 = vpop.f32.mrf.mxu0
      %v2260 = vadd.f32 %v1812, %v2259
      %v2261 = vpop.f32.mrf.mxu0
      %v2262 = vpop.f32.mrf.mxu0
      %v2263 = vadd.f32 %v1812, %v2262
      %v2264 = vpop.f32.mrf.mxu0
      %2265 = vmatprep.mubr.bf16.mxu0 0
      %2266 = vmatmul.mubr.bf16.gmra.mxu0 %v2067
      %v2267 = vpop.f32.mrf.mxu0
      %v2268 = vadd.f32 %v1812, %v2267
      %v2269 = vpop.f32.mrf.mxu0
      %v2270 = vpop.f32.mrf.mxu0
      %v2271 = vadd.f32 %v1812, %v2270
      %v2272 = vpop.f32.mrf.mxu0
      %2273 = vdwg.mxu0
      %v2274 = vmax.f32 %v2108, 0.0
      %v2275 = vmax.f32 %v2111, 0.0
      %v2276 = vmax.f32 %v2116, 0.0
      %v2277 = vmax.f32 %v2119, 0.0
      %v2278 = vmax.f32 %v2124, 0.0
      %v2279 = vmax.f32 %v2127, 0.0
      %v2280 = vmax.f32 %v2132, 0.0
      %v2281 = vmax.f32 %v2135, 0.0
      %v2282 = vmax.f32 %v2140, 0.0
      %v2283 = vmax.f32 %v2143, 0.0
      %v2284 = vmax.f32 %v2148, 0.0
      %v2285 = vmax.f32 %v2151, 0.0
      %v2286 = vmax.f32 %v2156, 0.0
      %v2287 = vmax.f32 %v2159, 0.0
      %v2288 = vmax.f32 %v2164, 0.0
      %v2289 = vmax.f32 %v2167, 0.0
      %v2290 = vmax.f32 %v2172, 0.0
      %v2291 = vmax.f32 %v2175, 0.0
      %v2292 = vmax.f32 %v2180, 0.0
      %v2293 = vmax.f32 %v2183, 0.0
      %v2294 = vmax.f32 %v2188, 0.0
      %v2295 = vmax.f32 %v2191, 0.0
      %v2296 = vmax.f32 %v2196, 0.0
      %v2297 = vmax.f32 %v2199, 0.0
      %v2298 = vmax.f32 %v2204, 0.0
      %v2299 = vmax.f32 %v2207, 0.0
      %v2300 = vmax.f32 %v2212, 0.0
      %v2301 = vmax.f32 %v2215, 0.0
      %v2302 = vmax.f32 %v2220, 0.0
      %v2303 = vmax.f32 %v2223, 0.0
      %v2304 = vmax.f32 %v2228, 0.0
      %v2305 = vmax.f32 %v2231, 0.0
      %v2306 = vmax.f32 %v2236, 0.0
      %v2307 = vmax.f32 %v2239, 0.0
      %v2308 = vmax.f32 %v2244, 0.0
      %v2309 = vmax.f32 %v2247, 0.0
      %v2310 = vmax.f32 %v2252, 0.0
      %v2311 = vmax.f32 %v2255, 0.0
      %v2312 = vmax.f32 %v2260, 0.0
      %v2313 = vmax.f32 %v2263, 0.0
      %v2314 = vmax.f32 %v2268, 0.0
      %v2315 = vmax.f32 %v2271, 0.0
      %2317 = vset.pattern.permute.xlu0 0
      %2318 = vperm.xlu0 %2317, %v253
      %v2319 = vpop.permute.xlu0 %2318
      %2322 = vset.pattern.permute.xlu0 0
      %2323 = vperm.xlu0 %2322, %v254
      %v2324 = vpop.permute.xlu0 %2323
      %2327 = vset.pattern.permute.xlu0 0
      %2328 = vperm.xlu0 %2327, %v255
      %v2329 = vpop.permute.xlu0 %2328
      %2332 = vset.pattern.permute.xlu0 0
      %2333 = vperm.xlu0 %2332, %v256
      %v2334 = vpop.permute.xlu0 %2333
      %2337 = vset.pattern.permute.xlu0 0
      %2338 = vperm.xlu0 %2337, %v257
      %v2339 = vpop.permute.xlu0 %2338
      %2342 = vset.pattern.permute.xlu0 0
      %2343 = vperm.xlu0 %2342, %v258
      %v2344 = vpop.permute.xlu0 %2343
      %2347 = vset.pattern.permute.xlu0 0
      %2348 = vperm.xlu0 %2347, %v259
      %v2349 = vpop.permute.xlu0 %2348
      %2352 = vset.pattern.permute.xlu0 0
      %2353 = vperm.xlu0 %2352, %v260
      %v2354 = vpop.permute.xlu0 %2353
      %2357 = vset.pattern.permute.xlu0 0
      %2358 = vperm.xlu0 %2357, %v261
      %v2359 = vpop.permute.xlu0 %2358
      %2362 = vset.pattern.permute.xlu0 0
      %2363 = vperm.xlu0 %2362, %v262
      %v2364 = vpop.permute.xlu0 %2363
      %2367 = vset.pattern.permute.xlu0 0
      %2368 = vperm.xlu0 %2367, %v263
      %v2369 = vpop.permute.xlu0 %2368
      %2372 = vset.pattern.permute.xlu0 0
      %2373 = vperm.xlu0 %2372, %v264
      %v2374 = vpop.permute.xlu0 %2373
      %2377 = vset.pattern.permute.xlu0 0
      %2378 = vperm.xlu0 %2377, %v265
      %v2379 = vpop.permute.xlu0 %2378
      %2382 = vset.pattern.permute.xlu0 0
      %2383 = vperm.xlu0 %2382, %v266
      %v2384 = vpop.permute.xlu0 %2383
      %2387 = vset.pattern.permute.xlu0 0
      %2388 = vperm.xlu0 %2387, %v267
      %v2389 = vpop.permute.xlu0 %2388
      %2392 = vset.pattern.permute.xlu0 0
      %2393 = vperm.xlu0 %2392, %v268
      %v2394 = vpop.permute.xlu0 %2393
      %2397 = vset.pattern.permute.xlu0 0
      %2398 = vperm.xlu0 %2397, %v269
      %v2399 = vpop.permute.xlu0 %2398
      %2402 = vset.pattern.permute.xlu0 0
      %2403 = vperm.xlu0 %2402, %v270
      %v2404 = vpop.permute.xlu0 %2403
      %2407 = vset.pattern.permute.xlu0 0
      %2408 = vperm.xlu0 %2407, %v271
      %v2409 = vpop.permute.xlu0 %2408
      %2412 = vset.pattern.permute.xlu0 0
      %2413 = vperm.xlu0 %2412, %v272
      %v2414 = vpop.permute.xlu0 %2413
      %2417 = vset.pattern.permute.xlu0 0
      %2418 = vperm.xlu0 %2417, %v273
      %v2419 = vpop.permute.xlu0 %2418
      %2422 = vset.pattern.permute.xlu0 0
      %2423 = vperm.xlu0 %2422, %v274
      %v2424 = vpop.permute.xlu0 %2423
      %2427 = vset.pattern.permute.xlu0 0
      %2428 = vperm.xlu0 %2427, %v275
      %v2429 = vpop.permute.xlu0 %2428
      %2432 = vset.pattern.permute.xlu0 0
      %2433 = vperm.xlu0 %2432, %v276
      %v2434 = vpop.permute.xlu0 %2433
      %2437 = vset.pattern.permute.xlu0 0
      %2438 = vperm.xlu0 %2437, %v277
      %v2439 = vpop.permute.xlu0 %2438
      %2442 = vset.pattern.permute.xlu0 0
      %2443 = vperm.xlu0 %2442, %v278
      %v2444 = vpop.permute.xlu0 %2443
      %2447 = vset.pattern.permute.xlu0 0
      %2448 = vperm.xlu0 %2447, %v279
      %v2449 = vpop.permute.xlu0 %2448
      %2452 = vset.pattern.permute.xlu0 0
      %2453 = vperm.xlu0 %2452, %v280
      %v2454 = vpop.permute.xlu0 %2453
      %2457 = vset.pattern.permute.xlu0 0
      %2458 = vperm.xlu0 %2457, %v281
      %v2459 = vpop.permute.xlu0 %2458
      %2462 = vset.pattern.permute.xlu0 0
      %2463 = vperm.xlu0 %2462, %v282
      %v2464 = vpop.permute.xlu0 %2463
      %2467 = vset.pattern.permute.xlu0 0
      %2468 = vperm.xlu0 %2467, %v283
      %v2469 = vpop.permute.xlu0 %2468
      %2472 = vset.pattern.permute.xlu0 0
      %2473 = vperm.xlu0 %2472, %v284
      %v2474 = vpop.permute.xlu0 %2473
      %2477 = vset.pattern.permute.xlu0 0
      %2478 = vperm.xlu0 %2477, %v285
      %v2479 = vpop.permute.xlu0 %2478
      %2482 = vset.pattern.permute.xlu0 0
      %2483 = vperm.xlu0 %2482, %v286
      %v2484 = vpop.permute.xlu0 %2483
      %2487 = vset.pattern.permute.xlu0 0
      %2488 = vperm.xlu0 %2487, %v287
      %v2489 = vpop.permute.xlu0 %2488
      %2492 = vset.pattern.permute.xlu0 0
      %2493 = vperm.xlu0 %2492, %v288
      %v2494 = vpop.permute.xlu0 %2493
      %2497 = vset.pattern.permute.xlu0 0
      %2498 = vperm.xlu0 %2497, %v289
      %v2499 = vpop.permute.xlu0 %2498
      %2502 = vset.pattern.permute.xlu0 0
      %2503 = vperm.xlu0 %2502, %v290
      %v2504 = vpop.permute.xlu0 %2503
      %2507 = vset.pattern.permute.xlu0 0
      %2508 = vperm.xlu0 %2507, %v291
      %v2509 = vpop.permute.xlu0 %2508
      %2512 = vset.pattern.permute.xlu0 0
      %2513 = vperm.xlu0 %2512, %v292
      %v2514 = vpop.permute.xlu0 %2513
      %2517 = vset.pattern.permute.xlu0 0
      %2518 = vperm.xlu0 %2517, %v293
      %v2519 = vpop.permute.xlu0 %2518
      %2522 = vset.pattern.permute.xlu0 0
      %2523 = vperm.xlu0 %2522, %v294
      %v2524 = vpop.permute.xlu0 %2523
      %v2526 = vmul.f32 %v2274, %v2319
      %v2527 = vmul.f32 %v2275, %v2324
      %v2528 = vmul.f32 %v2276, %v2329
      %v2529 = vmul.f32 %v2277, %v2334
      %v2530 = vmul.f32 %v2278, %v2339
      %v2531 = vmul.f32 %v2279, %v2344
      %v2532 = vmul.f32 %v2280, %v2349
      %v2533 = vmul.f32 %v2281, %v2354
      %v2534 = vmul.f32 %v2282, %v2359
      %v2535 = vmul.f32 %v2283, %v2364
      %v2536 = vmul.f32 %v2284, %v2369
      %v2537 = vmul.f32 %v2285, %v2374
      %v2538 = vmul.f32 %v2286, %v2379
      %v2539 = vmul.f32 %v2287, %v2384
      %v2540 = vmul.f32 %v2288, %v2389
      %v2541 = vmul.f32 %v2289, %v2394
      %v2542 = vmul.f32 %v2290, %v2399
      %v2543 = vmul.f32 %v2291, %v2404
      %v2544 = vmul.f32 %v2292, %v2409
      %v2545 = vmul.f32 %v2293, %v2414
      %v2546 = vmul.f32 %v2294, %v2419
      %v2547 = vmul.f32 %v2295, %v2424
      %v2548 = vmul.f32 %v2296, %v2429
      %v2549 = vmul.f32 %v2297, %v2434
      %v2550 = vmul.f32 %v2298, %v2439
      %v2551 = vmul.f32 %v2299, %v2444
      %v2552 = vmul.f32 %v2300, %v2449
      %v2553 = vmul.f32 %v2301, %v2454
      %v2554 = vmul.f32 %v2302, %v2459
      %v2555 = vmul.f32 %v2303, %v2464
      %v2556 = vmul.f32 %v2304, %v2469
      %v2557 = vmul.f32 %v2305, %v2474
      %v2558 = vmul.f32 %v2306, %v2479
      %v2559 = vmul.f32 %v2307, %v2484
      %v2560 = vmul.f32 %v2308, %v2489
      %v2561 = vmul.f32 %v2309, %v2494
      %v2562 = vmul.f32 %v2310, %v2499
      %v2563 = vmul.f32 %v2311, %v2504
      %v2564 = vmul.f32 %v2312, %v2509
      %v2565 = vmul.f32 %v2313, %v2514
      %v2566 = vmul.f32 %v2314, %v2519
      %v2567 = vmul.f32 %v2315, %v2524
      %vm2568 = vcmask 60416
      %2569 = vst.msk [vmem:[#allocation2] sm:$0xf] %vm2568, 0
      %2570 = vst.msk [vmem:[#allocation2 + $0x4] sm:$0xf] %vm2568, 0
      %2571 = vst.msk [vmem:[#allocation2 + $0x8] sm:$0xf] %vm2568, 0
      %2572 = vst.msk [vmem:[#allocation2 + $0xc] sm:$0xf] %vm2568, 0
      %2573 = vst.msk [vmem:[#allocation2 + $0xb8] sm:$0xf] %vm2568, 0
      %2574 = vst.msk [vmem:[#allocation2 + $0xbc] sm:$0xf] %vm2568, 0
      %2575 = vst.msk [vmem:[#allocation2 + $0xc0] sm:$0xf] %vm2568, 0
      %2576 = vst.msk [vmem:[#allocation2 + $0xc4] sm:$0xf] %vm2568, 0
      %v2577 = vpack.c.bf16 %v2527, %v2526
      %v2578 = vpack.c.bf16 %v2529, %v2528
      %v2579 = vpack.c.bf16 %v2531, %v2530
      %v2580 = vpack.c.bf16 %v2533, %v2532
      %v2581 = vpack.c.bf16 %v2535, %v2534
      %v2582 = vpack.c.bf16 %v2537, %v2536
      %v2583 = vpack.c.bf16 %v2539, %v2538
      %v2584 = vpack.c.bf16 %v2541, %v2540
      %v2585 = vpack.c.bf16 %v2543, %v2542
      %v2586 = vpack.c.bf16 %v2545, %v2544
      %v2587 = vpack.c.bf16 %v2547, %v2546
      %v2588 = vpack.c.bf16 %v2549, %v2548
      %v2589 = vpack.c.bf16 %v2551, %v2550
      %v2590 = vpack.c.bf16 %v2553, %v2552
      %v2591 = vpack.c.bf16 %v2555, %v2554
      %v2592 = vpack.c.bf16 %v2557, %v2556
      %v2593 = vpack.c.bf16 %v2559, %v2558
      %v2594 = vpack.c.bf16 %v2561, %v2560
      %v2595 = vpack.c.bf16 %v2563, %v2562
      %v2596 = vpack.c.bf16 %v2565, %v2564
      %v2597 = vpack.c.bf16 %v2567, %v2566
      %v2619 = vunpack.c.l.b16 %v2577
      %v2620 = vunpack.c.h.b16 %v2577
      %v2621 = vunpack.c.l.b16 %v2578
      %v2622 = vunpack.c.h.b16 %v2578
      %v2623 = vunpack.c.l.b16 %v2579
      %v2624 = vunpack.c.h.b16 %v2579
      %v2625 = vunpack.c.l.b16 %v2580
      %v2626 = vunpack.c.h.b16 %v2580
      %v2627 = vunpack.c.l.b16 %v2581
      %v2628 = vunpack.c.h.b16 %v2581
      %v2629 = vunpack.c.l.b16 %v2582
      %v2630 = vunpack.c.h.b16 %v2582
      %v2631 = vunpack.c.l.b16 %v2583
      %v2632 = vunpack.c.h.b16 %v2583
      %v2633 = vunpack.c.l.b16 %v2584
      %v2634 = vunpack.c.h.b16 %v2584
      %v2635 = vunpack.c.l.b16 %v2585
      %v2636 = vunpack.c.h.b16 %v2585
      %v2637 = vunpack.c.l.b16 %v2586
      %v2638 = vunpack.c.h.b16 %v2586
      %v2639 = vunpack.c.l.b16 %v2587
      %v2640 = vunpack.c.h.b16 %v2587
      %v2641 = vunpack.c.l.b16 %v2588
      %v2642 = vunpack.c.h.b16 %v2588
      %v2643 = vunpack.c.l.b16 %v2589
      %v2644 = vunpack.c.h.b16 %v2589
      %v2645 = vunpack.c.l.b16 %v2590
      %v2646 = vunpack.c.h.b16 %v2590
      %v2647 = vunpack.c.l.b16 %v2591
      %v2648 = vunpack.c.h.b16 %v2591
      %v2649 = vunpack.c.l.b16 %v2592
      %v2650 = vunpack.c.h.b16 %v2592
      %v2651 = vunpack.c.l.b16 %v2593
      %v2652 = vunpack.c.h.b16 %v2593
      %v2653 = vunpack.c.l.b16 %v2594
      %v2654 = vunpack.c.h.b16 %v2594
      %v2655 = vunpack.c.l.b16 %v2595
      %v2656 = vunpack.c.h.b16 %v2595
      %v2657 = vunpack.c.l.b16 %v2596
      %v2658 = vunpack.c.h.b16 %v2596
      %v2659 = vunpack.c.l.b16 %v2597
      %v2660 = vunpack.c.h.b16 %v2597
      %v2661 = vpack.c.b16 %v2619, %v2619
      %v2662 = vpack.c.b16 %v2620, %v2620
      %v2663 = vpack.c.b16 %v2621, %v2621
      %v2664 = vpack.c.b16 %v2622, %v2622
      %v2665 = vpack.c.b16 %v2623, %v2623
      %v2666 = vpack.c.b16 %v2624, %v2624
      %v2667 = vpack.c.b16 %v2625, %v2625
      %v2668 = vpack.c.b16 %v2626, %v2626
      %v2669 = vpack.c.b16 %v2627, %v2627
      %v2670 = vpack.c.b16 %v2628, %v2628
      %v2671 = vpack.c.b16 %v2629, %v2629
      %v2672 = vpack.c.b16 %v2630, %v2630
      %v2673 = vpack.c.b16 %v2631, %v2631
      %v2674 = vpack.c.b16 %v2632, %v2632
      %v2675 = vpack.c.b16 %v2633, %v2633
      %v2676 = vpack.c.b16 %v2634, %v2634
      %v2677 = vpack.c.b16 %v2635, %v2635
      %v2678 = vpack.c.b16 %v2636, %v2636
      %v2679 = vpack.c.b16 %v2637, %v2637
      %v2680 = vpack.c.b16 %v2638, %v2638
      %v2681 = vpack.c.b16 %v2639, %v2639
      %v2682 = vpack.c.b16 %v2640, %v2640
      %v2683 = vpack.c.b16 %v2641, %v2641
      %v2684 = vpack.c.b16 %v2642, %v2642
      %v2685 = vpack.c.b16 %v2643, %v2643
      %v2686 = vpack.c.b16 %v2644, %v2644
      %v2687 = vpack.c.b16 %v2645, %v2645
      %v2688 = vpack.c.b16 %v2646, %v2646
      %v2689 = vpack.c.b16 %v2647, %v2647
      %v2690 = vpack.c.b16 %v2648, %v2648
      %v2691 = vpack.c.b16 %v2649, %v2649
      %v2692 = vpack.c.b16 %v2650, %v2650
      %v2693 = vpack.c.b16 %v2651, %v2651
      %v2694 = vpack.c.b16 %v2652, %v2652
      %v2695 = vpack.c.b16 %v2653, %v2653
      %v2696 = vpack.c.b16 %v2654, %v2654
      %v2697 = vpack.c.b16 %v2655, %v2655
      %v2698 = vpack.c.b16 %v2656, %v2656
      %v2699 = vpack.c.b16 %v2657, %v2657
      %v2700 = vpack.c.b16 %v2658, %v2658
      %v2701 = vpack.c.b16 %v2659, %v2659
      %v2702 = vpack.c.b16 %v2660, %v2660
      %2745 = vst.msk [vmem:[#allocation2 + $0x10] sm:$0xf] %vm2568, %v2661
      %2746 = vst.msk [vmem:[#allocation2 + $0x14] sm:$0xf] %vm2568, %v2662
      %2747 = vst.msk [vmem:[#allocation2 + $0x18] sm:$0xf] %vm2568, %v2663
      %2748 = vst.msk [vmem:[#allocation2 + $0x1c] sm:$0xf] %vm2568, %v2664
      %2749 = vst.msk [vmem:[#allocation2 + $0x20] sm:$0xf] %vm2568, %v2665
      %2750 = vst.msk [vmem:[#allocation2 + $0x24] sm:$0xf] %vm2568, %v2666
      %2751 = vst.msk [vmem:[#allocation2 + $0x28] sm:$0xf] %vm2568, %v2667
      %2752 = vst.msk [vmem:[#allocation2 + $0x2c] sm:$0xf] %vm2568, %v2668
      %2753 = vst.msk [vmem:[#allocation2 + $0x30] sm:$0xf] %vm2568, %v2669
      %2754 = vst.msk [vmem:[#allocation2 + $0x34] sm:$0xf] %vm2568, %v2670
      %2755 = vst.msk [vmem:[#allocation2 + $0x38] sm:$0xf] %vm2568, %v2671
      %2756 = vst.msk [vmem:[#allocation2 + $0x3c] sm:$0xf] %vm2568, %v2672
      %2757 = vst.msk [vmem:[#allocation2 + $0x40] sm:$0xf] %vm2568, %v2673
      %2758 = vst.msk [vmem:[#allocation2 + $0x44] sm:$0xf] %vm2568, %v2674
      %2759 = vst.msk [vmem:[#allocation2 + $0x48] sm:$0xf] %vm2568, %v2675
      %2760 = vst.msk [vmem:[#allocation2 + $0x4c] sm:$0xf] %vm2568, %v2676
      %2761 = vst.msk [vmem:[#allocation2 + $0x50] sm:$0xf] %vm2568, %v2677
      %2762 = vst.msk [vmem:[#allocation2 + $0x54] sm:$0xf] %vm2568, %v2678
      %2763 = vst.msk [vmem:[#allocation2 + $0x58] sm:$0xf] %vm2568, %v2679
      %2764 = vst.msk [vmem:[#allocation2 + $0x5c] sm:$0xf] %vm2568, %v2680
      %2765 = vst.msk [vmem:[#allocation2 + $0x60] sm:$0xf] %vm2568, %v2681
      %2766 = vst.msk [vmem:[#allocation2 + $0x64] sm:$0xf] %vm2568, %v2682
      %2767 = vst.msk [vmem:[#allocation2 + $0x68] sm:$0xf] %vm2568, %v2683
      %2768 = vst.msk [vmem:[#allocation2 + $0x6c] sm:$0xf] %vm2568, %v2684
      %2769 = vst.msk [vmem:[#allocation2 + $0x70] sm:$0xf] %vm2568, %v2685
      %2770 = vst.msk [vmem:[#allocation2 + $0x74] sm:$0xf] %vm2568, %v2686
      %2771 = vst.msk [vmem:[#allocation2 + $0x78] sm:$0xf] %vm2568, %v2687
      %2772 = vst.msk [vmem:[#allocation2 + $0x7c] sm:$0xf] %vm2568, %v2688
      %2773 = vst.msk [vmem:[#allocation2 + $0x80] sm:$0xf] %vm2568, %v2689
      %2774 = vst.msk [vmem:[#allocation2 + $0x84] sm:$0xf] %vm2568, %v2690
      %2775 = vst.msk [vmem:[#allocation2 + $0x88] sm:$0xf] %vm2568, %v2691
      %2776 = vst.msk [vmem:[#allocation2 + $0x8c] sm:$0xf] %vm2568, %v2692
      %2777 = vst.msk [vmem:[#allocation2 + $0x90] sm:$0xf] %vm2568, %v2693
      %2778 = vst.msk [vmem:[#allocation2 + $0x94] sm:$0xf] %vm2568, %v2694
      %2779 = vst.msk [vmem:[#allocation2 + $0x98] sm:$0xf] %vm2568, %v2695
      %2780 = vst.msk [vmem:[#allocation2 + $0x9c] sm:$0xf] %vm2568, %v2696
      %2781 = vst.msk [vmem:[#allocation2 + $0xa0] sm:$0xf] %vm2568, %v2697
      %2782 = vst.msk [vmem:[#allocation2 + $0xa4] sm:$0xf] %vm2568, %v2698
      %2783 = vst.msk [vmem:[#allocation2 + $0xa8] sm:$0xf] %vm2568, %v2699
      %2784 = vst.msk [vmem:[#allocation2 + $0xac] sm:$0xf] %vm2568, %v2700
      %2785 = vst.msk [vmem:[#allocation2 + $0xb0] sm:$0xf] %vm2568, %v2701
      %2786 = vst.msk [vmem:[#allocation2 + $0xb4] sm:$0xf] %vm2568, %v2702
      %v2787 = vld [vmem:[#allocation2 + $0x4] sm:$0xf]
      %v2788 = vld [vmem:[#allocation2 + $0x8] sm:$0xf]
      %v2789 = vld [vmem:[#allocation2 + $0xc] sm:$0xf]
      %v2790 = vld [vmem:[#allocation2 + $0x10] sm:$0xf]
      %v2791 = vld [vmem:[#allocation2 + $0x14] sm:$0xf]
      %v2792 = vld [vmem:[#allocation2 + $0x18] sm:$0xf]
      %v2793 = vld [vmem:[#allocation2 + $0x1c] sm:$0xf]
      %v2794 = vld [vmem:[#allocation2 + $0x20] sm:$0xf]
      %v2795 = vld [vmem:[#allocation2 + $0x24] sm:$0xf]
      %v2796 = vld [vmem:[#allocation2 + $0x28] sm:$0xf]
      %v2797 = vld [vmem:[#allocation2 + $0x2c] sm:$0xf]
      %v2798 = vld [vmem:[#allocation2 + $0x30] sm:$0xf]
      %v2799 = vld [vmem:[#allocation2 + $0x34] sm:$0xf]
      %v2800 = vld [vmem:[#allocation2 + $0x38] sm:$0xf]
      %v2801 = vld [vmem:[#allocation2 + $0x3c] sm:$0xf]
      %v2802 = vld [vmem:[#allocation2 + $0x40] sm:$0xf]
      %v2803 = vld [vmem:[#allocation2 + $0x44] sm:$0xf]
      %v2804 = vld [vmem:[#allocation2 + $0x48] sm:$0xf]
      %v2805 = vld [vmem:[#allocation2 + $0x4c] sm:$0xf]
      %v2806 = vld [vmem:[#allocation2 + $0x50] sm:$0xf]
      %v2807 = vld [vmem:[#allocation2 + $0x54] sm:$0xf]
      %v2808 = vld [vmem:[#allocation2 + $0x58] sm:$0xf]
      %v2809 = vld [vmem:[#allocation2 + $0x5c] sm:$0xf]
      %v2810 = vld [vmem:[#allocation2 + $0x60] sm:$0xf]
      %v2811 = vld [vmem:[#allocation2 + $0x64] sm:$0xf]
      %v2812 = vld [vmem:[#allocation2 + $0x68] sm:$0xf]
      %v2813 = vld [vmem:[#allocation2 + $0x6c] sm:$0xf]
      %v2814 = vld [vmem:[#allocation2 + $0x70] sm:$0xf]
      %v2815 = vld [vmem:[#allocation2 + $0x74] sm:$0xf]
      %v2816 = vld [vmem:[#allocation2 + $0x78] sm:$0xf]
      %v2817 = vld [vmem:[#allocation2 + $0x7c] sm:$0xf]
      %v2818 = vld [vmem:[#allocation2 + $0x80] sm:$0xf]
      %v2819 = vld [vmem:[#allocation2 + $0x84] sm:$0xf]
      %v2820 = vld [vmem:[#allocation2 + $0x88] sm:$0xf]
      %v2821 = vld [vmem:[#allocation2 + $0x8c] sm:$0xf]
      %v2822 = vld [vmem:[#allocation2 + $0x90] sm:$0xf]
      %v2823 = vld [vmem:[#allocation2 + $0x94] sm:$0xf]
      %v2824 = vld [vmem:[#allocation2 + $0x98] sm:$0xf]
      %v2825 = vld [vmem:[#allocation2 + $0x9c] sm:$0xf]
      %v2826 = vld [vmem:[#allocation2 + $0xa0] sm:$0xf]
      %v2827 = vld [vmem:[#allocation2 + $0xa4] sm:$0xf]
      %v2828 = vld [vmem:[#allocation2 + $0xa8] sm:$0xf]
      %v2829 = vld [vmem:[#allocation2 + $0xac] sm:$0xf]
      %v2830 = vld [vmem:[#allocation2 + $0xb0] sm:$0xf]
      %v2831 = vld [vmem:[#allocation2 + $0xb4] sm:$0xf]
      %v2832 = vld [vmem:[#allocation2 + $0xb8] sm:$0xf]
      %v2833 = vld [vmem:[#allocation2 + $0xbc] sm:$0xf]
      %v2834 = vld [vmem:[#allocation2 + $0xc0] sm:$0xf]
      %v2878 = vunpack.c.l.b16 %v2787
      %v2879 = vunpack.c.l.b16 %v2788
      %v2880 = vunpack.c.l.b16 %v2789
      %v2881 = vunpack.c.l.b16 %v2790
      %v2882 = vunpack.c.l.b16 %v2791
      %v2883 = vunpack.c.l.b16 %v2792
      %v2884 = vunpack.c.l.b16 %v2793
      %v2885 = vunpack.c.l.b16 %v2794
      %v2886 = vunpack.c.l.b16 %v2795
      %v2887 = vunpack.c.l.b16 %v2796
      %v2888 = vunpack.c.l.b16 %v2797
      %v2889 = vunpack.c.l.b16 %v2798
      %v2890 = vunpack.c.l.b16 %v2799
      %v2891 = vunpack.c.l.b16 %v2800
      %v2892 = vunpack.c.l.b16 %v2801
      %v2893 = vunpack.c.l.b16 %v2802
      %v2894 = vunpack.c.l.b16 %v2803
      %v2895 = vunpack.c.l.b16 %v2804
      %v2896 = vunpack.c.l.b16 %v2805
      %v2897 = vunpack.c.l.b16 %v2806
      %v2898 = vunpack.c.l.b16 %v2807
      %v2899 = vunpack.c.l.b16 %v2808
      %v2900 = vunpack.c.l.b16 %v2809
      %v2901 = vunpack.c.l.b16 %v2810
      %v2902 = vunpack.c.l.b16 %v2811
      %v2903 = vunpack.c.l.b16 %v2812
      %v2904 = vunpack.c.l.b16 %v2813
      %v2905 = vunpack.c.l.b16 %v2814
      %v2906 = vunpack.c.l.b16 %v2815
      %v2907 = vunpack.c.l.b16 %v2816
      %v2908 = vunpack.c.l.b16 %v2817
      %v2909 = vunpack.c.l.b16 %v2818
      %v2910 = vunpack.c.l.b16 %v2819
      %v2911 = vunpack.c.l.b16 %v2820
      %v2912 = vunpack.c.l.b16 %v2821
      %v2913 = vunpack.c.l.b16 %v2822
      %v2914 = vunpack.c.l.b16 %v2823
      %v2915 = vunpack.c.l.b16 %v2824
      %v2916 = vunpack.c.l.b16 %v2825
      %v2917 = vunpack.c.l.b16 %v2826
      %v2918 = vunpack.c.l.b16 %v2827
      %v2919 = vunpack.c.l.b16 %v2828
      %v2920 = vunpack.c.l.b16 %v2829
      %v2921 = vpack.c.b16 %v2879, %v2878
      %v2922 = vpack.c.b16 %v2881, %v2880
      %v2923 = vpack.c.b16 %v2883, %v2882
      %v2924 = vpack.c.b16 %v2885, %v2884
      %v2925 = vpack.c.b16 %v2887, %v2886
      %v2926 = vpack.c.b16 %v2889, %v2888
      %v2927 = vpack.c.b16 %v2891, %v2890
      %v2928 = vpack.c.b16 %v2893, %v2892
      %v2929 = vpack.c.b16 %v2895, %v2894
      %v2930 = vpack.c.b16 %v2897, %v2896
      %v2931 = vpack.c.b16 %v2899, %v2898
      %v2932 = vpack.c.b16 %v2901, %v2900
      %v2933 = vpack.c.b16 %v2903, %v2902
      %v2934 = vpack.c.b16 %v2905, %v2904
      %v2935 = vpack.c.b16 %v2907, %v2906
      %v2936 = vpack.c.b16 %v2909, %v2908
      %v2937 = vpack.c.b16 %v2911, %v2910
      %v2938 = vpack.c.b16 %v2913, %v2912
      %v2939 = vpack.c.b16 %v2915, %v2914
      %v2940 = vpack.c.b16 %v2917, %v2916
      %v2941 = vpack.c.b16 %v2919, %v2918
      %v2942 = vpack.c.b16 %v2920, %v2920
      %v2944 = vshrl.u32 %v2921, 16
      %v2946 = vshll.u32 %v2921, 16
      %v2948 = vrot.slane %v2946, 1
      %v2949 = vor.u32 %v2944, %v2948
      %v2951 = vshll.u32 %v2922, 16
      %v2953 = vrot.slane %v2951, 1
      %v2954 = vsel %vm451, %v2949, %v2953
      %v2955 = vshrl.u32 %v2922, 16
      %v2957 = vor.u32 %v2955, %v2953
      %v2959 = vshll.u32 %v2923, 16
      %v2961 = vrot.slane %v2959, 1
      %v2962 = vsel %vm451, %v2957, %v2961
      %v2963 = vshrl.u32 %v2923, 16
      %v2965 = vor.u32 %v2963, %v2961
      %v2967 = vshll.u32 %v2924, 16
      %v2969 = vrot.slane %v2967, 1
      %v2970 = vsel %vm451, %v2965, %v2969
      %v2971 = vshrl.u32 %v2924, 16
      %v2973 = vor.u32 %v2971, %v2969
      %v2975 = vshll.u32 %v2925, 16
      %v2977 = vrot.slane %v2975, 1
      %v2978 = vsel %vm451, %v2973, %v2977
      %v2979 = vshrl.u32 %v2925, 16
      %v2981 = vor.u32 %v2979, %v2977
      %v2983 = vshll.u32 %v2926, 16
      %v2985 = vrot.slane %v2983, 1
      %v2986 = vsel %vm451, %v2981, %v2985
      %v2987 = vshrl.u32 %v2926, 16
      %v2989 = vor.u32 %v2987, %v2985
      %v2991 = vshll.u32 %v2927, 16
      %v2993 = vrot.slane %v2991, 1
      %v2994 = vsel %vm451, %v2989, %v2993
      %v2995 = vshrl.u32 %v2927, 16
      %v2997 = vor.u32 %v2995, %v2993
      %v2999 = vshll.u32 %v2928, 16
      %v3001 = vrot.slane %v2999, 1
      %v3002 = vsel %vm451, %v2997, %v3001
      %v3003 = vshrl.u32 %v2928, 16
      %v3005 = vor.u32 %v3003, %v3001
      %v3007 = vshll.u32 %v2929, 16
      %v3009 = vrot.slane %v3007, 1
      %v3010 = vsel %vm451, %v3005, %v3009
      %v3011 = vshrl.u32 %v2929, 16
      %v3013 = vor.u32 %v3011, %v3009
      %v3015 = vshll.u32 %v2930, 16
      %v3017 = vrot.slane %v3015, 1
      %v3018 = vsel %vm451, %v3013, %v3017
      %v3019 = vshrl.u32 %v2930, 16
      %v3021 = vor.u32 %v3019, %v3017
      %v3023 = vshll.u32 %v2931, 16
      %v3025 = vrot.slane %v3023, 1
      %v3026 = vsel %vm451, %v3021, %v3025
      %v3027 = vshrl.u32 %v2931, 16
      %v3029 = vor.u32 %v3027, %v3025
      %v3031 = vshll.u32 %v2932, 16
      %v3033 = vrot.slane %v3031, 1
      %v3034 = vsel %vm451, %v3029, %v3033
      %v3035 = vshrl.u32 %v2932, 16
      %v3037 = vor.u32 %v3035, %v3033
      %v3039 = vshll.u32 %v2933, 16
      %v3041 = vrot.slane %v3039, 1
      %v3042 = vsel %vm451, %v3037, %v3041
      %v3043 = vshrl.u32 %v2933, 16
      %v3045 = vor.u32 %v3043, %v3041
      %v3047 = vshll.u32 %v2934, 16
      %v3049 = vrot.slane %v3047, 1
      %v3050 = vsel %vm451, %v3045, %v3049
      %v3051 = vshrl.u32 %v2934, 16
      %v3053 = vor.u32 %v3051, %v3049
      %v3055 = vshll.u32 %v2935, 16
      %v3057 = vrot.slane %v3055, 1
      %v3058 = vsel %vm451, %v3053, %v3057
      %v3059 = vshrl.u32 %v2935, 16
      %v3061 = vor.u32 %v3059, %v3057
      %v3063 = vshll.u32 %v2936, 16
      %v3065 = vrot.slane %v3063, 1
      %v3066 = vsel %vm451, %v3061, %v3065
      %v3067 = vshrl.u32 %v2936, 16
      %v3069 = vor.u32 %v3067, %v3065
      %v3071 = vshll.u32 %v2937, 16
      %v3073 = vrot.slane %v3071, 1
      %v3074 = vsel %vm451, %v3069, %v3073
      %v3075 = vshrl.u32 %v2937, 16
      %v3077 = vor.u32 %v3075, %v3073
      %v3079 = vshll.u32 %v2938, 16
      %v3081 = vrot.slane %v3079, 1
      %v3082 = vsel %vm451, %v3077, %v3081
      %v3083 = vshrl.u32 %v2938, 16
      %v3085 = vor.u32 %v3083, %v3081
      %v3087 = vshll.u32 %v2939, 16
      %v3089 = vrot.slane %v3087, 1
      %v3090 = vsel %vm451, %v3085, %v3089
      %v3091 = vshrl.u32 %v2939, 16
      %v3093 = vor.u32 %v3091, %v3089
      %v3095 = vshll.u32 %v2940, 16
      %v3097 = vrot.slane %v3095, 1
      %v3098 = vsel %vm451, %v3093, %v3097
      %v3099 = vshrl.u32 %v2940, 16
      %v3101 = vor.u32 %v3099, %v3097
      %v3103 = vshll.u32 %v2941, 16
      %v3105 = vrot.slane %v3103, 1
      %v3106 = vsel %vm451, %v3101, %v3105
      %v3107 = vshrl.u32 %v2941, 16
      %v3109 = vor.u32 %v3107, %v3105
      %v3111 = vshll.u32 %v2942, 16
      %v3113 = vrot.slane %v3111, 1
      %v3114 = vsel %vm451, %v3109, %v3113
      %v3115 = vshrl.u32 %v2942, 16
      %v3117 = vor.u32 %v3115, %v3113
      %3118 = vrot.lane.b32.xlu0 %v2954, 8
      %v3119 = vpop.permute.xlu0 %3118
      %3120 = vrot.lane.b32.xlu0 %v2962, 8
      %v3121 = vpop.permute.xlu0 %3120
      %3122 = vrot.lane.b32.xlu0 %v2970, 8
      %v3123 = vpop.permute.xlu0 %3122
      %3124 = vrot.lane.b32.xlu0 %v2978, 8
      %v3125 = vpop.permute.xlu0 %3124
      %3126 = vrot.lane.b32.xlu0 %v2986, 8
      %v3127 = vpop.permute.xlu0 %3126
      %3128 = vrot.lane.b32.xlu0 %v2994, 8
      %v3129 = vpop.permute.xlu0 %3128
      %3130 = vrot.lane.b32.xlu0 %v3002, 8
      %v3131 = vpop.permute.xlu0 %3130
      %3132 = vrot.lane.b32.xlu0 %v3010, 8
      %v3133 = vpop.permute.xlu0 %3132
      %3134 = vrot.lane.b32.xlu0 %v3018, 8
      %v3135 = vpop.permute.xlu0 %3134
      %3136 = vrot.lane.b32.xlu0 %v3026, 8
      %v3137 = vpop.permute.xlu0 %3136
      %3138 = vrot.lane.b32.xlu0 %v3034, 8
      %v3139 = vpop.permute.xlu0 %3138
      %3140 = vrot.lane.b32.xlu0 %v3042, 8
      %v3141 = vpop.permute.xlu0 %3140
      %3142 = vrot.lane.b32.xlu0 %v3050, 8
      %v3143 = vpop.permute.xlu0 %3142
      %3144 = vrot.lane.b32.xlu0 %v3058, 8
      %v3145 = vpop.permute.xlu0 %3144
      %3146 = vrot.lane.b32.xlu0 %v3066, 8
      %v3147 = vpop.permute.xlu0 %3146
      %3148 = vrot.lane.b32.xlu0 %v3074, 8
      %v3149 = vpop.permute.xlu0 %3148
      %3150 = vrot.lane.b32.xlu0 %v3082, 8
      %v3151 = vpop.permute.xlu0 %3150
      %3152 = vrot.lane.b32.xlu0 %v3090, 8
      %v3153 = vpop.permute.xlu0 %3152
      %3154 = vrot.lane.b32.xlu0 %v3098, 8
      %v3155 = vpop.permute.xlu0 %3154
      %3156 = vrot.lane.b32.xlu0 %v3106, 8
      %v3157 = vpop.permute.xlu0 %3156
      %3158 = vrot.lane.b32.xlu0 %v3114, 8
      %v3159 = vpop.permute.xlu0 %3158
      %3160 = vrot.lane.b32.xlu0 %v3117, 8
      %v3161 = vpop.permute.xlu0 %3160
      %v3162 = vrot.slane %v2921, 1
      %v3163 = vrot.slane %v2922, 1
      %v3164 = vsel %vm671, %v3162, %v3163
      %v3165 = vrot.slane %v2923, 1
      %v3166 = vsel %vm671, %v3163, %v3165
      %v3167 = vrot.slane %v2924, 1
      %v3168 = vsel %vm671, %v3165, %v3167
      %v3169 = vrot.slane %v2925, 1
      %v3170 = vsel %vm671, %v3167, %v3169
      %v3171 = vrot.slane %v2926, 1
      %v3172 = vsel %vm671, %v3169, %v3171
      %v3173 = vrot.slane %v2927, 1
      %v3174 = vsel %vm671, %v3171, %v3173
      %v3175 = vrot.slane %v2928, 1
      %v3176 = vsel %vm671, %v3173, %v3175
      %v3177 = vrot.slane %v2929, 1
      %v3178 = vsel %vm671, %v3175, %v3177
      %v3179 = vrot.slane %v2930, 1
      %v3180 = vsel %vm671, %v3177, %v3179
      %v3181 = vrot.slane %v2931, 1
      %v3182 = vsel %vm671, %v3179, %v3181
      %v3183 = vrot.slane %v2932, 1
      %v3184 = vsel %vm671, %v3181, %v3183
      %v3185 = vrot.slane %v2933, 1
      %v3186 = vsel %vm671, %v3183, %v3185
      %v3187 = vrot.slane %v2934, 1
      %v3188 = vsel %vm671, %v3185, %v3187
      %v3189 = vrot.slane %v2935, 1
      %v3190 = vsel %vm671, %v3187, %v3189
      %v3191 = vrot.slane %v2936, 1
      %v3192 = vsel %vm671, %v3189, %v3191
      %v3193 = vrot.slane %v2937, 1
      %v3194 = vsel %vm671, %v3191, %v3193
      %v3195 = vrot.slane %v2938, 1
      %v3196 = vsel %vm671, %v3193, %v3195
      %v3197 = vrot.slane %v2939, 1
      %v3198 = vsel %vm671, %v3195, %v3197
      %v3199 = vrot.slane %v2940, 1
      %v3200 = vsel %vm671, %v3197, %v3199
      %v3201 = vrot.slane %v2941, 1
      %v3202 = vsel %vm671, %v3199, %v3201
      %v3203 = vrot.slane %v2942, 1
      %v3204 = vsel %vm671, %v3201, %v3203
      %3205 = vrot.lane.b32.xlu0 %v3164, 16
      %v3206 = vpop.permute.xlu0 %3205
      %3207 = vrot.lane.b32.xlu0 %v3166, 16
      %v3208 = vpop.permute.xlu0 %3207
      %3209 = vrot.lane.b32.xlu0 %v3168, 16
      %v3210 = vpop.permute.xlu0 %3209
      %3211 = vrot.lane.b32.xlu0 %v3170, 16
      %v3212 = vpop.permute.xlu0 %3211
      %3213 = vrot.lane.b32.xlu0 %v3172, 16
      %v3214 = vpop.permute.xlu0 %3213
      %3215 = vrot.lane.b32.xlu0 %v3174, 16
      %v3216 = vpop.permute.xlu0 %3215
      %3217 = vrot.lane.b32.xlu0 %v3176, 16
      %v3218 = vpop.permute.xlu0 %3217
      %3219 = vrot.lane.b32.xlu0 %v3178, 16
      %v3220 = vpop.permute.xlu0 %3219
      %3221 = vrot.lane.b32.xlu0 %v3180, 16
      %v3222 = vpop.permute.xlu0 %3221
      %3223 = vrot.lane.b32.xlu0 %v3182, 16
      %v3224 = vpop.permute.xlu0 %3223
      %3225 = vrot.lane.b32.xlu0 %v3184, 16
      %v3226 = vpop.permute.xlu0 %3225
      %3227 = vrot.lane.b32.xlu0 %v3186, 16
      %v3228 = vpop.permute.xlu0 %3227
      %3229 = vrot.lane.b32.xlu0 %v3188, 16
      %v3230 = vpop.permute.xlu0 %3229
      %3231 = vrot.lane.b32.xlu0 %v3190, 16
      %v3232 = vpop.permute.xlu0 %3231
      %3233 = vrot.lane.b32.xlu0 %v3192, 16
      %v3234 = vpop.permute.xlu0 %3233
      %3235 = vrot.lane.b32.xlu0 %v3194, 16
      %v3236 = vpop.permute.xlu0 %3235
      %3237 = vrot.lane.b32.xlu0 %v3196, 16
      %v3238 = vpop.permute.xlu0 %3237
      %3239 = vrot.lane.b32.xlu0 %v3198, 16
      %v3240 = vpop.permute.xlu0 %3239
      %3241 = vrot.lane.b32.xlu0 %v3200, 16
      %v3242 = vpop.permute.xlu0 %3241
      %3243 = vrot.lane.b32.xlu0 %v3202, 16
      %v3244 = vpop.permute.xlu0 %3243
      %3245 = vrot.lane.b32.xlu0 %v3204, 16
      %v3246 = vpop.permute.xlu0 %3245
      %3247 = vrot.lane.b32.xlu0 %v3203, 16
      %v3248 = vpop.permute.xlu0 %3247
      %v3251 = vunpack.c.l.b16 %v2830
      %v3252 = vunpack.c.l.b16 %v2831
      %v3253 = vpack.c.b16 %v3251, %v2920
      %v3254 = vpack.c.b16 %v3252, %v3252
      %v3255 = vrot.slane %v3253, 1
      %v3256 = vsel %vm671, %v3201, %v3255
      %v3257 = vrot.slane %v3254, 1
      %v3258 = vsel %vm671, %v3255, %v3257
      %3259 = vrot.lane.b32.xlu0 %v3166, 24
      %v3260 = vpop.permute.xlu0 %3259
      %3261 = vrot.lane.b32.xlu0 %v3168, 24
      %v3262 = vpop.permute.xlu0 %3261
      %3263 = vrot.lane.b32.xlu0 %v3170, 24
      %v3264 = vpop.permute.xlu0 %3263
      %3265 = vrot.lane.b32.xlu0 %v3172, 24
      %v3266 = vpop.permute.xlu0 %3265
      %3267 = vrot.lane.b32.xlu0 %v3174, 24
      %v3268 = vpop.permute.xlu0 %3267
      %3269 = vrot.lane.b32.xlu0 %v3176, 24
      %v3270 = vpop.permute.xlu0 %3269
      %3271 = vrot.lane.b32.xlu0 %v3178, 24
      %v3272 = vpop.permute.xlu0 %3271
      %3273 = vrot.lane.b32.xlu0 %v3180, 24
      %v3274 = vpop.permute.xlu0 %3273
      %3275 = vrot.lane.b32.xlu0 %v3182, 24
      %v3276 = vpop.permute.xlu0 %3275
      %3277 = vrot.lane.b32.xlu0 %v3184, 24
      %v3278 = vpop.permute.xlu0 %3277
      %3279 = vrot.lane.b32.xlu0 %v3186, 24
      %v3280 = vpop.permute.xlu0 %3279
      %3281 = vrot.lane.b32.xlu0 %v3188, 24
      %v3282 = vpop.permute.xlu0 %3281
      %3283 = vrot.lane.b32.xlu0 %v3190, 24
      %v3284 = vpop.permute.xlu0 %3283
      %3285 = vrot.lane.b32.xlu0 %v3192, 24
      %v3286 = vpop.permute.xlu0 %3285
      %3287 = vrot.lane.b32.xlu0 %v3194, 24
      %v3288 = vpop.permute.xlu0 %3287
      %3289 = vrot.lane.b32.xlu0 %v3196, 24
      %v3290 = vpop.permute.xlu0 %3289
      %3291 = vrot.lane.b32.xlu0 %v3198, 24
      %v3292 = vpop.permute.xlu0 %3291
      %3293 = vrot.lane.b32.xlu0 %v3200, 24
      %v3294 = vpop.permute.xlu0 %3293
      %3295 = vrot.lane.b32.xlu0 %v3202, 24
      %v3296 = vpop.permute.xlu0 %3295
      %3297 = vrot.lane.b32.xlu0 %v3256, 24
      %v3298 = vpop.permute.xlu0 %3297
      %3299 = vrot.lane.b32.xlu0 %v3258, 24
      %v3300 = vpop.permute.xlu0 %3299
      %3301 = vrot.lane.b32.xlu0 %v3257, 24
      %v3302 = vpop.permute.xlu0 %3301
      %v3303 = vpack.c.b16 %v2882, %v2881
      %v3304 = vpack.c.b16 %v2884, %v2883
      %v3305 = vpack.c.b16 %v2886, %v2885
      %v3306 = vpack.c.b16 %v2888, %v2887
      %v3307 = vpack.c.b16 %v2890, %v2889
      %v3308 = vpack.c.b16 %v2892, %v2891
      %v3309 = vpack.c.b16 %v2894, %v2893
      %v3310 = vpack.c.b16 %v2896, %v2895
      %v3311 = vpack.c.b16 %v2898, %v2897
      %v3312 = vpack.c.b16 %v2900, %v2899
      %v3313 = vpack.c.b16 %v2902, %v2901
      %v3314 = vpack.c.b16 %v2904, %v2903
      %v3315 = vpack.c.b16 %v2906, %v2905
      %v3316 = vpack.c.b16 %v2908, %v2907
      %v3317 = vpack.c.b16 %v2910, %v2909
      %v3318 = vpack.c.b16 %v2912, %v2911
      %v3319 = vpack.c.b16 %v2914, %v2913
      %v3320 = vpack.c.b16 %v2916, %v2915
      %v3321 = vpack.c.b16 %v2918, %v2917
      %v3322 = vpack.c.b16 %v2920, %v2919
      %v3323 = vpack.c.b16 %v3252, %v3251
      %v3325 = vshrl.u32 %v3303, 16
      %v3327 = vrot.slane %v3325, 5
      %v3328 = vshll.u32 %v3303, 16
      %v3330 = vrot.slane %v3328, 6
      %v3331 = vor.u32 %v3327, %v3330
      %v3333 = vshrl.u32 %v3304, 16
      %v3335 = vrot.slane %v3333, 5
      %v3336 = vshll.u32 %v3304, 16
      %v3338 = vrot.slane %v3336, 6
      %v3339 = vor.u32 %v3335, %v3338
      %v3340 = vsel %vm834, %v3331, %v3339
      %v3342 = vshrl.u32 %v3305, 16
      %v3344 = vrot.slane %v3342, 5
      %v3345 = vshll.u32 %v3305, 16
      %v3347 = vrot.slane %v3345, 6
      %v3348 = vor.u32 %v3344, %v3347
      %v3349 = vsel %vm834, %v3339, %v3348
      %v3351 = vshrl.u32 %v3306, 16
      %v3353 = vrot.slane %v3351, 5
      %v3354 = vshll.u32 %v3306, 16
      %v3356 = vrot.slane %v3354, 6
      %v3357 = vor.u32 %v3353, %v3356
      %v3358 = vsel %vm834, %v3348, %v3357
      %v3360 = vshrl.u32 %v3307, 16
      %v3362 = vrot.slane %v3360, 5
      %v3363 = vshll.u32 %v3307, 16
      %v3365 = vrot.slane %v3363, 6
      %v3366 = vor.u32 %v3362, %v3365
      %v3367 = vsel %vm834, %v3357, %v3366
      %v3369 = vshrl.u32 %v3308, 16
      %v3371 = vrot.slane %v3369, 5
      %v3372 = vshll.u32 %v3308, 16
      %v3374 = vrot.slane %v3372, 6
      %v3375 = vor.u32 %v3371, %v3374
      %v3376 = vsel %vm834, %v3366, %v3375
      %v3378 = vshrl.u32 %v3309, 16
      %v3380 = vrot.slane %v3378, 5
      %v3381 = vshll.u32 %v3309, 16
      %v3383 = vrot.slane %v3381, 6
      %v3384 = vor.u32 %v3380, %v3383
      %v3385 = vsel %vm834, %v3375, %v3384
      %v3387 = vshrl.u32 %v3310, 16
      %v3389 = vrot.slane %v3387, 5
      %v3390 = vshll.u32 %v3310, 16
      %v3392 = vrot.slane %v3390, 6
      %v3393 = vor.u32 %v3389, %v3392
      %v3394 = vsel %vm834, %v3384, %v3393
      %v3396 = vshrl.u32 %v3311, 16
      %v3398 = vrot.slane %v3396, 5
      %v3399 = vshll.u32 %v3311, 16
      %v3401 = vrot.slane %v3399, 6
      %v3402 = vor.u32 %v3398, %v3401
      %v3403 = vsel %vm834, %v3393, %v3402
      %v3405 = vshrl.u32 %v3312, 16
      %v3407 = vrot.slane %v3405, 5
      %v3408 = vshll.u32 %v3312, 16
      %v3410 = vrot.slane %v3408, 6
      %v3411 = vor.u32 %v3407, %v3410
      %v3412 = vsel %vm834, %v3402, %v3411
      %v3414 = vshrl.u32 %v3313, 16
      %v3416 = vrot.slane %v3414, 5
      %v3417 = vshll.u32 %v3313, 16
      %v3419 = vrot.slane %v3417, 6
      %v3420 = vor.u32 %v3416, %v3419
      %v3421 = vsel %vm834, %v3411, %v3420
      %v3423 = vshrl.u32 %v3314, 16
      %v3425 = vrot.slane %v3423, 5
      %v3426 = vshll.u32 %v3314, 16
      %v3428 = vrot.slane %v3426, 6
      %v3429 = vor.u32 %v3425, %v3428
      %v3430 = vsel %vm834, %v3420, %v3429
      %v3432 = vshrl.u32 %v3315, 16
      %v3434 = vrot.slane %v3432, 5
      %v3435 = vshll.u32 %v3315, 16
      %v3437 = vrot.slane %v3435, 6
      %v3438 = vor.u32 %v3434, %v3437
      %v3439 = vsel %vm834, %v3429, %v3438
      %v3441 = vshrl.u32 %v3316, 16
      %v3443 = vrot.slane %v3441, 5
      %v3444 = vshll.u32 %v3316, 16
      %v3446 = vrot.slane %v3444, 6
      %v3447 = vor.u32 %v3443, %v3446
      %v3448 = vsel %vm834, %v3438, %v3447
      %v3450 = vshrl.u32 %v3317, 16
      %v3452 = vrot.slane %v3450, 5
      %v3453 = vshll.u32 %v3317, 16
      %v3455 = vrot.slane %v3453, 6
      %v3456 = vor.u32 %v3452, %v3455
      %v3457 = vsel %vm834, %v3447, %v3456
      %v3459 = vshrl.u32 %v3318, 16
      %v3461 = vrot.slane %v3459, 5
      %v3462 = vshll.u32 %v3318, 16
      %v3464 = vrot.slane %v3462, 6
      %v3465 = vor.u32 %v3461, %v3464
      %v3466 = vsel %vm834, %v3456, %v3465
      %v3468 = vshrl.u32 %v3319, 16
      %v3470 = vrot.slane %v3468, 5
      %v3471 = vshll.u32 %v3319, 16
      %v3473 = vrot.slane %v3471, 6
      %v3474 = vor.u32 %v3470, %v3473
      %v3475 = vsel %vm834, %v3465, %v3474
      %v3477 = vshrl.u32 %v3320, 16
      %v3479 = vrot.slane %v3477, 5
      %v3480 = vshll.u32 %v3320, 16
      %v3482 = vrot.slane %v3480, 6
      %v3483 = vor.u32 %v3479, %v3482
      %v3484 = vsel %vm834, %v3474, %v3483
      %v3486 = vshrl.u32 %v3321, 16
      %v3488 = vrot.slane %v3486, 5
      %v3489 = vshll.u32 %v3321, 16
      %v3491 = vrot.slane %v3489, 6
      %v3492 = vor.u32 %v3488, %v3491
      %v3493 = vsel %vm834, %v3483, %v3492
      %v3495 = vshrl.u32 %v3322, 16
      %v3497 = vrot.slane %v3495, 5
      %v3498 = vshll.u32 %v3322, 16
      %v3500 = vrot.slane %v3498, 6
      %v3501 = vor.u32 %v3497, %v3500
      %v3502 = vsel %vm834, %v3492, %v3501
      %v3504 = vshrl.u32 %v3323, 16
      %v3506 = vrot.slane %v3504, 5
      %v3507 = vshll.u32 %v3323, 16
      %v3509 = vrot.slane %v3507, 6
      %v3510 = vor.u32 %v3506, %v3509
      %v3511 = vsel %vm834, %v3501, %v3510
      %3512 = vrot.lane.b32.xlu0 %v3331, 32
      %v3513 = vpop.permute.xlu0 %3512
      %3514 = vrot.lane.b32.xlu0 %v3340, 32
      %v3515 = vpop.permute.xlu0 %3514
      %3516 = vrot.lane.b32.xlu0 %v3349, 32
      %v3517 = vpop.permute.xlu0 %3516
      %3518 = vrot.lane.b32.xlu0 %v3358, 32
      %v3519 = vpop.permute.xlu0 %3518
      %3520 = vrot.lane.b32.xlu0 %v3367, 32
      %v3521 = vpop.permute.xlu0 %3520
      %3522 = vrot.lane.b32.xlu0 %v3376, 32
      %v3523 = vpop.permute.xlu0 %3522
      %3524 = vrot.lane.b32.xlu0 %v3385, 32
      %v3525 = vpop.permute.xlu0 %3524
      %3526 = vrot.lane.b32.xlu0 %v3394, 32
      %v3527 = vpop.permute.xlu0 %3526
      %3528 = vrot.lane.b32.xlu0 %v3403, 32
      %v3529 = vpop.permute.xlu0 %3528
      %3530 = vrot.lane.b32.xlu0 %v3412, 32
      %v3531 = vpop.permute.xlu0 %3530
      %3532 = vrot.lane.b32.xlu0 %v3421, 32
      %v3533 = vpop.permute.xlu0 %3532
      %3534 = vrot.lane.b32.xlu0 %v3430, 32
      %v3535 = vpop.permute.xlu0 %3534
      %3536 = vrot.lane.b32.xlu0 %v3439, 32
      %v3537 = vpop.permute.xlu0 %3536
      %3538 = vrot.lane.b32.xlu0 %v3448, 32
      %v3539 = vpop.permute.xlu0 %3538
      %3540 = vrot.lane.b32.xlu0 %v3457, 32
      %v3541 = vpop.permute.xlu0 %3540
      %3542 = vrot.lane.b32.xlu0 %v3466, 32
      %v3543 = vpop.permute.xlu0 %3542
      %3544 = vrot.lane.b32.xlu0 %v3475, 32
      %v3545 = vpop.permute.xlu0 %3544
      %3546 = vrot.lane.b32.xlu0 %v3484, 32
      %v3547 = vpop.permute.xlu0 %3546
      %3548 = vrot.lane.b32.xlu0 %v3493, 32
      %v3549 = vpop.permute.xlu0 %3548
      %3550 = vrot.lane.b32.xlu0 %v3502, 32
      %v3551 = vpop.permute.xlu0 %3550
      %3552 = vrot.lane.b32.xlu0 %v3511, 32
      %v3553 = vpop.permute.xlu0 %3552
      %3554 = vrot.lane.b32.xlu0 %v3510, 32
      %v3555 = vpop.permute.xlu0 %3554
      %v3557 = vunpack.c.l.b16 %v2832
      %v3558 = vpack.c.b16 %v3557, %v3557
      %v3559 = vrot.slane %v3303, 6
      %v3560 = vrot.slane %v3304, 6
      %v3561 = vsel %vm1070, %v3559, %v3560
      %v3562 = vrot.slane %v3305, 6
      %v3563 = vsel %vm1070, %v3560, %v3562
      %v3564 = vrot.slane %v3306, 6
      %v3565 = vsel %vm1070, %v3562, %v3564
      %v3566 = vrot.slane %v3307, 6
      %v3567 = vsel %vm1070, %v3564, %v3566
      %v3568 = vrot.slane %v3308, 6
      %v3569 = vsel %vm1070, %v3566, %v3568
      %v3570 = vrot.slane %v3309, 6
      %v3571 = vsel %vm1070, %v3568, %v3570
      %v3572 = vrot.slane %v3310, 6
      %v3573 = vsel %vm1070, %v3570, %v3572
      %v3574 = vrot.slane %v3311, 6
      %v3575 = vsel %vm1070, %v3572, %v3574
      %v3576 = vrot.slane %v3312, 6
      %v3577 = vsel %vm1070, %v3574, %v3576
      %v3578 = vrot.slane %v3313, 6
      %v3579 = vsel %vm1070, %v3576, %v3578
      %v3580 = vrot.slane %v3314, 6
      %v3581 = vsel %vm1070, %v3578, %v3580
      %v3582 = vrot.slane %v3315, 6
      %v3583 = vsel %vm1070, %v3580, %v3582
      %v3584 = vrot.slane %v3316, 6
      %v3585 = vsel %vm1070, %v3582, %v3584
      %v3586 = vrot.slane %v3317, 6
      %v3587 = vsel %vm1070, %v3584, %v3586
      %v3588 = vrot.slane %v3318, 6
      %v3589 = vsel %vm1070, %v3586, %v3588
      %v3590 = vrot.slane %v3319, 6
      %v3591 = vsel %vm1070, %v3588, %v3590
      %v3592 = vrot.slane %v3320, 6
      %v3593 = vsel %vm1070, %v3590, %v3592
      %v3594 = vrot.slane %v3321, 6
      %v3595 = vsel %vm1070, %v3592, %v3594
      %v3596 = vrot.slane %v3322, 6
      %v3597 = vsel %vm1070, %v3594, %v3596
      %v3598 = vrot.slane %v3323, 6
      %v3599 = vsel %vm1070, %v3596, %v3598
      %v3600 = vrot.slane %v3558, 6
      %v3601 = vsel %vm1070, %v3598, %v3600
      %3602 = vrot.lane.b32.xlu0 %v3559, 40
      %v3603 = vpop.permute.xlu0 %3602
      %3604 = vrot.lane.b32.xlu0 %v3561, 40
      %v3605 = vpop.permute.xlu0 %3604
      %3606 = vrot.lane.b32.xlu0 %v3563, 40
      %v3607 = vpop.permute.xlu0 %3606
      %3608 = vrot.lane.b32.xlu0 %v3565, 40
      %v3609 = vpop.permute.xlu0 %3608
      %3610 = vrot.lane.b32.xlu0 %v3567, 40
      %v3611 = vpop.permute.xlu0 %3610
      %3612 = vrot.lane.b32.xlu0 %v3569, 40
      %v3613 = vpop.permute.xlu0 %3612
      %3614 = vrot.lane.b32.xlu0 %v3571, 40
      %v3615 = vpop.permute.xlu0 %3614
      %3616 = vrot.lane.b32.xlu0 %v3573, 40
      %v3617 = vpop.permute.xlu0 %3616
      %3618 = vrot.lane.b32.xlu0 %v3575, 40
      %v3619 = vpop.permute.xlu0 %3618
      %3620 = vrot.lane.b32.xlu0 %v3577, 40
      %v3621 = vpop.permute.xlu0 %3620
      %3622 = vrot.lane.b32.xlu0 %v3579, 40
      %v3623 = vpop.permute.xlu0 %3622
      %3624 = vrot.lane.b32.xlu0 %v3581, 40
      %v3625 = vpop.permute.xlu0 %3624
      %3626 = vrot.lane.b32.xlu0 %v3583, 40
      %v3627 = vpop.permute.xlu0 %3626
      %3628 = vrot.lane.b32.xlu0 %v3585, 40
      %v3629 = vpop.permute.xlu0 %3628
      %3630 = vrot.lane.b32.xlu0 %v3587, 40
      %v3631 = vpop.permute.xlu0 %3630
      %3632 = vrot.lane.b32.xlu0 %v3589, 40
      %v3633 = vpop.permute.xlu0 %3632
      %3634 = vrot.lane.b32.xlu0 %v3591, 40
      %v3635 = vpop.permute.xlu0 %3634
      %3636 = vrot.lane.b32.xlu0 %v3593, 40
      %v3637 = vpop.permute.xlu0 %3636
      %3638 = vrot.lane.b32.xlu0 %v3595, 40
      %v3639 = vpop.permute.xlu0 %3638
      %3640 = vrot.lane.b32.xlu0 %v3597, 40
      %v3641 = vpop.permute.xlu0 %3640
      %3642 = vrot.lane.b32.xlu0 %v3599, 40
      %v3643 = vpop.permute.xlu0 %3642
      %3644 = vrot.lane.b32.xlu0 %v3601, 40
      %v3645 = vpop.permute.xlu0 %3644
      %v3648 = vunpack.c.l.b16 %v2833
      %v3649 = vunpack.c.l.b16 %v2834
      %v3650 = vpack.c.b16 %v3648, %v3557
      %v3651 = vpack.c.b16 %v3649, %v3649
      %v3652 = vrot.slane %v3650, 6
      %v3653 = vsel %vm1070, %v3598, %v3652
      %v3654 = vrot.slane %v3651, 6
      %v3655 = vsel %vm1070, %v3652, %v3654
      %3656 = vrot.lane.b32.xlu0 %v3560, 48
      %v3657 = vpop.permute.xlu0 %3656
      %3658 = vrot.lane.b32.xlu0 %v3563, 48
      %v3659 = vpop.permute.xlu0 %3658
      %3660 = vrot.lane.b32.xlu0 %v3565, 48
      %v3661 = vpop.permute.xlu0 %3660
      %3662 = vrot.lane.b32.xlu0 %v3567, 48
      %v3663 = vpop.permute.xlu0 %3662
      %3664 = vrot.lane.b32.xlu0 %v3569, 48
      %v3665 = vpop.permute.xlu0 %3664
      %3666 = vrot.lane.b32.xlu0 %v3571, 48
      %v3667 = vpop.permute.xlu0 %3666
      %3668 = vrot.lane.b32.xlu0 %v3573, 48
      %v3669 = vpop.permute.xlu0 %3668
      %3670 = vrot.lane.b32.xlu0 %v3575, 48
      %v3671 = vpop.permute.xlu0 %3670
      %3672 = vrot.lane.b32.xlu0 %v3577, 48
      %v3673 = vpop.permute.xlu0 %3672
      %3674 = vrot.lane.b32.xlu0 %v3579, 48
      %v3675 = vpop.permute.xlu0 %3674
      %3676 = vrot.lane.b32.xlu0 %v3581, 48
      %v3677 = vpop.permute.xlu0 %3676
      %3678 = vrot.lane.b32.xlu0 %v3583, 48
      %v3679 = vpop.permute.xlu0 %3678
      %3680 = vrot.lane.b32.xlu0 %v3585, 48
      %v3681 = vpop.permute.xlu0 %3680
      %3682 = vrot.lane.b32.xlu0 %v3587, 48
      %v3683 = vpop.permute.xlu0 %3682
      %3684 = vrot.lane.b32.xlu0 %v3589, 48
      %v3685 = vpop.permute.xlu0 %3684
      %3686 = vrot.lane.b32.xlu0 %v3591, 48
      %v3687 = vpop.permute.xlu0 %3686
      %3688 = vrot.lane.b32.xlu0 %v3593, 48
      %v3689 = vpop.permute.xlu0 %3688
      %3690 = vrot.lane.b32.xlu0 %v3595, 48
      %v3691 = vpop.permute.xlu0 %3690
      %3692 = vrot.lane.b32.xlu0 %v3597, 48
      %v3693 = vpop.permute.xlu0 %3692
      %3694 = vrot.lane.b32.xlu0 %v3599, 48
      %v3695 = vpop.permute.xlu0 %3694
      %3696 = vrot.lane.b32.xlu0 %v3653, 48
      %v3697 = vpop.permute.xlu0 %3696
      %3698 = vrot.lane.b32.xlu0 %v3655, 48
      %v3699 = vpop.permute.xlu0 %3698
      %v3700 = vrot.slane %v3333, 6
      %v3701 = vrot.slane %v3336, 7
      %v3702 = vor.u32 %v3700, %v3701
      %v3703 = vrot.slane %v3342, 6
      %v3704 = vrot.slane %v3345, 7
      %v3705 = vor.u32 %v3703, %v3704
      %v3706 = vsel %vm1212, %v3702, %v3705
      %v3707 = vrot.slane %v3351, 6
      %v3708 = vrot.slane %v3354, 7
      %v3709 = vor.u32 %v3707, %v3708
      %v3710 = vsel %vm1212, %v3705, %v3709
      %v3711 = vrot.slane %v3360, 6
      %v3712 = vrot.slane %v3363, 7
      %v3713 = vor.u32 %v3711, %v3712
      %v3714 = vsel %vm1212, %v3709, %v3713
      %v3715 = vrot.slane %v3369, 6
      %v3716 = vrot.slane %v3372, 7
      %v3717 = vor.u32 %v3715, %v3716
      %v3718 = vsel %vm1212, %v3713, %v3717
      %v3719 = vrot.slane %v3378, 6
      %v3720 = vrot.slane %v3381, 7
      %v3721 = vor.u32 %v3719, %v3720
      %v3722 = vsel %vm1212, %v3717, %v3721
      %v3723 = vrot.slane %v3387, 6
      %v3724 = vrot.slane %v3390, 7
      %v3725 = vor.u32 %v3723, %v3724
      %v3726 = vsel %vm1212, %v3721, %v3725
      %v3727 = vrot.slane %v3396, 6
      %v3728 = vrot.slane %v3399, 7
      %v3729 = vor.u32 %v3727, %v3728
      %v3730 = vsel %vm1212, %v3725, %v3729
      %v3731 = vrot.slane %v3405, 6
      %v3732 = vrot.slane %v3408, 7
      %v3733 = vor.u32 %v3731, %v3732
      %v3734 = vsel %vm1212, %v3729, %v3733
      %v3735 = vrot.slane %v3414, 6
      %v3736 = vrot.slane %v3417, 7
      %v3737 = vor.u32 %v3735, %v3736
      %v3738 = vsel %vm1212, %v3733, %v3737
      %v3739 = vrot.slane %v3423, 6
      %v3740 = vrot.slane %v3426, 7
      %v3741 = vor.u32 %v3739, %v3740
      %v3742 = vsel %vm1212, %v3737, %v3741
      %v3743 = vrot.slane %v3432, 6
      %v3744 = vrot.slane %v3435, 7
      %v3745 = vor.u32 %v3743, %v3744
      %v3746 = vsel %vm1212, %v3741, %v3745
      %v3747 = vrot.slane %v3441, 6
      %v3748 = vrot.slane %v3444, 7
      %v3749 = vor.u32 %v3747, %v3748
      %v3750 = vsel %vm1212, %v3745, %v3749
      %v3751 = vrot.slane %v3450, 6
      %v3752 = vrot.slane %v3453, 7
      %v3753 = vor.u32 %v3751, %v3752
      %v3754 = vsel %vm1212, %v3749, %v3753
      %v3755 = vrot.slane %v3459, 6
      %v3756 = vrot.slane %v3462, 7
      %v3757 = vor.u32 %v3755, %v3756
      %v3758 = vsel %vm1212, %v3753, %v3757
      %v3759 = vrot.slane %v3468, 6
      %v3760 = vrot.slane %v3471, 7
      %v3761 = vor.u32 %v3759, %v3760
      %v3762 = vsel %vm1212, %v3757, %v3761
      %v3763 = vrot.slane %v3477, 6
      %v3764 = vrot.slane %v3480, 7
      %v3765 = vor.u32 %v3763, %v3764
      %v3766 = vsel %vm1212, %v3761, %v3765
      %v3767 = vrot.slane %v3486, 6
      %v3768 = vrot.slane %v3489, 7
      %v3769 = vor.u32 %v3767, %v3768
      %v3770 = vsel %vm1212, %v3765, %v3769
      %v3771 = vrot.slane %v3495, 6
      %v3772 = vrot.slane %v3498, 7
      %v3773 = vor.u32 %v3771, %v3772
      %v3774 = vsel %vm1212, %v3769, %v3773
      %v3775 = vrot.slane %v3504, 6
      %v3776 = vrot.slane %v3507, 7
      %v3777 = vor.u32 %v3775, %v3776
      %v3778 = vsel %vm1212, %v3773, %v3777
      %v3780 = vshrl.u32 %v3650, 16
      %v3782 = vrot.slane %v3780, 6
      %v3783 = vshll.u32 %v3650, 16
      %v3785 = vrot.slane %v3783, 7
      %v3786 = vor.u32 %v3782, %v3785
      %v3787 = vsel %vm1212, %v3777, %v3786
      %v3789 = vshrl.u32 %v3651, 16
      %v3791 = vrot.slane %v3789, 6
      %v3792 = vshll.u32 %v3651, 16
      %v3794 = vrot.slane %v3792, 7
      %v3795 = vor.u32 %v3791, %v3794
      %v3796 = vsel %vm1212, %v3786, %v3795
      %3797 = vrot.lane.b32.xlu0 %v3702, 56
      %v3798 = vpop.permute.xlu0 %3797
      %3799 = vrot.lane.b32.xlu0 %v3706, 56
      %v3800 = vpop.permute.xlu0 %3799
      %3801 = vrot.lane.b32.xlu0 %v3710, 56
      %v3802 = vpop.permute.xlu0 %3801
      %3803 = vrot.lane.b32.xlu0 %v3714, 56
      %v3804 = vpop.permute.xlu0 %3803
      %3805 = vrot.lane.b32.xlu0 %v3718, 56
      %v3806 = vpop.permute.xlu0 %3805
      %3807 = vrot.lane.b32.xlu0 %v3722, 56
      %v3808 = vpop.permute.xlu0 %3807
      %3809 = vrot.lane.b32.xlu0 %v3726, 56
      %v3810 = vpop.permute.xlu0 %3809
      %3811 = vrot.lane.b32.xlu0 %v3730, 56
      %v3812 = vpop.permute.xlu0 %3811
      %3813 = vrot.lane.b32.xlu0 %v3734, 56
      %v3814 = vpop.permute.xlu0 %3813
      %3815 = vrot.lane.b32.xlu0 %v3738, 56
      %v3816 = vpop.permute.xlu0 %3815
      %3817 = vrot.lane.b32.xlu0 %v3742, 56
      %v3818 = vpop.permute.xlu0 %3817
      %3819 = vrot.lane.b32.xlu0 %v3746, 56
      %v3820 = vpop.permute.xlu0 %3819
      %3821 = vrot.lane.b32.xlu0 %v3750, 56
      %v3822 = vpop.permute.xlu0 %3821
      %3823 = vrot.lane.b32.xlu0 %v3754, 56
      %v3824 = vpop.permute.xlu0 %3823
      %3825 = vrot.lane.b32.xlu0 %v3758, 56
      %v3826 = vpop.permute.xlu0 %3825
      %3827 = vrot.lane.b32.xlu0 %v3762, 56
      %v3828 = vpop.permute.xlu0 %3827
      %3829 = vrot.lane.b32.xlu0 %v3766, 56
      %v3830 = vpop.permute.xlu0 %3829
      %3831 = vrot.lane.b32.xlu0 %v3770, 56
      %v3832 = vpop.permute.xlu0 %3831
      %3833 = vrot.lane.b32.xlu0 %v3774, 56
      %v3834 = vpop.permute.xlu0 %3833
      %3835 = vrot.lane.b32.xlu0 %v3778, 56
      %v3836 = vpop.permute.xlu0 %3835
      %3837 = vrot.lane.b32.xlu0 %v3787, 56
      %v3838 = vpop.permute.xlu0 %3837
      %3839 = vrot.lane.b32.xlu0 %v3796, 56
      %v3840 = vpop.permute.xlu0 %3839
      %v3841 = vrot.slane %v3304, 7
      %v3842 = vrot.slane %v3305, 7
      %v3843 = vsel %vm1354, %v3841, %v3842
      %v3844 = vrot.slane %v3306, 7
      %v3845 = vsel %vm1354, %v3842, %v3844
      %v3846 = vrot.slane %v3307, 7
      %v3847 = vsel %vm1354, %v3844, %v3846
      %v3848 = vrot.slane %v3308, 7
      %v3849 = vsel %vm1354, %v3846, %v3848
      %v3850 = vrot.slane %v3309, 7
      %v3851 = vsel %vm1354, %v3848, %v3850
      %v3852 = vrot.slane %v3310, 7
      %v3853 = vsel %vm1354, %v3850, %v3852
      %v3854 = vrot.slane %v3311, 7
      %v3855 = vsel %vm1354, %v3852, %v3854
      %v3856 = vrot.slane %v3312, 7
      %v3857 = vsel %vm1354, %v3854, %v3856
      %v3858 = vrot.slane %v3313, 7
      %v3859 = vsel %vm1354, %v3856, %v3858
      %v3860 = vrot.slane %v3314, 7
      %v3861 = vsel %vm1354, %v3858, %v3860
      %v3862 = vrot.slane %v3315, 7
      %v3863 = vsel %vm1354, %v3860, %v3862
      %v3864 = vrot.slane %v3316, 7
      %v3865 = vsel %vm1354, %v3862, %v3864
      %v3866 = vrot.slane %v3317, 7
      %v3867 = vsel %vm1354, %v3864, %v3866
      %v3868 = vrot.slane %v3318, 7
      %v3869 = vsel %vm1354, %v3866, %v3868
      %v3870 = vrot.slane %v3319, 7
      %v3871 = vsel %vm1354, %v3868, %v3870
      %v3872 = vrot.slane %v3320, 7
      %v3873 = vsel %vm1354, %v3870, %v3872
      %v3874 = vrot.slane %v3321, 7
      %v3875 = vsel %vm1354, %v3872, %v3874
      %v3876 = vrot.slane %v3322, 7
      %v3877 = vsel %vm1354, %v3874, %v3876
      %v3878 = vrot.slane %v3323, 7
      %v3879 = vsel %vm1354, %v3876, %v3878
      %v3880 = vrot.slane %v3650, 7
      %v3881 = vsel %vm1354, %v3878, %v3880
      %v3882 = vrot.slane %v3651, 7
      %v3883 = vsel %vm1354, %v3880, %v3882
      %3884 = vrot.lane.b32.xlu0 %v3841, 64
      %v3885 = vpop.permute.xlu0 %3884
      %3886 = vrot.lane.b32.xlu0 %v3843, 64
      %v3887 = vpop.permute.xlu0 %3886
      %3888 = vrot.lane.b32.xlu0 %v3845, 64
      %v3889 = vpop.permute.xlu0 %3888
      %3890 = vrot.lane.b32.xlu0 %v3847, 64
      %v3891 = vpop.permute.xlu0 %3890
      %3892 = vrot.lane.b32.xlu0 %v3849, 64
      %v3893 = vpop.permute.xlu0 %3892
      %3894 = vrot.lane.b32.xlu0 %v3851, 64
      %v3895 = vpop.permute.xlu0 %3894
      %3896 = vrot.lane.b32.xlu0 %v3853, 64
      %v3897 = vpop.permute.xlu0 %3896
      %3898 = vrot.lane.b32.xlu0 %v3855, 64
      %v3899 = vpop.permute.xlu0 %3898
      %3900 = vrot.lane.b32.xlu0 %v3857, 64
      %v3901 = vpop.permute.xlu0 %3900
      %3902 = vrot.lane.b32.xlu0 %v3859, 64
      %v3903 = vpop.permute.xlu0 %3902
      %3904 = vrot.lane.b32.xlu0 %v3861, 64
      %v3905 = vpop.permute.xlu0 %3904
      %3906 = vrot.lane.b32.xlu0 %v3863, 64
      %v3907 = vpop.permute.xlu0 %3906
      %3908 = vrot.lane.b32.xlu0 %v3865, 64
      %v3909 = vpop.permute.xlu0 %3908
      %3910 = vrot.lane.b32.xlu0 %v3867, 64
      %v3911 = vpop.permute.xlu0 %3910
      %3912 = vrot.lane.b32.xlu0 %v3869, 64
      %v3913 = vpop.permute.xlu0 %3912
      %3914 = vrot.lane.b32.xlu0 %v3871, 64
      %v3915 = vpop.permute.xlu0 %3914
      %3916 = vrot.lane.b32.xlu0 %v3873, 64
      %v3917 = vpop.permute.xlu0 %3916
      %3918 = vrot.lane.b32.xlu0 %v3875, 64
      %v3919 = vpop.permute.xlu0 %3918
      %3920 = vrot.lane.b32.xlu0 %v3877, 64
      %v3921 = vpop.permute.xlu0 %3920
      %3922 = vrot.lane.b32.xlu0 %v3879, 64
      %v3923 = vpop.permute.xlu0 %3922
      %3924 = vrot.lane.b32.xlu0 %v3881, 64
      %v3925 = vpop.permute.xlu0 %3924
      %3926 = vrot.lane.b32.xlu0 %v3883, 64
      %v3927 = vpop.permute.xlu0 %3926
      %v3929 = vsel %vm1487, %v2921, %v3119
      %v3931 = vsel %vm1487, %v2922, %v3121
      %v3933 = vsel %vm1487, %v2923, %v3123
      %v3935 = vsel %vm1487, %v2924, %v3125
      %v3937 = vsel %vm1487, %v2925, %v3127
      %v3939 = vsel %vm1487, %v2926, %v3129
      %v3941 = vsel %vm1487, %v2927, %v3131
      %v3943 = vsel %vm1487, %v2928, %v3133
      %v3945 = vsel %vm1487, %v2929, %v3135
      %v3947 = vsel %vm1487, %v2930, %v3137
      %v3949 = vsel %vm1487, %v2931, %v3139
      %v3951 = vsel %vm1487, %v2932, %v3141
      %v3953 = vsel %vm1487, %v2933, %v3143
      %v3955 = vsel %vm1487, %v2934, %v3145
      %v3957 = vsel %vm1487, %v2935, %v3147
      %v3959 = vsel %vm1487, %v2936, %v3149
      %v3961 = vsel %vm1487, %v2937, %v3151
      %v3963 = vsel %vm1487, %v2938, %v3153
      %v3965 = vsel %vm1487, %v2939, %v3155
      %v3967 = vsel %vm1487, %v2940, %v3157
      %v3969 = vsel %vm1487, %v2941, %v3159
      %v3971 = vsel %vm1487, %v2942, %v3161
      %v3973 = vsel %vm1577, %v3929, %v3206
      %v3975 = vsel %vm1577, %v3931, %v3208
      %v3977 = vsel %vm1577, %v3933, %v3210
      %v3979 = vsel %vm1577, %v3935, %v3212
      %v3981 = vsel %vm1577, %v3937, %v3214
      %v3983 = vsel %vm1577, %v3939, %v3216
      %v3985 = vsel %vm1577, %v3941, %v3218
      %v3987 = vsel %vm1577, %v3943, %v3220
      %v3989 = vsel %vm1577, %v3945, %v3222
      %v3991 = vsel %vm1577, %v3947, %v3224
      %v3993 = vsel %vm1577, %v3949, %v3226
      %v3995 = vsel %vm1577, %v3951, %v3228
      %v3997 = vsel %vm1577, %v3953, %v3230
      %v3999 = vsel %vm1577, %v3955, %v3232
      %v4001 = vsel %vm1577, %v3957, %v3234
      %v4003 = vsel %vm1577, %v3959, %v3236
      %v4005 = vsel %vm1577, %v3961, %v3238
      %v4007 = vsel %vm1577, %v3963, %v3240
      %v4009 = vsel %vm1577, %v3965, %v3242
      %v4011 = vsel %vm1577, %v3967, %v3244
      %v4013 = vsel %vm1577, %v3969, %v3246
      %v4015 = vsel %vm1577, %v3971, %v3248
      %v4017 = vsel %vm1667, %v3973, %v3260
      %v4019 = vsel %vm1667, %v3975, %v3262
      %v4021 = vsel %vm1667, %v3977, %v3264
      %v4023 = vsel %vm1667, %v3979, %v3266
      %v4025 = vsel %vm1667, %v3981, %v3268
      %v4027 = vsel %vm1667, %v3983, %v3270
      %v4029 = vsel %vm1667, %v3985, %v3272
      %v4031 = vsel %vm1667, %v3987, %v3274
      %v4033 = vsel %vm1667, %v3989, %v3276
      %v4035 = vsel %vm1667, %v3991, %v3278
      %v4037 = vsel %vm1667, %v3993, %v3280
      %v4039 = vsel %vm1667, %v3995, %v3282
      %v4041 = vsel %vm1667, %v3997, %v3284
      %v4043 = vsel %vm1667, %v3999, %v3286
      %v4045 = vsel %vm1667, %v4001, %v3288
      %v4047 = vsel %vm1667, %v4003, %v3290
      %v4049 = vsel %vm1667, %v4005, %v3292
      %v4051 = vsel %vm1667, %v4007, %v3294
      %v4053 = vsel %vm1667, %v4009, %v3296
      %v4055 = vsel %vm1667, %v4011, %v3298
      %v4057 = vsel %vm1667, %v4013, %v3300
      %v4059 = vsel %vm1667, %v4015, %v3302
      %v4061 = vsel %vm1757, %v4017, %v3513
      %v4063 = vsel %vm1757, %v4019, %v3515
      %v4065 = vsel %vm1757, %v4021, %v3517
      %v4067 = vsel %vm1757, %v4023, %v3519
      %v4069 = vsel %vm1757, %v4025, %v3521
      %v4071 = vsel %vm1757, %v4027, %v3523
      %v4073 = vsel %vm1757, %v4029, %v3525
      %v4075 = vsel %vm1757, %v4031, %v3527
      %v4077 = vsel %vm1757, %v4033, %v3529
      %v4079 = vsel %vm1757, %v4035, %v3531
      %v4081 = vsel %vm1757, %v4037, %v3533
      %v4083 = vsel %vm1757, %v4039, %v3535
      %v4085 = vsel %vm1757, %v4041, %v3537
      %v4087 = vsel %vm1757, %v4043, %v3539
      %v4089 = vsel %vm1757, %v4045, %v3541
      %v4091 = vsel %vm1757, %v4047, %v3543
      %v4093 = vsel %vm1757, %v4049, %v3545
      %v4095 = vsel %vm1757, %v4051, %v3547
      %v4097 = vsel %vm1757, %v4053, %v3549
      %v4099 = vsel %vm1757, %v4055, %v3551
      %v4101 = vsel %vm1757, %v4057, %v3553
      %v4103 = vsel %vm1757, %v4059, %v3555
      %vm4104 = vcmask 326656
      %v4106 = vsel %vm4104, %v4061, %v3603
      %v4108 = vsel %vm4104, %v4063, %v3605
      %v4110 = vsel %vm4104, %v4065, %v3607
      %v4112 = vsel %vm4104, %v4067, %v3609
      %v4114 = vsel %vm4104, %v4069, %v3611
      %v4116 = vsel %vm4104, %v4071, %v3613
      %v4118 = vsel %vm4104, %v4073, %v3615
      %v4120 = vsel %vm4104, %v4075, %v3617
      %v4122 = vsel %vm4104, %v4077, %v3619
      %v4124 = vsel %vm4104, %v4079, %v3621
      %v4126 = vsel %vm4104, %v4081, %v3623
      %v4128 = vsel %vm4104, %v4083, %v3625
      %v4130 = vsel %vm4104, %v4085, %v3627
      %v4132 = vsel %vm4104, %v4087, %v3629
      %v4134 = vsel %vm4104, %v4089, %v3631
      %v4136 = vsel %vm4104, %v4091, %v3633
      %v4138 = vsel %vm4104, %v4093, %v3635
      %v4140 = vsel %vm4104, %v4095, %v3637
      %v4142 = vsel %vm4104, %v4097, %v3639
      %v4144 = vsel %vm4104, %v4099, %v3641
      %v4146 = vsel %vm4104, %v4101, %v3643
      %v4148 = vsel %vm4104, %v4103, %v3645
      %vm4149 = vcmask 392192
      %v4151 = vsel %vm4149, %v4106, %v3657
      %v4153 = vsel %vm4149, %v4108, %v3659
      %v4155 = vsel %vm4149, %v4110, %v3661
      %v4157 = vsel %vm4149, %v4112, %v3663
      %v4159 = vsel %vm4149, %v4114, %v3665
      %v4161 = vsel %vm4149, %v4116, %v3667
      %v4163 = vsel %vm4149, %v4118, %v3669
      %v4165 = vsel %vm4149, %v4120, %v3671
      %v4167 = vsel %vm4149, %v4122, %v3673
      %v4169 = vsel %vm4149, %v4124, %v3675
      %v4171 = vsel %vm4149, %v4126, %v3677
      %v4173 = vsel %vm4149, %v4128, %v3679
      %v4175 = vsel %vm4149, %v4130, %v3681
      %v4177 = vsel %vm4149, %v4132, %v3683
      %v4179 = vsel %vm4149, %v4134, %v3685
      %v4181 = vsel %vm4149, %v4136, %v3687
      %v4183 = vsel %vm4149, %v4138, %v3689
      %v4185 = vsel %vm4149, %v4140, %v3691
      %v4187 = vsel %vm4149, %v4142, %v3693
      %v4189 = vsel %vm4149, %v4144, %v3695
      %v4191 = vsel %vm4149, %v4146, %v3697
      %v4193 = vsel %vm4149, %v4148, %v3699
      %vm4194 = vcmask 457728
      %v4196 = vsel %vm4194, %v4151, %v3798
      %v4198 = vsel %vm4194, %v4153, %v3800
      %v4200 = vsel %vm4194, %v4155, %v3802
      %v4202 = vsel %vm4194, %v4157, %v3804
      %v4204 = vsel %vm4194, %v4159, %v3806
      %v4206 = vsel %vm4194, %v4161, %v3808
      %v4208 = vsel %vm4194, %v4163, %v3810
      %v4210 = vsel %vm4194, %v4165, %v3812
      %v4212 = vsel %vm4194, %v4167, %v3814
      %v4214 = vsel %vm4194, %v4169, %v3816
      %v4216 = vsel %vm4194, %v4171, %v3818
      %v4218 = vsel %vm4194, %v4173, %v3820
      %v4220 = vsel %vm4194, %v4175, %v3822
      %v4222 = vsel %vm4194, %v4177, %v3824
      %v4224 = vsel %vm4194, %v4179, %v3826
      %v4226 = vsel %vm4194, %v4181, %v3828
      %v4228 = vsel %vm4194, %v4183, %v3830
      %v4230 = vsel %vm4194, %v4185, %v3832
      %v4232 = vsel %vm4194, %v4187, %v3834
      %v4234 = vsel %vm4194, %v4189, %v3836
      %v4236 = vsel %vm4194, %v4191, %v3838
      %v4238 = vsel %vm4194, %v4193, %v3840
      %vm4239 = vcmask 523264
      %v4241 = vsel %vm4239, %v4196, %v3885
      %v4243 = vsel %vm4239, %v4198, %v3887
      %v4245 = vsel %vm4239, %v4200, %v3889
      %v4247 = vsel %vm4239, %v4202, %v3891
      %v4249 = vsel %vm4239, %v4204, %v3893
      %v4251 = vsel %vm4239, %v4206, %v3895
      %v4253 = vsel %vm4239, %v4208, %v3897
      %v4255 = vsel %vm4239, %v4210, %v3899
      %v4257 = vsel %vm4239, %v4212, %v3901
      %v4259 = vsel %vm4239, %v4214, %v3903
      %v4261 = vsel %vm4239, %v4216, %v3905
      %v4263 = vsel %vm4239, %v4218, %v3907
      %v4265 = vsel %vm4239, %v4220, %v3909
      %v4267 = vsel %vm4239, %v4222, %v3911
      %v4269 = vsel %vm4239, %v4224, %v3913
      %v4271 = vsel %vm4239, %v4226, %v3915
      %v4273 = vsel %vm4239, %v4228, %v3917
      %v4275 = vsel %vm4239, %v4230, %v3919
      %v4277 = vsel %vm4239, %v4232, %v3921
      %v4279 = vsel %vm4239, %v4234, %v3923
      %v4281 = vsel %vm4239, %v4236, %v3925
      %v4283 = vsel %vm4239, %v4238, %v3927
      %v4284 = vld [vmem:[%s3] sm:$0xf]
      %v4285 = vld [vmem:[%s3 + $0x4] sm:$0xf]
      %v4286 = vld [vmem:[%s3 + $0x8] sm:$0xf]
      %v4287 = vld [vmem:[%s3 + $0xc] sm:$0xf]
      %v4288 = vld [vmem:[%s3 + $0x10] sm:$0xf]
      %v4289 = vld [vmem:[%s3 + $0x14] sm:$0xf]
      %v4290 = vld [vmem:[%s3 + $0x18] sm:$0xf]
      %v4291 = vld [vmem:[%s3 + $0x1c] sm:$0xf]
      %v4292 = vld [vmem:[%s3 + $0x20] sm:$0xf]
      %v4293 = vld [vmem:[%s4] sm:$0x1]
      %v4295 = vlaneseq
      %v4296 = vshrl.u32 %v4295, 7
      %v4297 = vsub.s32 0, %v4296
      %v4298 = vrot.slane %v4293, %v4297
      %v4300 = vshrl.u32 %v4241, 16
      %v4302 = vrot.slane %v4300, 2
      %v4303 = vshll.u32 %v4241, 16
      %v4305 = vrot.slane %v4303, 3
      %v4306 = vor.u32 %v4302, %v4305
      %v4307 = vshrl.u32 %v4243, 16
      %v4309 = vrot.slane %v4307, 2
      %v4310 = vshll.u32 %v4243, 16
      %v4312 = vrot.slane %v4310, 3
      %v4313 = vor.u32 %v4309, %v4312
      %v4314 = vsel %vm1814, %v4306, %v4313
      %v4315 = vshrl.u32 %v4245, 16
      %v4317 = vrot.slane %v4315, 2
      %v4318 = vshll.u32 %v4245, 16
      %v4320 = vrot.slane %v4318, 3
      %v4321 = vor.u32 %v4317, %v4320
      %v4322 = vsel %vm1814, %v4313, %v4321
      %v4323 = vshrl.u32 %v4247, 16
      %v4325 = vrot.slane %v4323, 2
      %v4326 = vshll.u32 %v4247, 16
      %v4328 = vrot.slane %v4326, 3
      %v4329 = vor.u32 %v4325, %v4328
      %v4330 = vsel %vm1814, %v4321, %v4329
      %v4331 = vshrl.u32 %v4249, 16
      %v4333 = vrot.slane %v4331, 2
      %v4334 = vshll.u32 %v4249, 16
      %v4336 = vrot.slane %v4334, 3
      %v4337 = vor.u32 %v4333, %v4336
      %v4338 = vsel %vm1814, %v4329, %v4337
      %v4339 = vshrl.u32 %v4251, 16
      %v4341 = vrot.slane %v4339, 2
      %v4342 = vshll.u32 %v4251, 16
      %v4344 = vrot.slane %v4342, 3
      %v4345 = vor.u32 %v4341, %v4344
      %v4346 = vsel %vm1814, %v4337, %v4345
      %v4347 = vshrl.u32 %v4253, 16
      %v4349 = vrot.slane %v4347, 2
      %v4350 = vshll.u32 %v4253, 16
      %v4352 = vrot.slane %v4350, 3
      %v4353 = vor.u32 %v4349, %v4352
      %v4354 = vsel %vm1814, %v4345, %v4353
      %v4355 = vshrl.u32 %v4255, 16
      %v4357 = vrot.slane %v4355, 2
      %v4358 = vshll.u32 %v4255, 16
      %v4360 = vrot.slane %v4358, 3
      %v4361 = vor.u32 %v4357, %v4360
      %v4362 = vsel %vm1814, %v4353, %v4361
      %v4363 = vshrl.u32 %v4257, 16
      %v4365 = vrot.slane %v4363, 2
      %v4366 = vshll.u32 %v4257, 16
      %v4368 = vrot.slane %v4366, 3
      %v4369 = vor.u32 %v4365, %v4368
      %v4370 = vsel %vm1814, %v4361, %v4369
      %v4371 = vshrl.u32 %v4259, 16
      %v4373 = vrot.slane %v4371, 2
      %v4374 = vshll.u32 %v4259, 16
      %v4376 = vrot.slane %v4374, 3
      %v4377 = vor.u32 %v4373, %v4376
      %v4378 = vsel %vm1814, %v4369, %v4377
      %v4379 = vshrl.u32 %v4261, 16
      %v4381 = vrot.slane %v4379, 2
      %v4382 = vshll.u32 %v4261, 16
      %v4384 = vrot.slane %v4382, 3
      %v4385 = vor.u32 %v4381, %v4384
      %v4386 = vsel %vm1814, %v4377, %v4385
      %v4387 = vshrl.u32 %v4263, 16
      %v4389 = vrot.slane %v4387, 2
      %v4390 = vshll.u32 %v4263, 16
      %v4392 = vrot.slane %v4390, 3
      %v4393 = vor.u32 %v4389, %v4392
      %v4394 = vsel %vm1814, %v4385, %v4393
      %v4395 = vshrl.u32 %v4265, 16
      %v4397 = vrot.slane %v4395, 2
      %v4398 = vshll.u32 %v4265, 16
      %v4400 = vrot.slane %v4398, 3
      %v4401 = vor.u32 %v4397, %v4400
      %v4402 = vsel %vm1814, %v4393, %v4401
      %v4403 = vshrl.u32 %v4267, 16
      %v4405 = vrot.slane %v4403, 2
      %v4406 = vshll.u32 %v4267, 16
      %v4408 = vrot.slane %v4406, 3
      %v4409 = vor.u32 %v4405, %v4408
      %v4410 = vsel %vm1814, %v4401, %v4409
      %v4411 = vshrl.u32 %v4269, 16
      %v4413 = vrot.slane %v4411, 2
      %v4414 = vshll.u32 %v4269, 16
      %v4416 = vrot.slane %v4414, 3
      %v4417 = vor.u32 %v4413, %v4416
      %v4418 = vsel %vm1814, %v4409, %v4417
      %v4419 = vshrl.u32 %v4271, 16
      %v4421 = vrot.slane %v4419, 2
      %v4422 = vshll.u32 %v4271, 16
      %v4424 = vrot.slane %v4422, 3
      %v4425 = vor.u32 %v4421, %v4424
      %v4426 = vsel %vm1814, %v4417, %v4425
      %v4427 = vshrl.u32 %v4273, 16
      %v4429 = vrot.slane %v4427, 2
      %v4430 = vshll.u32 %v4273, 16
      %v4432 = vrot.slane %v4430, 3
      %v4433 = vor.u32 %v4429, %v4432
      %v4434 = vsel %vm1814, %v4425, %v4433
      %v4435 = vshrl.u32 %v4275, 16
      %v4437 = vrot.slane %v4435, 2
      %v4438 = vshll.u32 %v4275, 16
      %v4440 = vrot.slane %v4438, 3
      %v4441 = vor.u32 %v4437, %v4440
      %v4442 = vsel %vm1814, %v4433, %v4441
      %v4443 = vshrl.u32 %v4277, 16
      %v4445 = vrot.slane %v4443, 2
      %v4446 = vshll.u32 %v4277, 16
      %v4448 = vrot.slane %v4446, 3
      %v4449 = vor.u32 %v4445, %v4448
      %v4450 = vsel %vm1814, %v4441, %v4449
      %v4451 = vshrl.u32 %v4279, 16
      %v4453 = vrot.slane %v4451, 2
      %v4454 = vshll.u32 %v4279, 16
      %v4456 = vrot.slane %v4454, 3
      %v4457 = vor.u32 %v4453, %v4456
      %v4458 = vsel %vm1814, %v4449, %v4457
      %v4459 = vshrl.u32 %v4281, 16
      %v4461 = vrot.slane %v4459, 2
      %v4462 = vshll.u32 %v4281, 16
      %v4464 = vrot.slane %v4462, 3
      %v4465 = vor.u32 %v4461, %v4464
      %v4466 = vsel %vm1814, %v4457, %v4465
      %v4467 = vshrl.u32 %v4283, 16
      %v4469 = vrot.slane %v4467, 2
      %v4470 = vshll.u32 %v4283, 16
      %v4472 = vrot.slane %v4470, 3
      %v4473 = vor.u32 %v4469, %v4472
      %v4474 = vsel %vm1814, %v4465, %v4473
      %v4484 = vunpack.c.l.b16 %v4284
      %v4485 = vunpack.c.l.b16 %v4285
      %v4486 = vunpack.c.l.b16 %v4286
      %v4487 = vunpack.c.l.b16 %v4287
      %v4488 = vunpack.c.l.b16 %v4288
      %v4489 = vunpack.c.l.b16 %v4289
      %v4490 = vunpack.c.l.b16 %v4290
      %v4491 = vunpack.c.l.b16 %v4291
      %v4492 = vunpack.c.l.b16 %v4292
      %v4493 = vpack.c.b16 %v4485, %v4484
      %v4494 = vpack.c.b16 %v4487, %v4486
      %v4495 = vpack.c.b16 %v4489, %v4488
      %v4496 = vpack.c.b16 %v4491, %v4490
      %v4497 = vpack.c.b16 %v4492, %v4492
      %vm4502 = vcmask 588800
      %v4504 = vsel %vm4502, %v4314, 0
      %v4507 = vsel %vm4502, %v4322, 0
      %v4510 = vsel %vm4502, %v4330, 0
      %v4513 = vsel %vm4502, %v4338, 0
      %v4516 = vsel %vm4502, %v4346, 0
      %v4519 = vsel %vm4502, %v4354, 0
      %v4522 = vsel %vm4502, %v4362, 0
      %v4525 = vsel %vm4502, %v4370, 0
      %v4528 = vsel %vm4502, %v4378, 0
      %v4531 = vsel %vm4502, %v4386, 0
      %v4534 = vsel %vm4502, %v4394, 0
      %v4537 = vsel %vm4502, %v4402, 0
      %v4540 = vsel %vm4502, %v4410, 0
      %v4543 = vsel %vm4502, %v4418, 0
      %v4546 = vsel %vm4502, %v4426, 0
      %v4549 = vsel %vm4502, %v4434, 0
      %v4552 = vsel %vm4502, %v4442, 0
      %v4555 = vsel %vm4502, %v4450, 0
      %v4558 = vsel %vm4502, %v4458, 0
      %v4561 = vsel %vm4502, %v4466, 0
      %v4564 = vsel %vm4502, %v4474, 0
      %vm4566 = vcmask 1043456
      %v4568 = vsel %vm4566, %v4497, 0
      %4570 = vmatprep.subr.bf16.mxu0 0
      %4571 = vmatpush1.bf16.msra.mxu0 0
      %4572 = vmatprep.subr.bf16.mxu0 0
      %4573 = vmatpush1.bf16.msra.mxu0 0
      %4574 = vmatprep.subr.bf16.mxu0 0
      %4575 = vmatpush1.bf16.msra.mxu0 0
      %4576 = vmatprep.subr.bf16.mxu0 0
      %4577 = vmatpush1.bf16.msra.mxu0 %v4568
      %4578 = vmatprep.subr.bf16.mxu0 0
      %4579 = vmatpush1.bf16.msra.mxu0 %v4496
      %4580 = vmatprep.subr.bf16.mxu0 0
      %4581 = vmatpush1.bf16.msra.mxu0 %v4495
      %4582 = vmatprep.subr.bf16.mxu0 0
      %4583 = vmatpush1.bf16.msra.mxu0 %v4494
      %4584 = vmatprep.subr.bf16.mxu0 0
      %4585 = vmatpush1.bf16.msra.mxu0 %v4493
      %4586 = vmatprep.subr.bf16.mxu0 0
      %4587 = vmatpush2.bf16.msra.mxu0 0
      %4588 = vmatprep.subr.bf16.mxu0 0
      %4589 = vmatpush2.bf16.msra.mxu0 0
      %4590 = vmatprep.subr.bf16.mxu0 0
      %4591 = vmatpush2.bf16.msra.mxu0 0
      %4592 = vmatprep.subr.bf16.mxu0 0
      %4593 = vmatpush2.bf16.msra.mxu0 0
      %4594 = vmatprep.subr.bf16.mxu0 0
      %4595 = vmatpush2.bf16.msra.mxu0 0
      %4596 = vmatprep.subr.bf16.mxu0 0
      %4597 = vmatpush2.bf16.msra.mxu0 0
      %4598 = vmatprep.subr.bf16.mxu0 0
      %4599 = vmatpush2.bf16.msra.mxu0 0
      %4600 = vmatprep.subr.bf16.mxu0 0
      %4601 = vmatpush2.bf16.msra.mxu0 0
      %4602 = vmatprep.mubr.bf16.mxu0 0
      %4603 = vmatmul.mubr.bf16.gmra.mxu0 %v4504
      %v4604 = vpop.f32.mrf.mxu0
      %v4605 = vadd.f32 %v4298, %v4604
      %v4606 = vpop.f32.mrf.mxu0
      %v4607 = vpop.f32.mrf.mxu0
      %v4608 = vadd.f32 %v4298, %v4607
      %v4609 = vpop.f32.mrf.mxu0
      %4610 = vmatprep.mubr.bf16.mxu0 0
      %4611 = vmatmul.mubr.bf16.gmra.mxu0 %v4507
      %v4612 = vpop.f32.mrf.mxu0
      %v4613 = vadd.f32 %v4298, %v4612
      %v4614 = vpop.f32.mrf.mxu0
      %v4615 = vpop.f32.mrf.mxu0
      %v4616 = vadd.f32 %v4298, %v4615
      %v4617 = vpop.f32.mrf.mxu0
      %4618 = vmatprep.mubr.bf16.mxu0 0
      %4619 = vmatmul.mubr.bf16.gmra.mxu0 %v4510
      %v4620 = vpop.f32.mrf.mxu0
      %v4621 = vadd.f32 %v4298, %v4620
      %v4622 = vpop.f32.mrf.mxu0
      %v4623 = vpop.f32.mrf.mxu0
      %v4624 = vadd.f32 %v4298, %v4623
      %v4625 = vpop.f32.mrf.mxu0
      %4626 = vmatprep.mubr.bf16.mxu0 0
      %4627 = vmatmul.mubr.bf16.gmra.mxu0 %v4513
      %v4628 = vpop.f32.mrf.mxu0
      %v4629 = vadd.f32 %v4298, %v4628
      %v4630 = vpop.f32.mrf.mxu0
      %v4631 = vpop.f32.mrf.mxu0
      %v4632 = vadd.f32 %v4298, %v4631
      %v4633 = vpop.f32.mrf.mxu0
      %4634 = vmatprep.mubr.bf16.mxu0 0
      %4635 = vmatmul.mubr.bf16.gmra.mxu0 %v4516
      %v4636 = vpop.f32.mrf.mxu0
      %v4637 = vadd.f32 %v4298, %v4636
      %v4638 = vpop.f32.mrf.mxu0
      %v4639 = vpop.f32.mrf.mxu0
      %v4640 = vadd.f32 %v4298, %v4639
      %v4641 = vpop.f32.mrf.mxu0
      %4642 = vmatprep.mubr.bf16.mxu0 0
      %4643 = vmatmul.mubr.bf16.gmra.mxu0 %v4519
      %v4644 = vpop.f32.mrf.mxu0
      %v4645 = vadd.f32 %v4298, %v4644
      %v4646 = vpop.f32.mrf.mxu0
      %v4647 = vpop.f32.mrf.mxu0
      %v4648 = vadd.f32 %v4298, %v4647
      %v4649 = vpop.f32.mrf.mxu0
      %4650 = vmatprep.mubr.bf16.mxu0 0
      %4651 = vmatmul.mubr.bf16.gmra.mxu0 %v4522
      %v4652 = vpop.f32.mrf.mxu0
      %v4653 = vadd.f32 %v4298, %v4652
      %v4654 = vpop.f32.mrf.mxu0
      %v4655 = vpop.f32.mrf.mxu0
      %v4656 = vadd.f32 %v4298, %v4655
      %v4657 = vpop.f32.mrf.mxu0
      %4658 = vmatprep.mubr.bf16.mxu0 0
      %4659 = vmatmul.mubr.bf16.gmra.mxu0 %v4525
      %v4660 = vpop.f32.mrf.mxu0
      %v4661 = vadd.f32 %v4298, %v4660
      %v4662 = vpop.f32.mrf.mxu0
      %v4663 = vpop.f32.mrf.mxu0
      %v4664 = vadd.f32 %v4298, %v4663
      %v4665 = vpop.f32.mrf.mxu0
      %4666 = vmatprep.mubr.bf16.mxu0 0
      %4667 = vmatmul.mubr.bf16.gmra.mxu0 %v4528
      %v4668 = vpop.f32.mrf.mxu0
      %v4669 = vadd.f32 %v4298, %v4668
      %v4670 = vpop.f32.mrf.mxu0
      %v4671 = vpop.f32.mrf.mxu0
      %v4672 = vadd.f32 %v4298, %v4671
      %v4673 = vpop.f32.mrf.mxu0
      %4674 = vmatprep.mubr.bf16.mxu0 0
      %4675 = vmatmul.mubr.bf16.gmra.mxu0 %v4531
      %v4676 = vpop.f32.mrf.mxu0
      %v4677 = vadd.f32 %v4298, %v4676
      %v4678 = vpop.f32.mrf.mxu0
      %v4679 = vpop.f32.mrf.mxu0
      %v4680 = vadd.f32 %v4298, %v4679
      %v4681 = vpop.f32.mrf.mxu0
      %4682 = vmatprep.mubr.bf16.mxu0 0
      %4683 = vmatmul.mubr.bf16.gmra.mxu0 %v4534
      %v4684 = vpop.f32.mrf.mxu0
      %v4685 = vadd.f32 %v4298, %v4684
      %v4686 = vpop.f32.mrf.mxu0
      %v4687 = vpop.f32.mrf.mxu0
      %v4688 = vadd.f32 %v4298, %v4687
      %v4689 = vpop.f32.mrf.mxu0
      %4690 = vmatprep.mubr.bf16.mxu0 0
      %4691 = vmatmul.mubr.bf16.gmra.mxu0 %v4537
      %v4692 = vpop.f32.mrf.mxu0
      %v4693 = vadd.f32 %v4298, %v4692
      %v4694 = vpop.f32.mrf.mxu0
      %v4695 = vpop.f32.mrf.mxu0
      %v4696 = vadd.f32 %v4298, %v4695
      %v4697 = vpop.f32.mrf.mxu0
      %4698 = vmatprep.mubr.bf16.mxu0 0
      %4699 = vmatmul.mubr.bf16.gmra.mxu0 %v4540
      %v4700 = vpop.f32.mrf.mxu0
      %v4701 = vadd.f32 %v4298, %v4700
      %v4702 = vpop.f32.mrf.mxu0
      %v4703 = vpop.f32.mrf.mxu0
      %v4704 = vadd.f32 %v4298, %v4703
      %v4705 = vpop.f32.mrf.mxu0
      %4706 = vmatprep.mubr.bf16.mxu0 0
      %4707 = vmatmul.mubr.bf16.gmra.mxu0 %v4543
      %v4708 = vpop.f32.mrf.mxu0
      %v4709 = vadd.f32 %v4298, %v4708
      %v4710 = vpop.f32.mrf.mxu0
      %v4711 = vpop.f32.mrf.mxu0
      %v4712 = vadd.f32 %v4298, %v4711
      %v4713 = vpop.f32.mrf.mxu0
      %4714 = vmatprep.mubr.bf16.mxu0 0
      %4715 = vmatmul.mubr.bf16.gmra.mxu0 %v4546
      %v4716 = vpop.f32.mrf.mxu0
      %v4717 = vadd.f32 %v4298, %v4716
      %v4718 = vpop.f32.mrf.mxu0
      %v4719 = vpop.f32.mrf.mxu0
      %v4720 = vadd.f32 %v4298, %v4719
      %v4721 = vpop.f32.mrf.mxu0
      %4722 = vmatprep.mubr.bf16.mxu0 0
      %4723 = vmatmul.mubr.bf16.gmra.mxu0 %v4549
      %v4724 = vpop.f32.mrf.mxu0
      %v4725 = vadd.f32 %v4298, %v4724
      %v4726 = vpop.f32.mrf.mxu0
      %v4727 = vpop.f32.mrf.mxu0
      %v4728 = vadd.f32 %v4298, %v4727
      %v4729 = vpop.f32.mrf.mxu0
      %4730 = vmatprep.mubr.bf16.mxu0 0
      %4731 = vmatmul.mubr.bf16.gmra.mxu0 %v4552
      %v4732 = vpop.f32.mrf.mxu0
      %v4733 = vadd.f32 %v4298, %v4732
      %v4734 = vpop.f32.mrf.mxu0
      %v4735 = vpop.f32.mrf.mxu0
      %v4736 = vadd.f32 %v4298, %v4735
      %v4737 = vpop.f32.mrf.mxu0
      %4738 = vmatprep.mubr.bf16.mxu0 0
      %4739 = vmatmul.mubr.bf16.gmra.mxu0 %v4555
      %v4740 = vpop.f32.mrf.mxu0
      %v4741 = vadd.f32 %v4298, %v4740
      %v4742 = vpop.f32.mrf.mxu0
      %v4743 = vpop.f32.mrf.mxu0
      %v4744 = vadd.f32 %v4298, %v4743
      %v4745 = vpop.f32.mrf.mxu0
      %4746 = vmatprep.mubr.bf16.mxu0 0
      %4747 = vmatmul.mubr.bf16.gmra.mxu0 %v4558
      %v4748 = vpop.f32.mrf.mxu0
      %v4749 = vadd.f32 %v4298, %v4748
      %v4750 = vpop.f32.mrf.mxu0
      %v4751 = vpop.f32.mrf.mxu0
      %v4752 = vadd.f32 %v4298, %v4751
      %v4753 = vpop.f32.mrf.mxu0
      %4754 = vmatprep.mubr.bf16.mxu0 0
      %4755 = vmatmul.mubr.bf16.gmra.mxu0 %v4561
      %v4756 = vpop.f32.mrf.mxu0
      %v4757 = vadd.f32 %v4298, %v4756
      %v4758 = vpop.f32.mrf.mxu0
      %v4759 = vpop.f32.mrf.mxu0
      %v4760 = vadd.f32 %v4298, %v4759
      %v4761 = vpop.f32.mrf.mxu0
      %4762 = vmatprep.mubr.bf16.mxu0 0
      %4763 = vmatmul.mubr.bf16.gmra.mxu0 %v4564
      %v4764 = vpop.f32.mrf.mxu0
      %v4765 = vadd.f32 %v4298, %v4764
      %v4766 = vpop.f32.mrf.mxu0
      %v4767 = vpop.f32.mrf.mxu0
      %v4768 = vadd.f32 %v4298, %v4767
      %v4769 = vpop.f32.mrf.mxu0
      %4770 = vdwg.mxu0
      %v4771 = vmax.f32 %v4605, 0.0
      %v4772 = vmax.f32 %v4608, 0.0
      %v4773 = vmax.f32 %v4613, 0.0
      %v4774 = vmax.f32 %v4616, 0.0
      %v4775 = vmax.f32 %v4621, 0.0
      %v4776 = vmax.f32 %v4624, 0.0
      %v4777 = vmax.f32 %v4629, 0.0
      %v4778 = vmax.f32 %v4632, 0.0
      %v4779 = vmax.f32 %v4637, 0.0
      %v4780 = vmax.f32 %v4640, 0.0
      %v4781 = vmax.f32 %v4645, 0.0
      %v4782 = vmax.f32 %v4648, 0.0
      %v4783 = vmax.f32 %v4653, 0.0
      %v4784 = vmax.f32 %v4656, 0.0
      %v4785 = vmax.f32 %v4661, 0.0
      %v4786 = vmax.f32 %v4664, 0.0
      %v4787 = vmax.f32 %v4669, 0.0
      %v4788 = vmax.f32 %v4672, 0.0
      %v4789 = vmax.f32 %v4677, 0.0
      %v4790 = vmax.f32 %v4680, 0.0
      %v4791 = vmax.f32 %v4685, 0.0
      %v4792 = vmax.f32 %v4688, 0.0
      %v4793 = vmax.f32 %v4693, 0.0
      %v4794 = vmax.f32 %v4696, 0.0
      %v4795 = vmax.f32 %v4701, 0.0
      %v4796 = vmax.f32 %v4704, 0.0
      %v4797 = vmax.f32 %v4709, 0.0
      %v4798 = vmax.f32 %v4712, 0.0
      %v4799 = vmax.f32 %v4717, 0.0
      %v4800 = vmax.f32 %v4720, 0.0
      %v4801 = vmax.f32 %v4725, 0.0
      %v4802 = vmax.f32 %v4728, 0.0
      %v4803 = vmax.f32 %v4733, 0.0
      %v4804 = vmax.f32 %v4736, 0.0
      %v4805 = vmax.f32 %v4741, 0.0
      %v4806 = vmax.f32 %v4744, 0.0
      %v4807 = vmax.f32 %v4749, 0.0
      %v4808 = vmax.f32 %v4752, 0.0
      %v4809 = vmax.f32 %v4757, 0.0
      %v4810 = vmax.f32 %v4760, 0.0
      %v4811 = vmax.f32 %v4765, 0.0
      %v4812 = vmax.f32 %v4768, 0.0
      %v4813 = vpack.c.bf16 %v4772, %v4771
      %v4814 = vpack.c.bf16 %v4774, %v4773
      %v4815 = vpack.c.bf16 %v4776, %v4775
      %v4816 = vpack.c.bf16 %v4778, %v4777
      %v4817 = vpack.c.bf16 %v4780, %v4779
      %v4818 = vpack.c.bf16 %v4782, %v4781
      %v4819 = vpack.c.bf16 %v4784, %v4783
      %v4820 = vpack.c.bf16 %v4786, %v4785
      %v4821 = vpack.c.bf16 %v4788, %v4787
      %v4822 = vpack.c.bf16 %v4790, %v4789
      %v4823 = vpack.c.bf16 %v4792, %v4791
      %v4824 = vpack.c.bf16 %v4794, %v4793
      %v4825 = vpack.c.bf16 %v4796, %v4795
      %v4826 = vpack.c.bf16 %v4798, %v4797
      %v4827 = vpack.c.bf16 %v4800, %v4799
      %v4828 = vpack.c.bf16 %v4802, %v4801
      %v4829 = vpack.c.bf16 %v4804, %v4803
      %v4830 = vpack.c.bf16 %v4806, %v4805
      %v4831 = vpack.c.bf16 %v4808, %v4807
      %v4832 = vpack.c.bf16 %v4810, %v4809
      %v4833 = vpack.c.bf16 %v4812, %v4811
      %v4855 = vunpack.c.l.b16 %v4813
      %v4856 = vunpack.c.h.b16 %v4813
      %v4857 = vunpack.c.l.b16 %v4814
      %v4858 = vunpack.c.h.b16 %v4814
      %v4859 = vunpack.c.l.b16 %v4815
      %v4860 = vunpack.c.h.b16 %v4815
      %v4861 = vunpack.c.l.b16 %v4816
      %v4862 = vunpack.c.h.b16 %v4816
      %v4863 = vunpack.c.l.b16 %v4817
      %v4864 = vunpack.c.h.b16 %v4817
      %v4865 = vunpack.c.l.b16 %v4818
      %v4866 = vunpack.c.h.b16 %v4818
      %v4867 = vunpack.c.l.b16 %v4819
      %v4868 = vunpack.c.h.b16 %v4819
      %v4869 = vunpack.c.l.b16 %v4820
      %v4870 = vunpack.c.h.b16 %v4820
      %v4871 = vunpack.c.l.b16 %v4821
      %v4872 = vunpack.c.h.b16 %v4821
      %v4873 = vunpack.c.l.b16 %v4822
      %v4874 = vunpack.c.h.b16 %v4822
      %v4875 = vunpack.c.l.b16 %v4823
      %v4876 = vunpack.c.h.b16 %v4823
      %v4877 = vunpack.c.l.b16 %v4824
      %v4878 = vunpack.c.h.b16 %v4824
      %v4879 = vunpack.c.l.b16 %v4825
      %v4880 = vunpack.c.h.b16 %v4825
      %v4881 = vunpack.c.l.b16 %v4826
      %v4882 = vunpack.c.h.b16 %v4826
      %v4883 = vunpack.c.l.b16 %v4827
      %v4884 = vunpack.c.h.b16 %v4827
      %v4885 = vunpack.c.l.b16 %v4828
      %v4886 = vunpack.c.h.b16 %v4828
      %v4887 = vunpack.c.l.b16 %v4829
      %v4888 = vunpack.c.h.b16 %v4829
      %v4889 = vunpack.c.l.b16 %v4830
      %v4890 = vunpack.c.h.b16 %v4830
      %v4891 = vunpack.c.l.b16 %v4831
      %v4892 = vunpack.c.h.b16 %v4831
      %v4893 = vunpack.c.l.b16 %v4832
      %v4894 = vunpack.c.h.b16 %v4832
      %v4895 = vunpack.c.l.b16 %v4833
      %v4896 = vunpack.c.h.b16 %v4833
      %v4897 = vpack.c.b16 %v4855, %v4855
      %v4898 = vpack.c.b16 %v4856, %v4856
      %v4899 = vpack.c.b16 %v4857, %v4857
      %v4900 = vpack.c.b16 %v4858, %v4858
      %v4901 = vpack.c.b16 %v4859, %v4859
      %v4902 = vpack.c.b16 %v4860, %v4860
      %v4903 = vpack.c.b16 %v4861, %v4861
      %v4904 = vpack.c.b16 %v4862, %v4862
      %v4905 = vpack.c.b16 %v4863, %v4863
      %v4906 = vpack.c.b16 %v4864, %v4864
      %v4907 = vpack.c.b16 %v4865, %v4865
      %v4908 = vpack.c.b16 %v4866, %v4866
      %v4909 = vpack.c.b16 %v4867, %v4867
      %v4910 = vpack.c.b16 %v4868, %v4868
      %v4911 = vpack.c.b16 %v4869, %v4869
      %v4912 = vpack.c.b16 %v4870, %v4870
      %v4913 = vpack.c.b16 %v4871, %v4871
      %v4914 = vpack.c.b16 %v4872, %v4872
      %v4915 = vpack.c.b16 %v4873, %v4873
      %v4916 = vpack.c.b16 %v4874, %v4874
      %v4917 = vpack.c.b16 %v4875, %v4875
      %v4918 = vpack.c.b16 %v4876, %v4876
      %v4919 = vpack.c.b16 %v4877, %v4877
      %v4920 = vpack.c.b16 %v4878, %v4878
      %v4921 = vpack.c.b16 %v4879, %v4879
      %v4922 = vpack.c.b16 %v4880, %v4880
      %v4923 = vpack.c.b16 %v4881, %v4881
      %v4924 = vpack.c.b16 %v4882, %v4882
      %v4925 = vpack.c.b16 %v4883, %v4883
      %v4926 = vpack.c.b16 %v4884, %v4884
      %v4927 = vpack.c.b16 %v4885, %v4885
      %v4928 = vpack.c.b16 %v4886, %v4886
      %v4929 = vpack.c.b16 %v4887, %v4887
      %v4930 = vpack.c.b16 %v4888, %v4888
      %v4931 = vpack.c.b16 %v4889, %v4889
      %v4932 = vpack.c.b16 %v4890, %v4890
      %v4933 = vpack.c.b16 %v4891, %v4891
      %v4934 = vpack.c.b16 %v4892, %v4892
      %v4935 = vpack.c.b16 %v4893, %v4893
      %v4936 = vpack.c.b16 %v4894, %v4894
      %v4937 = vpack.c.b16 %v4895, %v4895
      %v4938 = vpack.c.b16 %v4896, %v4896
      %4981 = vst.msk [vmem:[%s251] sm:$0xf] %vm2568, %v4897
      %4982 = vst.msk [vmem:[%s251 + $0x4] sm:$0xf] %vm2568, %v4898
      %4983 = vst.msk [vmem:[%s251 + $0x8] sm:$0xf] %vm2568, %v4899
      %4984 = vst.msk [vmem:[%s251 + $0xc] sm:$0xf] %vm2568, %v4900
      %4985 = vst.msk [vmem:[%s251 + $0x10] sm:$0xf] %vm2568, %v4901
      %4986 = vst.msk [vmem:[%s251 + $0x14] sm:$0xf] %vm2568, %v4902
      %4987 = vst.msk [vmem:[%s251 + $0x18] sm:$0xf] %vm2568, %v4903
      %4988 = vst.msk [vmem:[%s251 + $0x1c] sm:$0xf] %vm2568, %v4904
      %4989 = vst.msk [vmem:[%s251 + $0x20] sm:$0xf] %vm2568, %v4905
      %4990 = vst.msk [vmem:[%s251 + $0x24] sm:$0xf] %vm2568, %v4906
      %4991 = vst.msk [vmem:[%s251 + $0x28] sm:$0xf] %vm2568, %v4907
      %4992 = vst.msk [vmem:[%s251 + $0x2c] sm:$0xf] %vm2568, %v4908
      %4993 = vst.msk [vmem:[%s251 + $0x30] sm:$0xf] %vm2568, %v4909
      %4994 = vst.msk [vmem:[%s251 + $0x34] sm:$0xf] %vm2568, %v4910
      %4995 = vst.msk [vmem:[%s251 + $0x38] sm:$0xf] %vm2568, %v4911
      %4996 = vst.msk [vmem:[%s251 + $0x3c] sm:$0xf] %vm2568, %v4912
      %4997 = vst.msk [vmem:[%s251 + $0x40] sm:$0xf] %vm2568, %v4913
      %4998 = vst.msk [vmem:[%s251 + $0x44] sm:$0xf] %vm2568, %v4914
      %4999 = vst.msk [vmem:[%s251 + $0x48] sm:$0xf] %vm2568, %v4915
      %5000 = vst.msk [vmem:[%s251 + $0x4c] sm:$0xf] %vm2568, %v4916
      %5001 = vst.msk [vmem:[%s251 + $0x50] sm:$0xf] %vm2568, %v4917
      %5002 = vst.msk [vmem:[%s251 + $0x54] sm:$0xf] %vm2568, %v4918
      %5003 = vst.msk [vmem:[%s251 + $0x58] sm:$0xf] %vm2568, %v4919
      %5004 = vst.msk [vmem:[%s251 + $0x5c] sm:$0xf] %vm2568, %v4920
      %5005 = vst.msk [vmem:[%s251 + $0x60] sm:$0xf] %vm2568, %v4921
      %5006 = vst.msk [vmem:[%s251 + $0x64] sm:$0xf] %vm2568, %v4922
      %5007 = vst.msk [vmem:[%s251 + $0x68] sm:$0xf] %vm2568, %v4923
      %5008 = vst.msk [vmem:[%s251 + $0x6c] sm:$0xf] %vm2568, %v4924
      %5009 = vst.msk [vmem:[%s251 + $0x70] sm:$0xf] %vm2568, %v4925
      %5010 = vst.msk [vmem:[%s251 + $0x74] sm:$0xf] %vm2568, %v4926
      %5011 = vst.msk [vmem:[%s251 + $0x78] sm:$0xf] %vm2568, %v4927
      %5012 = vst.msk [vmem:[%s251 + $0x7c] sm:$0xf] %vm2568, %v4928
      %5013 = vst.msk [vmem:[%s251 + $0x80] sm:$0xf] %vm2568, %v4929
      %5014 = vst.msk [vmem:[%s251 + $0x84] sm:$0xf] %vm2568, %v4930
      %5015 = vst.msk [vmem:[%s251 + $0x88] sm:$0xf] %vm2568, %v4931
      %5016 = vst.msk [vmem:[%s251 + $0x8c] sm:$0xf] %vm2568, %v4932
      %5017 = vst.msk [vmem:[%s251 + $0x90] sm:$0xf] %vm2568, %v4933
      %5018 = vst.msk [vmem:[%s251 + $0x94] sm:$0xf] %vm2568, %v4934
      %5019 = vst.msk [vmem:[%s251 + $0x98] sm:$0xf] %vm2568, %v4935
      %5020 = vst.msk [vmem:[%s251 + $0x9c] sm:$0xf] %vm2568, %v4936
      %5021 = vst.msk [vmem:[%s251 + $0xa0] sm:$0xf] %vm2568, %v4937
      %5022 = vst.msk [vmem:[%s251 + $0xa4] sm:$0xf] %vm2568, %v4938
      %p5023 = scmp.lt.s32.totalorder %s17, 1
      %s5024 = scalar_select %p5023, %s17, 1
      %s5025 = smul.addr %s5024, 42
      %s5026 = smul.addr %s5025, 4
      %s5027 = scalar_lea.vmem %s6, %s5026
      // Predicated region
      $region45: #{tpu_custom_call.1} parent=43 // pred_check
        %p5028 = pneg %p166
      $region46: #{tpu_custom_call.1} parent=43 // pred_check_branch
        %5030 = sbr.rel (%p5028) target = $region48
      $region47: #{tpu_custom_call.1} parent=43 // pred_region
        _
      $region48: #{tpu_custom_call.1} parent=43 // pred_fallthru
        _
    $region44: #{tpu_custom_call.1} parent=5 // pred_fallthru
      _
    %p5031 = scmp.le.s32.totalorder 2, %s12
    // Predicated region
    $region49: #{tpu_custom_call.1} parent=5 // pred_check
      %p5032 = pneg %p5031
    $region50: #{tpu_custom_call.1} parent=5 // pred_check_branch
      %5034 = sbr.rel (%p5032) target = $region52
    $region51: #{tpu_custom_call.1} parent=5 // pred_region
      %s5035 = ssub.s32 %s12, 2
      // Predicated region
      $region53: #{tpu_custom_call.1} parent=51 // pred_check
        %p5036 = pneg %p172
      $region54: #{tpu_custom_call.1} parent=51 // pred_check_branch
        %5038 = sbr.rel (%p5036) target = $region56
      $region55: #{tpu_custom_call.1} parent=51 // pred_region
        %p5039 = scmp.lt.s32.totalorder %s18, 1
        %s5040 = scalar_select %p5039, %s18, 1
        %s5041 = smul.addr %s5040, 42
        %s5042 = smul.addr %s5041, 4
        %s5043 = scalar_lea.vmem %s6, %s5042
      $region56: #{tpu_custom_call.1} parent=51 // pred_fallthru
        _
    $region52: #{tpu_custom_call.1} parent=5 // pred_fallthru
      _
  $region6: #{tpu_custom_call.1} parent=0 // loop_footer
    %s16 = sadd.s32 1, %s12
  $region7: #{tpu_custom_call.1} parent=0 // loop_footer_branch
    %11 = sbr.rel target = $region3
  $region8: #{tpu_custom_call.1} parent=0 // loop_exit
    _

</llo_original>
